<compile_context>
chip_gen: v7x
topology: tpu7x:2x2x1
jax: 0.10.0
libtpu: 0.0.40
codegen_flags: <defaults>
</compile_context>

<pallas_src>
import math

import jax
import jax.numpy as jnp
from jax import lax
from jax.experimental import pallas as pl
from jax.experimental.pallas import tpu as pltpu

# ---------------- small synthetic BERT config ----------------
VOCAB = 100
TYPE_VOCAB = 2
MAX_POS = 16
HIDDEN = 32
NUM_HEADS = 4
HEAD_DIM = HIDDEN // NUM_HEADS
INTERMEDIATE = 64
NUM_LAYERS = 2
N_CLASS = 3
LN_EPS = 1e-12

BATCH = 2
SEQ = 8

# ---- TPU-friendly padded sizes ----
HP = 128                        # hidden padded to a full lane tile
HEAD_PAD = 128                  # each head expanded to its own 128-lane block
QKV_W = NUM_HEADS * HEAD_PAD    # 512 lanes per projection (Q / K / V)
BS = BATCH * SEQ                # batch folded into the sublane / M dimension
ATTN_SCALE = 1.0 / math.sqrt(HEAD_DIM)
NEG_INF = -10000.0              # HF-BERT additive mask value


# ---------------- in-kernel helpers ----------------
def _layernorm_padded(v, g, b):
    # v: (rows, HP) with lanes >= HIDDEN exactly zero, so sums over the padded
    # lane dim equal sums over the real HIDDEN dims.  g/b are zero-padded, so
    # padded lanes stay exactly zero after the affine transform.
    mu = jnp.sum(v, axis=-1, keepdims=True) * (1.0 / HIDDEN)
    msq = jnp.sum(v * v, axis=-1, keepdims=True) * (1.0 / HIDDEN)
    var = jnp.maximum(msq - mu * mu, 0.0)
    return (v - mu) * lax.rsqrt(var + LN_EPS) * g + b


def _gelu(v):
    # tanh approximation of GELU (HF BERT uses erf-gelu; numerically very close)
    return 0.5 * v * (1.0 + jnp.tanh(0.7978845608028654 * (v + 0.044715 * v * v * v)))


# ---------------- fused Pallas kernel: whole BERT forward ----------------
def bert_fused_kernel(x_ref, bias_ref, wqkv_ref, bqkv_ref, wo_ref, w1_ref, w2_ref,
                      vec_ref, head_w_ref, head_vec_ref, out_ref):
    x = x_ref[...]                      # (BS, HP), padded lanes are zero
    hv = head_vec_ref[...]              # (8, HP): emb_ln_g, emb_ln_b, pooler_b, cls_b, ...
    attn_bias = bias_ref[...]           # (NUM_HEADS*BS, BS) additive mask

    # embedding LayerNorm
    x = _layernorm_padded(x, hv[0:1, :], hv[1:2, :])

    for l in range(NUM_LAYERS):         # static unroll (2 layers)
        vec = vec_ref[l]                # (8, HP): bo, b1, b2, ln1g, ln1b, ln2g, ln2b, -

        # fused head-expanded QKV projection: one MXU matmul
        qkv = jnp.dot(x, wqkv_ref[l], preferred_element_type=jnp.float32) + bqkv_ref[l]
        q = qkv[:, 0:QKV_W]
        k = qkv[:, QKV_W:2 * QKV_W]
        v = qkv[:, 2 * QKV_W:3 * QKV_W]

        # all-head scores stacked along sublanes -> one softmax for every
        # (batch, head); cross-batch pairs and pad keys masked by attn_bias.
        blocks = []
        for h in range(NUM_HEADS):      # slices land on 128-lane boundaries (free)
            qh = q[:, h * HEAD_PAD:(h + 1) * HEAD_PAD]
            kh = k[:, h * HEAD_PAD:(h + 1) * HEAD_PAD]
            blocks.append(lax.dot_general(qh, kh, (((1,), (1,)), ((), ())),
                                          preferred_element_type=jnp.float32))
        scores = jnp.concatenate(blocks, axis=0) * ATTN_SCALE + attn_bias  # (NH*BS, BS)

        m = jnp.max(scores, axis=-1, keepdims=True)
        p = jnp.exp(scores - m)
        p = p * pl.reciprocal(jnp.sum(p, axis=-1, keepdims=True), approx=True)

        ctx_blocks = []
        for h in range(NUM_HEADS):
            ph = p[h * BS:(h + 1) * BS, :]                    # (BS, BS)
            vh = v[:, h * HEAD_PAD:(h + 1) * HEAD_PAD]        # (BS, HEAD_PAD)
            ctx_blocks.append(jnp.dot(ph, vh, preferred_element_type=jnp.float32))
        ctx = jnp.concatenate(ctx_blocks, axis=1)             # (BS, NH*HEAD_PAD)

        attn = jnp.dot(ctx, wo_ref[l], preferred_element_type=jnp.float32) + vec[0:1, :]
        x = _layernorm_padded(x + attn, vec[3:4, :], vec[4:5, :])

        h1 = _gelu(jnp.dot(x, w1_ref[l], preferred_element_type=jnp.float32) + vec[1:2, :])
        ffn = jnp.dot(h1, w2_ref[l], preferred_element_type=jnp.float32) + vec[2:3, :]
        x = _layernorm_padded(x + ffn, vec[5:6, :], vec[6:7, :])

    # pooler (tanh dense on [CLS]) + classifier; lane-dense logits slab
    cls = jnp.concatenate([x[b * SEQ:b * SEQ + 1, :] for b in range(BATCH)], axis=0)
    pooled = jnp.tanh(jnp.dot(cls, head_w_ref[0], preferred_element_type=jnp.float32)
                      + hv[2:3, :])
    logits = jnp.dot(pooled, head_w_ref[1], preferred_element_type=jnp.float32) + hv[3:4, :]
    out_ref[...] = logits               # (BATCH, HP); real logits in lanes [:N_CLASS]


def run_bert_fused(packed, x_emb, attn_bias):
    vmem = pl.BlockSpec(memory_space=pltpu.MemorySpace.VMEM)
    args = (x_emb, attn_bias, packed['wqkv'], packed['bqkv'], packed['wo'],
            packed['w1'], packed['w2'], packed['vec'],
            packed['head_w'], packed['head_vec'])
    out = pl.pallas_call(
        bert_fused_kernel,
        out_shape=jax.ShapeDtypeStruct((BATCH, HP), jnp.float32),
        in_specs=[vmem] * len(args),
        out_specs=vmem,
    )(*args)
    return out[:, :N_CLASS]


# ---------------- parameters (deterministic init, same as before) ----------------
def init_params(key):
    keys = jax.random.split(key, 8 + NUM_LAYERS)

    def normal(k, shape):
        return jax.random.normal(k, shape, jnp.float32) * 0.02

    params = {
        'word_emb': normal(keys[0], (VOCAB, HIDDEN)),
        'pos_emb': normal(keys[1], (MAX_POS, HIDDEN)),
        'type_emb': normal(keys[2], (TYPE_VOCAB, HIDDEN)),
        'emb_ln_g': jnp.ones((HIDDEN,), jnp.float32),
        'emb_ln_b': jnp.zeros((HIDDEN,), jnp.float32),
        'pooler_w': normal(keys[3], (HIDDEN, HIDDEN)),
        'pooler_b': jnp.zeros((1, HIDDEN), jnp.float32),
        'cls_w': normal(keys[4], (HIDDEN, N_CLASS)),
        'cls_b': jnp.zeros((1, N_CLASS), jnp.float32),
        'layers': [],
    }
    for i in range(NUM_LAYERS):
        lk = jax.random.split(keys[8 + i], 6)
        params['layers'].append({
            'wq': normal(lk[0], (HIDDEN, HIDDEN)), 'bq': jnp.zeros((1, HIDDEN), jnp.float32),
            'wk': normal(lk[1], (HIDDEN, HIDDEN)), 'bk': jnp.zeros((1, HIDDEN), jnp.float32),
            'wv': normal(lk[2], (HIDDEN, HIDDEN)), 'bv': jnp.zeros((1, HIDDEN), jnp.float32),
            'wo': normal(lk[3], (HIDDEN, HIDDEN)), 'bo': jnp.zeros((1, HIDDEN), jnp.float32),
            'ln1g': jnp.ones((1, HIDDEN), jnp.float32),
            'ln1b': jnp.zeros((1, HIDDEN), jnp.float32),
            'w1': normal(lk[4], (HIDDEN, INTERMEDIATE)),
            'b1': jnp.zeros((1, INTERMEDIATE), jnp.float32),
            'w2': normal(lk[5], (INTERMEDIATE, HIDDEN)),
            'b2': jnp.zeros((1, HIDDEN), jnp.float32),
            'ln2g': jnp.ones((1, HIDDEN), jnp.float32),
            'ln2b': jnp.zeros((1, HIDDEN), jnp.float32),
        })
    return params


# ---------------- one-time packing into lane-dense, head-expanded buffers ----------------
def _pad2(a, rows, cols):
    return jnp.zeros((rows, cols), jnp.float32).at[:a.shape[0], :a.shape[1]].set(a)


def _expand_cols_by_head(w):
    # (HIDDEN, HIDDEN) -> (HP, NUM_HEADS*HEAD_PAD): head h's output columns live
    # at lanes [h*HEAD_PAD : h*HEAD_PAD+HEAD_DIM]; everything else is zero.
    out = jnp.zeros((HP, QKV_W), jnp.float32)
    for h in range(NUM_HEADS):
        out = out.at[:HIDDEN, h * HEAD_PAD:h * HEAD_PAD + HEAD_DIM].set(
            w[:, h * HEAD_DIM:(h + 1) * HEAD_DIM])
    return out


def _expand_bias_by_head(b):
    out = jnp.zeros((1, QKV_W), jnp.float32)
    for h in range(NUM_HEADS):
        out = out.at[:, h * HEAD_PAD:h * HEAD_PAD + HEAD_DIM].set(
            b[:, h * HEAD_DIM:(h + 1) * HEAD_DIM])
    return out


def _expand_rows_by_head(w):
    # (HIDDEN, HIDDEN) -> (NUM_HEADS*HEAD_PAD, HP): head h's input rows live at
    # sublanes [h*HEAD_PAD : h*HEAD_PAD+HEAD_DIM].
    out = jnp.zeros((QKV_W, HP), jnp.float32)
    for h in range(NUM_HEADS):
        out = out.at[h * HEAD_PAD:h * HEAD_PAD + HEAD_DIM, :HIDDEN].set(
            w[h * HEAD_DIM:(h + 1) * HEAD_DIM, :])
    return out


def pack_params(p):
    wqkv, bqkv, wo, w1, w2, vec = [], [], [], [], [], []
    for lp in p['layers']:
        wqkv.append(jnp.concatenate([_expand_cols_by_head(lp['wq']),
                                     _expand_cols_by_head(lp['wk']),
                                     _expand_cols_by_head(lp['wv'])], axis=1))
        bqkv.append(jnp.concatenate([_expand_bias_by_head(lp['bq']),
                                     _expand_bias_by_head(lp['bk']),
                                     _expand_bias_by_head(lp['bv'])], axis=1))
        wo.append(_expand_rows_by_head(lp['wo']))
        w1.append(_pad2(lp['w1'], HP, HP))
        w2.append(_pad2(lp['w2'], HP, HP))
        vec.append(jnp.concatenate([
            _pad2(lp['bo'], 1, HP), _pad2(lp['b1'], 1, HP), _pad2(lp['b2'], 1, HP),
            _pad2(lp['ln1g'], 1, HP), _pad2(lp['ln1b'], 1, HP),
            _pad2(lp['ln2g'], 1, HP), _pad2(lp['ln2b'], 1, HP),
            jnp.zeros((1, HP), jnp.float32)], axis=0))
    head_w = jnp.stack([_pad2(p['pooler_w'], HP, HP), _pad2(p['cls_w'], HP, HP)])
    head_vec = jnp.concatenate([
        _pad2(p['emb_ln_g'][None, :], 1, HP), _pad2(p['emb_ln_b'][None, :], 1, HP),
        _pad2(p['pooler_b'], 1, HP), _pad2(p['cls_b'], 1, HP),
        jnp.zeros((4, HP), jnp.float32)], axis=0)
    return {
        'wqkv': jnp.stack(wqkv),      # (L, HP, 3*QKV_W)
        'bqkv': jnp.stack(bqkv),      # (L, 1, 3*QKV_W)
        'wo': jnp.stack(wo),          # (L, QKV_W, HP)
        'w1': jnp.stack(w1),          # (L, HP, HP)
        'w2': jnp.stack(w2),          # (L, HP, HP)
        'vec': jnp.stack(vec),        # (L, 8, HP)
        'head_w': head_w,             # (2, HP, HP)
        'head_vec': head_vec,         # (8, HP)
        'word_emb': p['word_emb'],
        'pos_emb': p['pos_emb'],
        'type_emb': p['type_emb'],
    }


# ---------------- forward (equivalent of DefaultModel.forward after tokenization) ----------------
def default_model_forward(packed, input_ids, attention_mask):
    # TODO(synk): BertTokenizer string tokenization has no Pallas equivalent;
    # the kernel consumes token ids + attention mask (output of sents_to_tensor).
    B, S = input_ids.shape
    pos_ids = jnp.arange(S, dtype=jnp.int32)[None, :]
    type_ids = jnp.zeros((B, S), jnp.int32)

    # Embedding gathers stay in plain JAX (data-dependent gather = glue);
    # everything else runs in one fused Pallas kernel.
    emb = (packed['word_emb'][input_ids]
           + packed['pos_emb'][pos_ids]
           + packed['type_emb'][type_ids])                        # (B, S, HIDDEN)
    x_emb = jnp.zeros((BS, HP), jnp.float32).at[:, :HIDDEN].set(emb.reshape(BS, HIDDEN))

    # additive attention bias over the folded (batch*seq) key axis:
    # 0 for same-batch real keys, -10000 for pad keys / cross-batch pairs,
    # replicated per head along the sublane-stacked score rows.
    rows = jnp.arange(BS, dtype=jnp.int32)
    same_batch = (rows[:, None] // S) == (rows[None, :] // S)
    key_real = attention_mask.reshape(BS).astype(bool)
    allowed = jnp.logical_and(same_batch, key_real[None, :])
    bias = jnp.where(allowed, 0.0, NEG_INF).astype(jnp.float32)   # (BS, BS)
    attn_bias = jnp.tile(bias, (NUM_HEADS, 1))                    # (NH*BS, BS)

    return run_bert_fused(packed, x_emb, attn_bias)               # pre-softmax, (B, n_class)


if __name__ == "__main__":
    key = jax.random.PRNGKey(0)
    pkey, ikey = jax.random.split(key)
    params = init_params(pkey)
    packed = pack_params(params)

    # deterministic example "tokenized sentences"
    input_ids = jax.random.randint(ikey, (BATCH, SEQ), 0, VOCAB, dtype=jnp.int32)
    lengths = jnp.array([SEQ, 5], dtype=jnp.int32)
    attention_mask = (jnp.arange(SEQ, dtype=jnp.int32)[None, :] < lengths[:, None]).astype(jnp.int32)

    fwd = jax.jit(default_model_forward)
    logits = fwd(packed, input_ids, attention_mask)
    jax.block_until_ready(logits)
    assert logits.shape == (BATCH, N_CLASS)
    assert bool(jnp.all(jnp.isfinite(logits)))
    print("KERNEL_OK")
</pallas_src>

<mosaic_0001>
module attributes {stable_mosaic.version = 11 : i64} {
  func.func @bert_fused_kernel(%arg0: memref<16x128xf32, #tpu.memory_space<vmem>>, %arg1: memref<64x16xf32, #tpu.memory_space<vmem>>, %arg2: memref<2x128x1536xf32, #tpu.memory_space<vmem>>, %arg3: memref<2x1x1536xf32, #tpu.memory_space<vmem>>, %arg4: memref<2x512x128xf32, #tpu.memory_space<vmem>>, %arg5: memref<2x128x128xf32, #tpu.memory_space<vmem>>, %arg6: memref<2x128x128xf32, #tpu.memory_space<vmem>>, %arg7: memref<2x8x128xf32, #tpu.memory_space<vmem>>, %arg8: memref<2x128x128xf32, #tpu.memory_space<vmem>>, %arg9: memref<8x128xf32, #tpu.memory_space<vmem>>, %arg10: memref<2x128xf32, #tpu.memory_space<vmem>>) attributes {dimension_semantics = [], scalar_prefetch = 0 : i64, scratch_operands = 0 : i64, tpu.core_type = #tpu.core_type<tc>} {
    %c0 = arith.constant 0 : index
    %c0_0 = arith.constant 0 : index
    %0 = vector.load %arg0[%c0, %c0_0] : memref<16x128xf32, #tpu.memory_space<vmem>>, vector<16x128xf32>
    %c0_1 = arith.constant 0 : index
    %c0_2 = arith.constant 0 : index
    %1 = vector.load %arg9[%c0_1, %c0_2] : memref<8x128xf32, #tpu.memory_space<vmem>>, vector<8x128xf32>
    %c0_3 = arith.constant 0 : index
    %c0_4 = arith.constant 0 : index
    %2 = vector.load %arg1[%c0_3, %c0_4] : memref<64x16xf32, #tpu.memory_space<vmem>>, vector<64x16xf32>
    %3 = vector.extract_strided_slice %1 {offsets = [0, 0], sizes = [1, 128], strides = [1, 1]} : vector<8x128xf32> to vector<1x128xf32>
    %4 = vector.extract_strided_slice %1 {offsets = [1, 0], sizes = [1, 128], strides = [1, 1]} : vector<8x128xf32> to vector<1x128xf32>
    %cst = arith.constant dense<0.000000e+00> : vector<16xf32>
    %5 = vector.multi_reduction <add>, %0, %cst [1] : vector<16x128xf32> to vector<16xf32>
    %6 = vector.shape_cast %5 : vector<16xf32> to vector<16x1xf32>
    %cst_5 = arith.constant 3.125000e-02 : f32
    %7 = vector.broadcast %cst_5 : f32 to vector<16x1xf32>
    %8 = arith.mulf %6, %7 : vector<16x1xf32>
    %9 = arith.mulf %0, %0 : vector<16x128xf32>
    %cst_6 = arith.constant dense<0.000000e+00> : vector<16xf32>
    %10 = vector.multi_reduction <add>, %9, %cst_6 [1] : vector<16x128xf32> to vector<16xf32>
    %11 = vector.shape_cast %10 : vector<16xf32> to vector<16x1xf32>
    %cst_7 = arith.constant 3.125000e-02 : f32
    %12 = vector.broadcast %cst_7 : f32 to vector<16x1xf32>
    %13 = arith.mulf %11, %12 : vector<16x1xf32>
    %14 = arith.mulf %8, %8 : vector<16x1xf32>
    %15 = arith.subf %13, %14 : vector<16x1xf32>
    %cst_8 = arith.constant 0.000000e+00 : f32
    %16 = vector.broadcast %cst_8 : f32 to vector<16x1xf32>
    %17 = arith.maximumf %15, %16 : vector<16x1xf32>
    %18 = vector.broadcast %8 : vector<16x1xf32> to vector<16x128xf32>
    %19 = arith.subf %0, %18 : vector<16x128xf32>
    %cst_9 = arith.constant 9.99999996E-13 : f32
    %20 = vector.broadcast %cst_9 : f32 to vector<16x1xf32>
    %21 = arith.addf %17, %20 : vector<16x1xf32>
    %22 = math.rsqrt %21 : vector<16x1xf32>
    %23 = vector.broadcast %22 : vector<16x1xf32> to vector<16x128xf32>
    %24 = arith.mulf %19, %23 : vector<16x128xf32>
    %25 = vector.broadcast %3 : vector<1x128xf32> to vector<16x128xf32>
    %26 = arith.mulf %24, %25 : vector<16x128xf32>
    %27 = vector.broadcast %4 : vector<1x128xf32> to vector<16x128xf32>
    %28 = arith.addf %26, %27 : vector<16x128xf32>
    %c0_10 = arith.constant 0 : index
    %c0_11 = arith.constant 0 : index
    %c0_12 = arith.constant 0 : index
    %29 = vector.load %arg7[%c0_10, %c0_11, %c0_12] : memref<2x8x128xf32, #tpu.memory_space<vmem>>, vector<1x8x128xf32>
    %30 = vector.shape_cast %29 : vector<1x8x128xf32> to vector<8x128xf32>
    %c0_13 = arith.constant 0 : index
    %c0_14 = arith.constant 0 : index
    %c0_15 = arith.constant 0 : index
    %31 = vector.load %arg2[%c0_13, %c0_14, %c0_15] : memref<2x128x1536xf32, #tpu.memory_space<vmem>>, vector<1x128x1536xf32>
    %32 = vector.shape_cast %31 : vector<1x128x1536xf32> to vector<128x1536xf32>
    %cst_16 = arith.constant dense<0.000000e+00> : vector<16x1536xf32>
    %33 = tpu.matmul %28, %32, %cst_16 {dimension_numbers = #tpu.dot_dimension_numbers<[1], [0], [0], [1], [0, 0, 1, 1], [], []>} : vector<16x128xf32>, vector<128x1536xf32>, vector<16x1536xf32> -> vector<16x1536xf32>
    %c0_17 = arith.constant 0 : index
    %c0_18 = arith.constant 0 : index
    %c0_19 = arith.constant 0 : index
    %34 = vector.load %arg3[%c0_17, %c0_18, %c0_19] : memref<2x1x1536xf32, #tpu.memory_space<vmem>>, vector<1x1x1536xf32>
    %35 = vector.shape_cast %34 : vector<1x1x1536xf32> to vector<1x1536xf32>
    %36 = vector.broadcast %35 : vector<1x1536xf32> to vector<16x1536xf32>
    %37 = arith.addf %33, %36 : vector<16x1536xf32>
    %38 = vector.extract_strided_slice %37 {offsets = [0, 0], sizes = [16, 512], strides = [1, 1]} : vector<16x1536xf32> to vector<16x512xf32>
    %39 = vector.extract_strided_slice %37 {offsets = [0, 512], sizes = [16, 512], strides = [1, 1]} : vector<16x1536xf32> to vector<16x512xf32>
    %40 = vector.extract_strided_slice %37 {offsets = [0, 1024], sizes = [16, 512], strides = [1, 1]} : vector<16x1536xf32> to vector<16x512xf32>
    %41 = vector.extract_strided_slice %38 {offsets = [0, 0], sizes = [16, 128], strides = [1, 1]} : vector<16x512xf32> to vector<16x128xf32>
    %42 = vector.extract_strided_slice %39 {offsets = [0, 0], sizes = [16, 128], strides = [1, 1]} : vector<16x512xf32> to vector<16x128xf32>
    %cst_20 = arith.constant dense<0.000000e+00> : vector<16x16xf32>
    %43 = tpu.matmul %41, %42, %cst_20 {dimension_numbers = #tpu.dot_dimension_numbers<[1], [1], [0], [0], [0, 0, 1, 0], [], []>} : vector<16x128xf32>, vector<16x128xf32>, vector<16x16xf32> -> vector<16x16xf32>
    %44 = vector.extract_strided_slice %38 {offsets = [0, 128], sizes = [16, 128], strides = [1, 1]} : vector<16x512xf32> to vector<16x128xf32>
    %45 = vector.extract_strided_slice %39 {offsets = [0, 128], sizes = [16, 128], strides = [1, 1]} : vector<16x512xf32> to vector<16x128xf32>
    %cst_21 = arith.constant dense<0.000000e+00> : vector<16x16xf32>
    %46 = tpu.matmul %44, %45, %cst_21 {dimension_numbers = #tpu.dot_dimension_numbers<[1], [1], [0], [0], [0, 0, 1, 0], [], []>} : vector<16x128xf32>, vector<16x128xf32>, vector<16x16xf32> -> vector<16x16xf32>
    %47 = vector.extract_strided_slice %38 {offsets = [0, 256], sizes = [16, 128], strides = [1, 1]} : vector<16x512xf32> to vector<16x128xf32>
    %48 = vector.extract_strided_slice %39 {offsets = [0, 256], sizes = [16, 128], strides = [1, 1]} : vector<16x512xf32> to vector<16x128xf32>
    %cst_22 = arith.constant dense<0.000000e+00> : vector<16x16xf32>
    %49 = tpu.matmul %47, %48, %cst_22 {dimension_numbers = #tpu.dot_dimension_numbers<[1], [1], [0], [0], [0, 0, 1, 0], [], []>} : vector<16x128xf32>, vector<16x128xf32>, vector<16x16xf32> -> vector<16x16xf32>
    %50 = vector.extract_strided_slice %38 {offsets = [0, 384], sizes = [16, 128], strides = [1, 1]} : vector<16x512xf32> to vector<16x128xf32>
    %51 = vector.extract_strided_slice %39 {offsets = [0, 384], sizes = [16, 128], strides = [1, 1]} : vector<16x512xf32> to vector<16x128xf32>
    %cst_23 = arith.constant dense<0.000000e+00> : vector<16x16xf32>
    %52 = tpu.matmul %50, %51, %cst_23 {dimension_numbers = #tpu.dot_dimension_numbers<[1], [1], [0], [0], [0, 0, 1, 0], [], []>} : vector<16x128xf32>, vector<16x128xf32>, vector<16x16xf32> -> vector<16x16xf32>
    %53 = tpu.concatenate %43, %46, %49, %52 in 0 : vector<16x16xf32>, vector<16x16xf32>, vector<16x16xf32>, vector<16x16xf32> -> vector<64x16xf32>
    %cst_24 = arith.constant 0.353553385 : f32
    %54 = vector.broadcast %cst_24 : f32 to vector<64x16xf32>
    %55 = arith.mulf %53, %54 : vector<64x16xf32>
    %56 = arith.addf %55, %2 : vector<64x16xf32>
    %cst_25 = arith.constant dense<0xFF800000> : vector<64xf32>
    %57 = vector.multi_reduction <maximumf>, %56, %cst_25 [1] : vector<64x16xf32> to vector<64xf32>
    %58 = vector.shape_cast %57 : vector<64xf32> to vector<64x1xf32>
    %59 = vector.broadcast %58 : vector<64x1xf32> to vector<64x16xf32>
    %60 = arith.subf %56, %59 : vector<64x16xf32>
    %61 = math.exp %60 : vector<64x16xf32>
    %cst_26 = arith.constant dense<0.000000e+00> : vector<64xf32>
    %62 = vector.multi_reduction <add>, %61, %cst_26 [1] : vector<64x16xf32> to vector<64xf32>
    %63 = vector.shape_cast %62 : vector<64xf32> to vector<64x1xf32>
    %64 = tpu.reciprocal %63 {approx = true} : vector<64x1xf32> -> vector<64x1xf32>
    %65 = vector.broadcast %64 : vector<64x1xf32> to vector<64x16xf32>
    %66 = arith.mulf %61, %65 : vector<64x16xf32>
    %67 = vector.extract_strided_slice %66 {offsets = [0, 0], sizes = [16, 16], strides = [1, 1]} : vector<64x16xf32> to vector<16x16xf32>
    %68 = vector.extract_strided_slice %40 {offsets = [0, 0], sizes = [16, 128], strides = [1, 1]} : vector<16x512xf32> to vector<16x128xf32>
    %cst_27 = arith.constant dense<0.000000e+00> : vector<16x128xf32>
    %69 = tpu.matmul %67, %68, %cst_27 {dimension_numbers = #tpu.dot_dimension_numbers<[1], [0], [0], [1], [0, 0, 1, 1], [], []>} : vector<16x16xf32>, vector<16x128xf32>, vector<16x128xf32> -> vector<16x128xf32>
    %70 = vector.extract_strided_slice %66 {offsets = [16, 0], sizes = [16, 16], strides = [1, 1]} : vector<64x16xf32> to vector<16x16xf32>
    %71 = vector.extract_strided_slice %40 {offsets = [0, 128], sizes = [16, 128], strides = [1, 1]} : vector<16x512xf32> to vector<16x128xf32>
    %cst_28 = arith.constant dense<0.000000e+00> : vector<16x128xf32>
    %72 = tpu.matmul %70, %71, %cst_28 {dimension_numbers = #tpu.dot_dimension_numbers<[1], [0], [0], [1], [0, 0, 1, 1], [], []>} : vector<16x16xf32>, vector<16x128xf32>, vector<16x128xf32> -> vector<16x128xf32>
    %73 = vector.extract_strided_slice %66 {offsets = [32, 0], sizes = [16, 16], strides = [1, 1]} : vector<64x16xf32> to vector<16x16xf32>
    %74 = vector.extract_strided_slice %40 {offsets = [0, 256], sizes = [16, 128], strides = [1, 1]} : vector<16x512xf32> to vector<16x128xf32>
    %cst_29 = arith.constant dense<0.000000e+00> : vector<16x128xf32>
    %75 = tpu.matmul %73, %74, %cst_29 {dimension_numbers = #tpu.dot_dimension_numbers<[1], [0], [0], [1], [0, 0, 1, 1], [], []>} : vector<16x16xf32>, vector<16x128xf32>, vector<16x128xf32> -> vector<16x128xf32>
    %76 = vector.extract_strided_slice %66 {offsets = [48, 0], sizes = [16, 16], strides = [1, 1]} : vector<64x16xf32> to vector<16x16xf32>
    %77 = vector.extract_strided_slice %40 {offsets = [0, 384], sizes = [16, 128], strides = [1, 1]} : vector<16x512xf32> to vector<16x128xf32>
    %cst_30 = arith.constant dense<0.000000e+00> : vector<16x128xf32>
    %78 = tpu.matmul %76, %77, %cst_30 {dimension_numbers = #tpu.dot_dimension_numbers<[1], [0], [0], [1], [0, 0, 1, 1], [], []>} : vector<16x16xf32>, vector<16x128xf32>, vector<16x128xf32> -> vector<16x128xf32>
    %79 = tpu.concatenate %69, %72, %75, %78 in 1 : vector<16x128xf32>, vector<16x128xf32>, vector<16x128xf32>, vector<16x128xf32> -> vector<16x512xf32>
    %c0_31 = arith.constant 0 : index
    %c0_32 = arith.constant 0 : index
    %c0_33 = arith.constant 0 : index
    %80 = vector.load %arg4[%c0_31, %c0_32, %c0_33] : memref<2x512x128xf32, #tpu.memory_space<vmem>>, vector<1x512x128xf32>
    %81 = vector.shape_cast %80 : vector<1x512x128xf32> to vector<512x128xf32>
    %cst_34 = arith.constant dense<0.000000e+00> : vector<16x128xf32>
    %82 = tpu.matmul %79, %81, %cst_34 {dimension_numbers = #tpu.dot_dimension_numbers<[1], [0], [0], [1], [0, 0, 1, 1], [], []>} : vector<16x512xf32>, vector<512x128xf32>, vector<16x128xf32> -> vector<16x128xf32>
    %83 = vector.extract_strided_slice %30 {offsets = [0, 0], sizes = [1, 128], strides = [1, 1]} : vector<8x128xf32> to vector<1x128xf32>
    %84 = vector.broadcast %83 : vector<1x128xf32> to vector<16x128xf32>
    %85 = arith.addf %82, %84 : vector<16x128xf32>
    %86 = arith.addf %28, %85 : vector<16x128xf32>
    %87 = vector.extract_strided_slice %30 {offsets = [3, 0], sizes = [1, 128], strides = [1, 1]} : vector<8x128xf32> to vector<1x128xf32>
    %88 = vector.extract_strided_slice %30 {offsets = [4, 0], sizes = [1, 128], strides = [1, 1]} : vector<8x128xf32> to vector<1x128xf32>
    %cst_35 = arith.constant dense<0.000000e+00> : vector<16xf32>
    %89 = vector.multi_reduction <add>, %86, %cst_35 [1] : vector<16x128xf32> to vector<16xf32>
    %90 = vector.shape_cast %89 : vector<16xf32> to vector<16x1xf32>
    %cst_36 = arith.constant 3.125000e-02 : f32
    %91 = vector.broadcast %cst_36 : f32 to vector<16x1xf32>
    %92 = arith.mulf %90, %91 : vector<16x1xf32>
    %93 = arith.mulf %86, %86 : vector<16x128xf32>
    %cst_37 = arith.constant dense<0.000000e+00> : vector<16xf32>
    %94 = vector.multi_reduction <add>, %93, %cst_37 [1] : vector<16x128xf32> to vector<16xf32>
    %95 = vector.shape_cast %94 : vector<16xf32> to vector<16x1xf32>
    %cst_38 = arith.constant 3.125000e-02 : f32
    %96 = vector.broadcast %cst_38 : f32 to vector<16x1xf32>
    %97 = arith.mulf %95, %96 : vector<16x1xf32>
    %98 = arith.mulf %92, %92 : vector<16x1xf32>
    %99 = arith.subf %97, %98 : vector<16x1xf32>
    %cst_39 = arith.constant 0.000000e+00 : f32
    %100 = vector.broadcast %cst_39 : f32 to vector<16x1xf32>
    %101 = arith.maximumf %99, %100 : vector<16x1xf32>
    %102 = vector.broadcast %92 : vector<16x1xf32> to vector<16x128xf32>
    %103 = arith.subf %86, %102 : vector<16x128xf32>
    %cst_40 = arith.constant 9.99999996E-13 : f32
    %104 = vector.broadcast %cst_40 : f32 to vector<16x1xf32>
    %105 = arith.addf %101, %104 : vector<16x1xf32>
    %106 = math.rsqrt %105 : vector<16x1xf32>
    %107 = vector.broadcast %106 : vector<16x1xf32> to vector<16x128xf32>
    %108 = arith.mulf %103, %107 : vector<16x128xf32>
    %109 = vector.broadcast %87 : vector<1x128xf32> to vector<16x128xf32>
    %110 = arith.mulf %108, %109 : vector<16x128xf32>
    %111 = vector.broadcast %88 : vector<1x128xf32> to vector<16x128xf32>
    %112 = arith.addf %110, %111 : vector<16x128xf32>
    %c0_41 = arith.constant 0 : index
    %c0_42 = arith.constant 0 : index
    %c0_43 = arith.constant 0 : index
    %113 = vector.load %arg5[%c0_41, %c0_42, %c0_43] : memref<2x128x128xf32, #tpu.memory_space<vmem>>, vector<1x128x128xf32>
    %114 = vector.shape_cast %113 : vector<1x128x128xf32> to vector<128x128xf32>
    %cst_44 = arith.constant dense<0.000000e+00> : vector<16x128xf32>
    %115 = tpu.matmul %112, %114, %cst_44 {dimension_numbers = #tpu.dot_dimension_numbers<[1], [0], [0], [1], [0, 0, 1, 1], [], []>} : vector<16x128xf32>, vector<128x128xf32>, vector<16x128xf32> -> vector<16x128xf32>
    %116 = vector.extract_strided_slice %30 {offsets = [1, 0], sizes = [1, 128], strides = [1, 1]} : vector<8x128xf32> to vector<1x128xf32>
    %117 = vector.broadcast %116 : vector<1x128xf32> to vector<16x128xf32>
    %118 = arith.addf %115, %117 : vector<16x128xf32>
    %cst_45 = arith.constant 5.000000e-01 : f32
    %119 = vector.broadcast %cst_45 : f32 to vector<16x128xf32>
    %120 = arith.mulf %119, %118 : vector<16x128xf32>
    %cst_46 = arith.constant 4.471500e-02 : f32
    %121 = vector.broadcast %cst_46 : f32 to vector<16x128xf32>
    %122 = arith.mulf %121, %118 : vector<16x128xf32>
    %123 = arith.mulf %122, %118 : vector<16x128xf32>
    %124 = arith.mulf %123, %118 : vector<16x128xf32>
    %125 = arith.addf %118, %124 : vector<16x128xf32>
    %cst_47 = arith.constant 0.797884583 : f32
    %126 = vector.broadcast %cst_47 : f32 to vector<16x128xf32>
    %127 = arith.mulf %126, %125 : vector<16x128xf32>
    %128 = math.tanh %127 : vector<16x128xf32>
    %cst_48 = arith.constant 1.000000e+00 : f32
    %129 = vector.broadcast %cst_48 : f32 to vector<16x128xf32>
    %130 = arith.addf %129, %128 : vector<16x128xf32>
    %131 = arith.mulf %120, %130 : vector<16x128xf32>
    %c0_49 = arith.constant 0 : index
    %c0_50 = arith.constant 0 : index
    %c0_51 = arith.constant 0 : index
    %132 = vector.load %arg6[%c0_49, %c0_50, %c0_51] : memref<2x128x128xf32, #tpu.memory_space<vmem>>, vector<1x128x128xf32>
    %133 = vector.shape_cast %132 : vector<1x128x128xf32> to vector<128x128xf32>
    %cst_52 = arith.constant dense<0.000000e+00> : vector<16x128xf32>
    %134 = tpu.matmul %131, %133, %cst_52 {dimension_numbers = #tpu.dot_dimension_numbers<[1], [0], [0], [1], [0, 0, 1, 1], [], []>} : vector<16x128xf32>, vector<128x128xf32>, vector<16x128xf32> -> vector<16x128xf32>
    %135 = vector.extract_strided_slice %30 {offsets = [2, 0], sizes = [1, 128], strides = [1, 1]} : vector<8x128xf32> to vector<1x128xf32>
    %136 = vector.broadcast %135 : vector<1x128xf32> to vector<16x128xf32>
    %137 = arith.addf %134, %136 : vector<16x128xf32>
    %138 = arith.addf %112, %137 : vector<16x128xf32>
    %139 = vector.extract_strided_slice %30 {offsets = [5, 0], sizes = [1, 128], strides = [1, 1]} : vector<8x128xf32> to vector<1x128xf32>
    %140 = vector.extract_strided_slice %30 {offsets = [6, 0], sizes = [1, 128], strides = [1, 1]} : vector<8x128xf32> to vector<1x128xf32>
    %cst_53 = arith.constant dense<0.000000e+00> : vector<16xf32>
    %141 = vector.multi_reduction <add>, %138, %cst_53 [1] : vector<16x128xf32> to vector<16xf32>
    %142 = vector.shape_cast %141 : vector<16xf32> to vector<16x1xf32>
    %cst_54 = arith.constant 3.125000e-02 : f32
    %143 = vector.broadcast %cst_54 : f32 to vector<16x1xf32>
    %144 = arith.mulf %142, %143 : vector<16x1xf32>
    %145 = arith.mulf %138, %138 : vector<16x128xf32>
    %cst_55 = arith.constant dense<0.000000e+00> : vector<16xf32>
    %146 = vector.multi_reduction <add>, %145, %cst_55 [1] : vector<16x128xf32> to vector<16xf32>
    %147 = vector.shape_cast %146 : vector<16xf32> to vector<16x1xf32>
    %cst_56 = arith.constant 3.125000e-02 : f32
    %148 = vector.broadcast %cst_56 : f32 to vector<16x1xf32>
    %149 = arith.mulf %147, %148 : vector<16x1xf32>
    %150 = arith.mulf %144, %144 : vector<16x1xf32>
    %151 = arith.subf %149, %150 : vector<16x1xf32>
    %cst_57 = arith.constant 0.000000e+00 : f32
    %152 = vector.broadcast %cst_57 : f32 to vector<16x1xf32>
    %153 = arith.maximumf %151, %152 : vector<16x1xf32>
    %154 = vector.broadcast %144 : vector<16x1xf32> to vector<16x128xf32>
    %155 = arith.subf %138, %154 : vector<16x128xf32>
    %cst_58 = arith.constant 9.99999996E-13 : f32
    %156 = vector.broadcast %cst_58 : f32 to vector<16x1xf32>
    %157 = arith.addf %153, %156 : vector<16x1xf32>
    %158 = math.rsqrt %157 : vector<16x1xf32>
    %159 = vector.broadcast %158 : vector<16x1xf32> to vector<16x128xf32>
    %160 = arith.mulf %155, %159 : vector<16x128xf32>
    %161 = vector.broadcast %139 : vector<1x128xf32> to vector<16x128xf32>
    %162 = arith.mulf %160, %161 : vector<16x128xf32>
    %163 = vector.broadcast %140 : vector<1x128xf32> to vector<16x128xf32>
    %164 = arith.addf %162, %163 : vector<16x128xf32>
    %c1 = arith.constant 1 : index
    %c0_59 = arith.constant 0 : index
    %c0_60 = arith.constant 0 : index
    %165 = vector.load %arg7[%c1, %c0_59, %c0_60] : memref<2x8x128xf32, #tpu.memory_space<vmem>>, vector<1x8x128xf32>
    %166 = vector.shape_cast %165 : vector<1x8x128xf32> to vector<8x128xf32>
    %c1_61 = arith.constant 1 : index
    %c0_62 = arith.constant 0 : index
    %c0_63 = arith.constant 0 : index
    %167 = vector.load %arg2[%c1_61, %c0_62, %c0_63] : memref<2x128x1536xf32, #tpu.memory_space<vmem>>, vector<1x128x1536xf32>
    %168 = vector.shape_cast %167 : vector<1x128x1536xf32> to vector<128x1536xf32>
    %cst_64 = arith.constant dense<0.000000e+00> : vector<16x1536xf32>
    %169 = tpu.matmul %164, %168, %cst_64 {dimension_numbers = #tpu.dot_dimension_numbers<[1], [0], [0], [1], [0, 0, 1, 1], [], []>} : vector<16x128xf32>, vector<128x1536xf32>, vector<16x1536xf32> -> vector<16x1536xf32>
    %c1_65 = arith.constant 1 : index
    %c0_66 = arith.constant 0 : index
    %c0_67 = arith.constant 0 : index
    %170 = vector.load %arg3[%c1_65, %c0_66, %c0_67] : memref<2x1x1536xf32, #tpu.memory_space<vmem>>, vector<1x1x1536xf32>
    %171 = vector.shape_cast %170 : vector<1x1x1536xf32> to vector<1x1536xf32>
    %172 = vector.broadcast %171 : vector<1x1536xf32> to vector<16x1536xf32>
    %173 = arith.addf %169, %172 : vector<16x1536xf32>
    %174 = vector.extract_strided_slice %173 {offsets = [0, 0], sizes = [16, 512], strides = [1, 1]} : vector<16x1536xf32> to vector<16x512xf32>
    %175 = vector.extract_strided_slice %173 {offsets = [0, 512], sizes = [16, 512], strides = [1, 1]} : vector<16x1536xf32> to vector<16x512xf32>
    %176 = vector.extract_strided_slice %173 {offsets = [0, 1024], sizes = [16, 512], strides = [1, 1]} : vector<16x1536xf32> to vector<16x512xf32>
    %177 = vector.extract_strided_slice %174 {offsets = [0, 0], sizes = [16, 128], strides = [1, 1]} : vector<16x512xf32> to vector<16x128xf32>
    %178 = vector.extract_strided_slice %175 {offsets = [0, 0], sizes = [16, 128], strides = [1, 1]} : vector<16x512xf32> to vector<16x128xf32>
    %cst_68 = arith.constant dense<0.000000e+00> : vector<16x16xf32>
    %179 = tpu.matmul %177, %178, %cst_68 {dimension_numbers = #tpu.dot_dimension_numbers<[1], [1], [0], [0], [0, 0, 1, 0], [], []>} : vector<16x128xf32>, vector<16x128xf32>, vector<16x16xf32> -> vector<16x16xf32>
    %180 = vector.extract_strided_slice %174 {offsets = [0, 128], sizes = [16, 128], strides = [1, 1]} : vector<16x512xf32> to vector<16x128xf32>
    %181 = vector.extract_strided_slice %175 {offsets = [0, 128], sizes = [16, 128], strides = [1, 1]} : vector<16x512xf32> to vector<16x128xf32>
    %cst_69 = arith.constant dense<0.000000e+00> : vector<16x16xf32>
    %182 = tpu.matmul %180, %181, %cst_69 {dimension_numbers = #tpu.dot_dimension_numbers<[1], [1], [0], [0], [0, 0, 1, 0], [], []>} : vector<16x128xf32>, vector<16x128xf32>, vector<16x16xf32> -> vector<16x16xf32>
    %183 = vector.extract_strided_slice %174 {offsets = [0, 256], sizes = [16, 128], strides = [1, 1]} : vector<16x512xf32> to vector<16x128xf32>
    %184 = vector.extract_strided_slice %175 {offsets = [0, 256], sizes = [16, 128], strides = [1, 1]} : vector<16x512xf32> to vector<16x128xf32>
    %cst_70 = arith.constant dense<0.000000e+00> : vector<16x16xf32>
    %185 = tpu.matmul %183, %184, %cst_70 {dimension_numbers = #tpu.dot_dimension_numbers<[1], [1], [0], [0], [0, 0, 1, 0], [], []>} : vector<16x128xf32>, vector<16x128xf32>, vector<16x16xf32> -> vector<16x16xf32>
    %186 = vector.extract_strided_slice %174 {offsets = [0, 384], sizes = [16, 128], strides = [1, 1]} : vector<16x512xf32> to vector<16x128xf32>
    %187 = vector.extract_strided_slice %175 {offsets = [0, 384], sizes = [16, 128], strides = [1, 1]} : vector<16x512xf32> to vector<16x128xf32>
    %cst_71 = arith.constant dense<0.000000e+00> : vector<16x16xf32>
    %188 = tpu.matmul %186, %187, %cst_71 {dimension_numbers = #tpu.dot_dimension_numbers<[1], [1], [0], [0], [0, 0, 1, 0], [], []>} : vector<16x128xf32>, vector<16x128xf32>, vector<16x16xf32> -> vector<16x16xf32>
    %189 = tpu.concatenate %179, %182, %185, %188 in 0 : vector<16x16xf32>, vector<16x16xf32>, vector<16x16xf32>, vector<16x16xf32> -> vector<64x16xf32>
    %cst_72 = arith.constant 0.353553385 : f32
    %190 = vector.broadcast %cst_72 : f32 to vector<64x16xf32>
    %191 = arith.mulf %189, %190 : vector<64x16xf32>
    %192 = arith.addf %191, %2 : vector<64x16xf32>
    %cst_73 = arith.constant dense<0xFF800000> : vector<64xf32>
    %193 = vector.multi_reduction <maximumf>, %192, %cst_73 [1] : vector<64x16xf32> to vector<64xf32>
    %194 = vector.shape_cast %193 : vector<64xf32> to vector<64x1xf32>
    %195 = vector.broadcast %194 : vector<64x1xf32> to vector<64x16xf32>
    %196 = arith.subf %192, %195 : vector<64x16xf32>
    %197 = math.exp %196 : vector<64x16xf32>
    %cst_74 = arith.constant dense<0.000000e+00> : vector<64xf32>
    %198 = vector.multi_reduction <add>, %197, %cst_74 [1] : vector<64x16xf32> to vector<64xf32>
    %199 = vector.shape_cast %198 : vector<64xf32> to vector<64x1xf32>
    %200 = tpu.reciprocal %199 {approx = true} : vector<64x1xf32> -> vector<64x1xf32>
    %201 = vector.broadcast %200 : vector<64x1xf32> to vector<64x16xf32>
    %202 = arith.mulf %197, %201 : vector<64x16xf32>
    %203 = vector.extract_strided_slice %202 {offsets = [0, 0], sizes = [16, 16], strides = [1, 1]} : vector<64x16xf32> to vector<16x16xf32>
    %204 = vector.extract_strided_slice %176 {offsets = [0, 0], sizes = [16, 128], strides = [1, 1]} : vector<16x512xf32> to vector<16x128xf32>
    %cst_75 = arith.constant dense<0.000000e+00> : vector<16x128xf32>
    %205 = tpu.matmul %203, %204, %cst_75 {dimension_numbers = #tpu.dot_dimension_numbers<[1], [0], [0], [1], [0, 0, 1, 1], [], []>} : vector<16x16xf32>, vector<16x128xf32>, vector<16x128xf32> -> vector<16x128xf32>
    %206 = vector.extract_strided_slice %202 {offsets = [16, 0], sizes = [16, 16], strides = [1, 1]} : vector<64x16xf32> to vector<16x16xf32>
    %207 = vector.extract_strided_slice %176 {offsets = [0, 128], sizes = [16, 128], strides = [1, 1]} : vector<16x512xf32> to vector<16x128xf32>
    %cst_76 = arith.constant dense<0.000000e+00> : vector<16x128xf32>
    %208 = tpu.matmul %206, %207, %cst_76 {dimension_numbers = #tpu.dot_dimension_numbers<[1], [0], [0], [1], [0, 0, 1, 1], [], []>} : vector<16x16xf32>, vector<16x128xf32>, vector<16x128xf32> -> vector<16x128xf32>
    %209 = vector.extract_strided_slice %202 {offsets = [32, 0], sizes = [16, 16], strides = [1, 1]} : vector<64x16xf32> to vector<16x16xf32>
    %210 = vector.extract_strided_slice %176 {offsets = [0, 256], sizes = [16, 128], strides = [1, 1]} : vector<16x512xf32> to vector<16x128xf32>
    %cst_77 = arith.constant dense<0.000000e+00> : vector<16x128xf32>
    %211 = tpu.matmul %209, %210, %cst_77 {dimension_numbers = #tpu.dot_dimension_numbers<[1], [0], [0], [1], [0, 0, 1, 1], [], []>} : vector<16x16xf32>, vector<16x128xf32>, vector<16x128xf32> -> vector<16x128xf32>
    %212 = vector.extract_strided_slice %202 {offsets = [48, 0], sizes = [16, 16], strides = [1, 1]} : vector<64x16xf32> to vector<16x16xf32>
    %213 = vector.extract_strided_slice %176 {offsets = [0, 384], sizes = [16, 128], strides = [1, 1]} : vector<16x512xf32> to vector<16x128xf32>
    %cst_78 = arith.constant dense<0.000000e+00> : vector<16x128xf32>
    %214 = tpu.matmul %212, %213, %cst_78 {dimension_numbers = #tpu.dot_dimension_numbers<[1], [0], [0], [1], [0, 0, 1, 1], [], []>} : vector<16x16xf32>, vector<16x128xf32>, vector<16x128xf32> -> vector<16x128xf32>
    %215 = tpu.concatenate %205, %208, %211, %214 in 1 : vector<16x128xf32>, vector<16x128xf32>, vector<16x128xf32>, vector<16x128xf32> -> vector<16x512xf32>
    %c1_79 = arith.constant 1 : index
    %c0_80 = arith.constant 0 : index
    %c0_81 = arith.constant 0 : index
    %216 = vector.load %arg4[%c1_79, %c0_80, %c0_81] : memref<2x512x128xf32, #tpu.memory_space<vmem>>, vector<1x512x128xf32>
    %217 = vector.shape_cast %216 : vector<1x512x128xf32> to vector<512x128xf32>
    %cst_82 = arith.constant dense<0.000000e+00> : vector<16x128xf32>
    %218 = tpu.matmul %215, %217, %cst_82 {dimension_numbers = #tpu.dot_dimension_numbers<[1], [0], [0], [1], [0, 0, 1, 1], [], []>} : vector<16x512xf32>, vector<512x128xf32>, vector<16x128xf32> -> vector<16x128xf32>
    %219 = vector.extract_strided_slice %166 {offsets = [0, 0], sizes = [1, 128], strides = [1, 1]} : vector<8x128xf32> to vector<1x128xf32>
    %220 = vector.broadcast %219 : vector<1x128xf32> to vector<16x128xf32>
    %221 = arith.addf %218, %220 : vector<16x128xf32>
    %222 = arith.addf %164, %221 : vector<16x128xf32>
    %223 = vector.extract_strided_slice %166 {offsets = [3, 0], sizes = [1, 128], strides = [1, 1]} : vector<8x128xf32> to vector<1x128xf32>
    %224 = vector.extract_strided_slice %166 {offsets = [4, 0], sizes = [1, 128], strides = [1, 1]} : vector<8x128xf32> to vector<1x128xf32>
    %cst_83 = arith.constant dense<0.000000e+00> : vector<16xf32>
    %225 = vector.multi_reduction <add>, %222, %cst_83 [1] : vector<16x128xf32> to vector<16xf32>
    %226 = vector.shape_cast %225 : vector<16xf32> to vector<16x1xf32>
    %cst_84 = arith.constant 3.125000e-02 : f32
    %227 = vector.broadcast %cst_84 : f32 to vector<16x1xf32>
    %228 = arith.mulf %226, %227 : vector<16x1xf32>
    %229 = arith.mulf %222, %222 : vector<16x128xf32>
    %cst_85 = arith.constant dense<0.000000e+00> : vector<16xf32>
    %230 = vector.multi_reduction <add>, %229, %cst_85 [1] : vector<16x128xf32> to vector<16xf32>
    %231 = vector.shape_cast %230 : vector<16xf32> to vector<16x1xf32>
    %cst_86 = arith.constant 3.125000e-02 : f32
    %232 = vector.broadcast %cst_86 : f32 to vector<16x1xf32>
    %233 = arith.mulf %231, %232 : vector<16x1xf32>
    %234 = arith.mulf %228, %228 : vector<16x1xf32>
    %235 = arith.subf %233, %234 : vector<16x1xf32>
    %cst_87 = arith.constant 0.000000e+00 : f32
    %236 = vector.broadcast %cst_87 : f32 to vector<16x1xf32>
    %237 = arith.maximumf %235, %236 : vector<16x1xf32>
    %238 = vector.broadcast %228 : vector<16x1xf32> to vector<16x128xf32>
    %239 = arith.subf %222, %238 : vector<16x128xf32>
    %cst_88 = arith.constant 9.99999996E-13 : f32
    %240 = vector.broadcast %cst_88 : f32 to vector<16x1xf32>
    %241 = arith.addf %237, %240 : vector<16x1xf32>
    %242 = math.rsqrt %241 : vector<16x1xf32>
    %243 = vector.broadcast %242 : vector<16x1xf32> to vector<16x128xf32>
    %244 = arith.mulf %239, %243 : vector<16x128xf32>
    %245 = vector.broadcast %223 : vector<1x128xf32> to vector<16x128xf32>
    %246 = arith.mulf %244, %245 : vector<16x128xf32>
    %247 = vector.broadcast %224 : vector<1x128xf32> to vector<16x128xf32>
    %248 = arith.addf %246, %247 : vector<16x128xf32>
    %c1_89 = arith.constant 1 : index
    %c0_90 = arith.constant 0 : index
    %c0_91 = arith.constant 0 : index
    %249 = vector.load %arg5[%c1_89, %c0_90, %c0_91] : memref<2x128x128xf32, #tpu.memory_space<vmem>>, vector<1x128x128xf32>
    %250 = vector.shape_cast %249 : vector<1x128x128xf32> to vector<128x128xf32>
    %cst_92 = arith.constant dense<0.000000e+00> : vector<16x128xf32>
    %251 = tpu.matmul %248, %250, %cst_92 {dimension_numbers = #tpu.dot_dimension_numbers<[1], [0], [0], [1], [0, 0, 1, 1], [], []>} : vector<16x128xf32>, vector<128x128xf32>, vector<16x128xf32> -> vector<16x128xf32>
    %252 = vector.extract_strided_slice %166 {offsets = [1, 0], sizes = [1, 128], strides = [1, 1]} : vector<8x128xf32> to vector<1x128xf32>
    %253 = vector.broadcast %252 : vector<1x128xf32> to vector<16x128xf32>
    %254 = arith.addf %251, %253 : vector<16x128xf32>
    %cst_93 = arith.constant 5.000000e-01 : f32
    %255 = vector.broadcast %cst_93 : f32 to vector<16x128xf32>
    %256 = arith.mulf %255, %254 : vector<16x128xf32>
    %cst_94 = arith.constant 4.471500e-02 : f32
    %257 = vector.broadcast %cst_94 : f32 to vector<16x128xf32>
    %258 = arith.mulf %257, %254 : vector<16x128xf32>
    %259 = arith.mulf %258, %254 : vector<16x128xf32>
    %260 = arith.mulf %259, %254 : vector<16x128xf32>
    %261 = arith.addf %254, %260 : vector<16x128xf32>
    %cst_95 = arith.constant 0.797884583 : f32
    %262 = vector.broadcast %cst_95 : f32 to vector<16x128xf32>
    %263 = arith.mulf %262, %261 : vector<16x128xf32>
    %264 = math.tanh %263 : vector<16x128xf32>
    %cst_96 = arith.constant 1.000000e+00 : f32
    %265 = vector.broadcast %cst_96 : f32 to vector<16x128xf32>
    %266 = arith.addf %265, %264 : vector<16x128xf32>
    %267 = arith.mulf %256, %266 : vector<16x128xf32>
    %c1_97 = arith.constant 1 : index
    %c0_98 = arith.constant 0 : index
    %c0_99 = arith.constant 0 : index
    %268 = vector.load %arg6[%c1_97, %c0_98, %c0_99] : memref<2x128x128xf32, #tpu.memory_space<vmem>>, vector<1x128x128xf32>
    %269 = vector.shape_cast %268 : vector<1x128x128xf32> to vector<128x128xf32>
    %cst_100 = arith.constant dense<0.000000e+00> : vector<16x128xf32>
    %270 = tpu.matmul %267, %269, %cst_100 {dimension_numbers = #tpu.dot_dimension_numbers<[1], [0], [0], [1], [0, 0, 1, 1], [], []>} : vector<16x128xf32>, vector<128x128xf32>, vector<16x128xf32> -> vector<16x128xf32>
    %271 = vector.extract_strided_slice %166 {offsets = [2, 0], sizes = [1, 128], strides = [1, 1]} : vector<8x128xf32> to vector<1x128xf32>
    %272 = vector.broadcast %271 : vector<1x128xf32> to vector<16x128xf32>
    %273 = arith.addf %270, %272 : vector<16x128xf32>
    %274 = arith.addf %248, %273 : vector<16x128xf32>
    %275 = vector.extract_strided_slice %166 {offsets = [5, 0], sizes = [1, 128], strides = [1, 1]} : vector<8x128xf32> to vector<1x128xf32>
    %276 = vector.extract_strided_slice %166 {offsets = [6, 0], sizes = [1, 128], strides = [1, 1]} : vector<8x128xf32> to vector<1x128xf32>
    %cst_101 = arith.constant dense<0.000000e+00> : vector<16xf32>
    %277 = vector.multi_reduction <add>, %274, %cst_101 [1] : vector<16x128xf32> to vector<16xf32>
    %278 = vector.shape_cast %277 : vector<16xf32> to vector<16x1xf32>
    %cst_102 = arith.constant 3.125000e-02 : f32
    %279 = vector.broadcast %cst_102 : f32 to vector<16x1xf32>
    %280 = arith.mulf %278, %279 : vector<16x1xf32>
    %281 = arith.mulf %274, %274 : vector<16x128xf32>
    %cst_103 = arith.constant dense<0.000000e+00> : vector<16xf32>
    %282 = vector.multi_reduction <add>, %281, %cst_103 [1] : vector<16x128xf32> to vector<16xf32>
    %283 = vector.shape_cast %282 : vector<16xf32> to vector<16x1xf32>
    %cst_104 = arith.constant 3.125000e-02 : f32
    %284 = vector.broadcast %cst_104 : f32 to vector<16x1xf32>
    %285 = arith.mulf %283, %284 : vector<16x1xf32>
    %286 = arith.mulf %280, %280 : vector<16x1xf32>
    %287 = arith.subf %285, %286 : vector<16x1xf32>
    %cst_105 = arith.constant 0.000000e+00 : f32
    %288 = vector.broadcast %cst_105 : f32 to vector<16x1xf32>
    %289 = arith.maximumf %287, %288 : vector<16x1xf32>
    %290 = vector.broadcast %280 : vector<16x1xf32> to vector<16x128xf32>
    %291 = arith.subf %274, %290 : vector<16x128xf32>
    %cst_106 = arith.constant 9.99999996E-13 : f32
    %292 = vector.broadcast %cst_106 : f32 to vector<16x1xf32>
    %293 = arith.addf %289, %292 : vector<16x1xf32>
    %294 = math.rsqrt %293 : vector<16x1xf32>
    %295 = vector.broadcast %294 : vector<16x1xf32> to vector<16x128xf32>
    %296 = arith.mulf %291, %295 : vector<16x128xf32>
    %297 = vector.broadcast %275 : vector<1x128xf32> to vector<16x128xf32>
    %298 = arith.mulf %296, %297 : vector<16x128xf32>
    %299 = vector.broadcast %276 : vector<1x128xf32> to vector<16x128xf32>
    %300 = arith.addf %298, %299 : vector<16x128xf32>
    %301 = vector.extract_strided_slice %300 {offsets = [0, 0], sizes = [1, 128], strides = [1, 1]} : vector<16x128xf32> to vector<1x128xf32>
    %302 = vector.extract_strided_slice %300 {offsets = [8, 0], sizes = [1, 128], strides = [1, 1]} : vector<16x128xf32> to vector<1x128xf32>
    %303 = tpu.concatenate %301, %302 in 0 : vector<1x128xf32>, vector<1x128xf32> -> vector<2x128xf32>
    %c0_107 = arith.constant 0 : index
    %c0_108 = arith.constant 0 : index
    %c0_109 = arith.constant 0 : index
    %304 = vector.load %arg8[%c0_107, %c0_108, %c0_109] : memref<2x128x128xf32, #tpu.memory_space<vmem>>, vector<1x128x128xf32>
    %305 = vector.shape_cast %304 : vector<1x128x128xf32> to vector<128x128xf32>
    %cst_110 = arith.constant dense<0.000000e+00> : vector<2x128xf32>
    %306 = tpu.matmul %303, %305, %cst_110 {dimension_numbers = #tpu.dot_dimension_numbers<[1], [0], [0], [1], [0, 0, 1, 1], [], []>} : vector<2x128xf32>, vector<128x128xf32>, vector<2x128xf32> -> vector<2x128xf32>
    %307 = vector.extract_strided_slice %1 {offsets = [2, 0], sizes = [1, 128], strides = [1, 1]} : vector<8x128xf32> to vector<1x128xf32>
    %308 = vector.broadcast %307 : vector<1x128xf32> to vector<2x128xf32>
    %309 = arith.addf %306, %308 : vector<2x128xf32>
    %310 = math.tanh %309 : vector<2x128xf32>
    %c1_111 = arith.constant 1 : index
    %c0_112 = arith.constant 0 : index
    %c0_113 = arith.constant 0 : index
    %311 = vector.load %arg8[%c1_111, %c0_112, %c0_113] : memref<2x128x128xf32, #tpu.memory_space<vmem>>, vector<1x128x128xf32>
    %312 = vector.shape_cast %311 : vector<1x128x128xf32> to vector<128x128xf32>
    %cst_114 = arith.constant dense<0.000000e+00> : vector<2x128xf32>
    %313 = tpu.matmul %310, %312, %cst_114 {dimension_numbers = #tpu.dot_dimension_numbers<[1], [0], [0], [1], [0, 0, 1, 1], [], []>} : vector<2x128xf32>, vector<128x128xf32>, vector<2x128xf32> -> vector<2x128xf32>
    %314 = vector.extract_strided_slice %1 {offsets = [3, 0], sizes = [1, 128], strides = [1, 1]} : vector<8x128xf32> to vector<1x128xf32>
    %315 = vector.broadcast %314 : vector<1x128xf32> to vector<2x128xf32>
    %316 = arith.addf %313, %315 : vector<2x128xf32>
    %c0_115 = arith.constant 0 : index
    %c0_116 = arith.constant 0 : index
    %317 = vector.load %arg10[%c0_115, %c0_116] : memref<2x128xf32, #tpu.memory_space<vmem>>, vector<2x128xf32>
    tpu.vector_store %arg10[%c0_115, %c0_116], %316 {strides = array<i32>} : memref<2x128xf32, #tpu.memory_space<vmem>>, vector<2x128xf32>,
    return
  }
}

</mosaic_0001>

<llo_original>
// kernel: default_model_forward.1
$region0: #{default_model_forward.1}
  #allocation0 [shape = 'u32[]', space=smem, size = 0x4, offset = 0x4, fixed_abs, tag = 'smem constant byte address 0x4 - core index']
  #allocation1 [shape = 'u32[144,128]{1,0:T(1,128)}', space=vmem, size = 0x12000, scoped, tag = 'internal scratch']
  %s0 = inlined_call_operand.vmem [shape: f32[16,128], index: 0, kind: input, shape index: {}]
  %s1 = inlined_call_operand.vmem [shape: f32[64,16], index: 1, kind: input, shape index: {}]
  %s2 = inlined_call_operand.hbm [shape: f32[2,128,1536], index: 2, kind: input, shape index: {}]
  %s3 = inlined_call_operand.hbm [shape: f32[2,1,1536], index: 3, kind: input, shape index: {}]
  %s4 = inlined_call_operand.hbm [shape: f32[2,512,128], index: 4, kind: input, shape index: {}]
  %s5 = inlined_call_operand.hbm [shape: f32[2,128,128], index: 5, kind: input, shape index: {}]
  %s6 = inlined_call_operand.hbm [shape: f32[2,128,128], index: 6, kind: input, shape index: {}]
  %s7 = inlined_call_operand.hbm [shape: f32[2,8,128], index: 7, kind: input, shape index: {}]
  %s8 = inlined_call_operand.hbm [shape: f32[2,128,128], index: 8, kind: input, shape index: {}]
  %s9 = inlined_call_operand.hbm [shape: f32[8,128], index: 9, kind: input, shape index: {}]
  %s10 = inlined_call_operand.hbm [shape: f32[2,128], index: 10, kind: output, shape index: {}]
  %s11 = sld [smem:[#allocation0]]
  $region82: #{default_model_forward.1} parent=0
    _
  %s13 = ssub.s32 1, %s11
  %s14 = scalar_select 0, %s13, %s11
  $region1: #{default_model_forward.1} parent=0
    #allocation2 [shape = 'u8[1572864]{0}', space=vmem, size = 0x180000, scoped, tag = 'input window, operand 2, single buffered']
    #allocation3 [shape = 's32[1]{0}', space=sflag, size = 0x4, scoped, tag = 'scoped memory for default_model_forward.1']
    #allocation4 [shape = 's32[1]{0}', space=sflag, size = 0x4, scoped, tag = 'scoped memory for default_model_forward.1']
    #allocation5 [shape = 'u8[12288]{0}', space=vmem, size = 0x3000, scoped, tag = 'input window, operand 3, single buffered']
    #allocation6 [shape = 's32[1]{0}', space=sflag, size = 0x4, scoped, tag = 'scoped memory for default_model_forward.1']
    #allocation7 [shape = 'u8[524288]{0}', space=vmem, size = 0x80000, scoped, tag = 'input window, operand 4, single buffered']
    #allocation8 [shape = 'u8[131072]{0}', space=vmem, size = 0x20000, scoped, tag = 'input window, operand 5, single buffered']
    #allocation9 [shape = 's32[1]{0}', space=sflag, size = 0x4, scoped, tag = 'scoped memory for default_model_forward.1']
    #allocation10 [shape = 'u8[131072]{0}', space=vmem, size = 0x20000, scoped, tag = 'input window, operand 6, single buffered']
    #allocation11 [shape = 'u8[8192]{0}', space=vmem, size = 0x2000, scoped, tag = 'input window, operand 7, single buffered']
    #allocation12 [shape = 's32[1]{0}', space=sflag, size = 0x4, scoped, tag = 'scoped memory for default_model_forward.1']
    #allocation13 [shape = 'u8[131072]{0}', space=vmem, size = 0x20000, scoped, tag = 'input window, operand 8, single buffered']
    #allocation14 [shape = 'u8[4096]{0}', space=vmem, size = 0x1000, scoped, tag = 'input window, operand 9, single buffered']
    #allocation15 [shape = 's32[1]{0}', space=sflag, size = 0x4, scoped, tag = 'scoped memory for default_model_forward.1']
    #allocation16 [shape = 'u8[1024]{0}', space=vmem, size = 0x400, scoped, tag = 'output window, operand 0, single buffered']
    %15 = vsyncpa [#allocation3], 0
    %16 = vsyncpa [#allocation6], 0
    %17 = vsyncpa [#allocation9], 0
    %18 = vsyncpa [#allocation12], 0
    %19 = vsyncpa [#allocation15], 0
    %20 = vsyncpa [#allocation4], 0
    // Predicated region
    $region2: #{default_model_forward.1} parent=1 // pred_check
      _
    $region3: #{default_model_forward.1} parent=1 // pred_check_branch
      %22 = sbr.rel (0) target = $region5
    $region4: #{default_model_forward.1} parent=1 // pred_region
      _
    $region5: #{default_model_forward.1} parent=1 // pred_fallthru
      _
    // Predicated region
    $region6: #{default_model_forward.1} parent=1 // pred_check
      _
    $region7: #{default_model_forward.1} parent=1 // pred_check_branch
      %24 = sbr.rel (0) target = $region9
    $region8: #{default_model_forward.1} parent=1 // pred_region
      _
    $region9: #{default_model_forward.1} parent=1 // pred_fallthru
      _
    // Predicated region
    $region10: #{default_model_forward.1} parent=1 // pred_check
      _
    $region11: #{default_model_forward.1} parent=1 // pred_check_branch
      %26 = sbr.rel (0) target = $region13
    $region12: #{default_model_forward.1} parent=1 // pred_region
      %s28 = ssub.s32 49152, 49152
      %29 = vsyncadd [#allocation3], %s28
      %s30 = sshll.u32 [#allocation2], 4
      %s31 = int_to_ptr.vmem [resolvable:$true] %s30
      %36 = dma.hbm_to_vmem [thread:$0]  %s2, 49152, %s31, [#allocation3], 1536, 1536, 96
    $region13: #{default_model_forward.1} parent=1 // pred_fallthru
      _
    // Predicated region
    $region14: #{default_model_forward.1} parent=1 // pred_check
      _
    $region15: #{default_model_forward.1} parent=1 // pred_check_branch
      %38 = sbr.rel (0) target = $region17
    $region16: #{default_model_forward.1} parent=1 // pred_region
      %s40 = ssub.s32 384, 384
      %41 = vsyncadd [#allocation6], %s40
      %s42 = sshll.u32 [#allocation5], 4
      %s43 = int_to_ptr.vmem [resolvable:$true] %s42
      %48 = dma.hbm_to_vmem [thread:$0]  %s3, 384, %s43, [#allocation6], 192, 192, 12
    $region17: #{default_model_forward.1} parent=1 // pred_fallthru
      _
    // Predicated region
    $region18: #{default_model_forward.1} parent=1 // pred_check
      _
    $region19: #{default_model_forward.1} parent=1 // pred_check_branch
      %50 = sbr.rel (0) target = $region21
    $region20: #{default_model_forward.1} parent=1 // pred_region
      %s52 = ssub.s32 16384, 16384
      %53 = vsyncadd [#allocation6], %s52
      %s54 = sshll.u32 [#allocation7], 4
      %s55 = int_to_ptr.vmem [resolvable:$true] %s54
      %60 = dma.hbm_to_vmem [thread:$0]  %s4, 16384, %s55, [#allocation6], 128, 128, 8
    $region21: #{default_model_forward.1} parent=1 // pred_fallthru
      _
    // Predicated region
    $region22: #{default_model_forward.1} parent=1 // pred_check
      _
    $region23: #{default_model_forward.1} parent=1 // pred_check_branch
      %62 = sbr.rel (0) target = $region25
    $region24: #{default_model_forward.1} parent=1 // pred_region
      %s64 = ssub.s32 4096, 4096
      %65 = vsyncadd [#allocation9], %s64
      %s66 = sshll.u32 [#allocation8], 4
      %s67 = int_to_ptr.vmem [resolvable:$true] %s66
      %72 = dma.hbm_to_vmem [thread:$0]  %s5, 4096, %s67, [#allocation9], 128, 128, 8
    $region25: #{default_model_forward.1} parent=1 // pred_fallthru
      _
    // Predicated region
    $region26: #{default_model_forward.1} parent=1 // pred_check
      _
    $region27: #{default_model_forward.1} parent=1 // pred_check_branch
      %74 = sbr.rel (0) target = $region29
    $region28: #{default_model_forward.1} parent=1 // pred_region
      %s76 = ssub.s32 4096, 4096
      %77 = vsyncadd [#allocation9], %s76
      %s78 = sshll.u32 [#allocation10], 4
      %s79 = int_to_ptr.vmem [resolvable:$true] %s78
      %84 = dma.hbm_to_vmem [thread:$0]  %s6, 4096, %s79, [#allocation9], 128, 128, 8
    $region29: #{default_model_forward.1} parent=1 // pred_fallthru
      _
    // Predicated region
    $region30: #{default_model_forward.1} parent=1 // pred_check
      _
    $region31: #{default_model_forward.1} parent=1 // pred_check_branch
      %86 = sbr.rel (0) target = $region33
    $region32: #{default_model_forward.1} parent=1 // pred_region
      %s88 = ssub.s32 256, 256
      %89 = vsyncadd [#allocation12], %s88
      %s90 = sshll.u32 [#allocation11], 4
      %s91 = int_to_ptr.vmem [resolvable:$true] %s90
      %96 = dma.hbm_to_vmem [thread:$0]  %s7, 256, %s91, [#allocation12], 128, 128, 8
    $region33: #{default_model_forward.1} parent=1 // pred_fallthru
      _
    // Predicated region
    $region34: #{default_model_forward.1} parent=1 // pred_check
      _
    $region35: #{default_model_forward.1} parent=1 // pred_check_branch
      %98 = sbr.rel (0) target = $region37
    $region36: #{default_model_forward.1} parent=1 // pred_region
      %s100 = ssub.s32 4096, 4096
      %101 = vsyncadd [#allocation12], %s100
      %s102 = sshll.u32 [#allocation13], 4
      %s103 = int_to_ptr.vmem [resolvable:$true] %s102
      %108 = dma.hbm_to_vmem [thread:$0]  %s8, 4096, %s103, [#allocation12], 128, 128, 8
    $region37: #{default_model_forward.1} parent=1 // pred_fallthru
      _
    // Predicated region
    $region38: #{default_model_forward.1} parent=1 // pred_check
      _
    $region39: #{default_model_forward.1} parent=1 // pred_check_branch
      %110 = sbr.rel (0) target = $region41
    $region40: #{default_model_forward.1} parent=1 // pred_region
      %s112 = ssub.s32 128, 128
      %113 = vsyncadd [#allocation15], %s112
      %s115 = sshll.u32 [#allocation14], 4
      %s116 = int_to_ptr.vmem [resolvable:$true] %s115
      %118 = dma.hbm_to_vmem [thread:$0]  %s9, 128, %s116, [#allocation15]
    $region41: #{default_model_forward.1} parent=1 // pred_fallthru
      _
    // Predicated region
    $region42: #{default_model_forward.1} parent=1 // pred_check
      _
    $region43: #{default_model_forward.1} parent=1 // pred_check_branch
      %120 = sbr.rel (0) target = $region45
    $region44: #{default_model_forward.1} parent=1 // pred_region
      %121 = dma.done [#allocation3], 49152
    $region45: #{default_model_forward.1} parent=1 // pred_fallthru
      _
    // Predicated region
    $region46: #{default_model_forward.1} parent=1 // pred_check
      _
    $region47: #{default_model_forward.1} parent=1 // pred_check_branch
      %123 = sbr.rel (0) target = $region49
    $region48: #{default_model_forward.1} parent=1 // pred_region
      %124 = dma.done [#allocation6], 384
    $region49: #{default_model_forward.1} parent=1 // pred_fallthru
      _
    // Predicated region
    $region50: #{default_model_forward.1} parent=1 // pred_check
      _
    $region51: #{default_model_forward.1} parent=1 // pred_check_branch
      %126 = sbr.rel (0) target = $region53
    $region52: #{default_model_forward.1} parent=1 // pred_region
      %127 = dma.done [#allocation6], 16384
    $region53: #{default_model_forward.1} parent=1 // pred_fallthru
      _
    // Predicated region
    $region54: #{default_model_forward.1} parent=1 // pred_check
      _
    $region55: #{default_model_forward.1} parent=1 // pred_check_branch
      %129 = sbr.rel (0) target = $region57
    $region56: #{default_model_forward.1} parent=1 // pred_region
      %130 = dma.done [#allocation9], 4096
    $region57: #{default_model_forward.1} parent=1 // pred_fallthru
      _
    // Predicated region
    $region58: #{default_model_forward.1} parent=1 // pred_check
      _
    $region59: #{default_model_forward.1} parent=1 // pred_check_branch
      %132 = sbr.rel (0) target = $region61
    $region60: #{default_model_forward.1} parent=1 // pred_region
      %133 = dma.done [#allocation9], 4096
    $region61: #{default_model_forward.1} parent=1 // pred_fallthru
      _
    // Predicated region
    $region62: #{default_model_forward.1} parent=1 // pred_check
      _
    $region63: #{default_model_forward.1} parent=1 // pred_check_branch
      %135 = sbr.rel (0) target = $region65
    $region64: #{default_model_forward.1} parent=1 // pred_region
      %136 = dma.done [#allocation12], 256
    $region65: #{default_model_forward.1} parent=1 // pred_fallthru
      _
    // Predicated region
    $region66: #{default_model_forward.1} parent=1 // pred_check
      _
    $region67: #{default_model_forward.1} parent=1 // pred_check_branch
      %138 = sbr.rel (0) target = $region69
    $region68: #{default_model_forward.1} parent=1 // pred_region
      %139 = dma.done [#allocation12], 4096
    $region69: #{default_model_forward.1} parent=1 // pred_fallthru
      _
    // Predicated region
    $region70: #{default_model_forward.1} parent=1 // pred_check
      _
    $region71: #{default_model_forward.1} parent=1 // pred_check_branch
      %141 = sbr.rel (0) target = $region73
    $region72: #{default_model_forward.1} parent=1 // pred_region
      %142 = dma.done [#allocation15], 128
    $region73: #{default_model_forward.1} parent=1 // pred_fallthru
      _
    %v143 = vld [vmem:[%s0] sm:$0xff]
    %v144 = vld [vmem:[%s0 + $0x8] sm:$0xff]
    %v145 = vld [vmem:[#allocation14] sm:$0xff]
    %v146 = vld [vmem:[%s1] sm:$0xff]
    %v147 = vld [vmem:[%s1 + $0x8] sm:$0xff]
    %v148 = vld [vmem:[%s1 + $0x10] sm:$0xff]
    %v149 = vld [vmem:[%s1 + $0x18] sm:$0xff]
    %v150 = vld [vmem:[%s1 + $0x20] sm:$0xff]
    %v151 = vld [vmem:[%s1 + $0x28] sm:$0xff]
    %v152 = vld [vmem:[%s1 + $0x30] sm:$0xff]
    %v153 = vld [vmem:[%s1 + $0x38] sm:$0xff]
    %154 = vadd.xlane.f32.xlu0 %v143
    %v155 = vpop.xlane.xlu0 %154
    %156 = vadd.xlane.f32.xlu0 %v144
    %v157 = vpop.xlane.xlu0 %156
    %v158 = vmul.f32 %v155, 0.03125
    %v159 = vmul.f32 %v157, 0.03125
    %v160 = vmul.f32 %v143, %v143
    %v161 = vmul.f32 %v144, %v144
    %162 = vadd.xlane.f32.xlu0 %v160
    %v163 = vpop.xlane.xlu0 %162
    %164 = vadd.xlane.f32.xlu0 %v161
    %v165 = vpop.xlane.xlu0 %164
    %v166 = vmul.f32 %v163, 0.03125
    %v167 = vmul.f32 %v165, 0.03125
    %v168 = vmul.f32 %v158, %v158
    %v169 = vmul.f32 %v159, %v159
    %v170 = vsub.f32 %v166, %v168
    %v171 = vsub.f32 %v167, %v169
    %v172 = vmax.f32 %v170, 0.0
    %v173 = vmax.f32 %v171, 0.0
    %v174 = vsub.f32 %v143, %v158
    %v175 = vsub.f32 %v144, %v159
    %v176 = vadd.f32 %v172, 1e-12
    %v177 = vadd.f32 %v173, 1e-12
    %v178 = vrsqrt.pop %v176
    %v179 = vrsqrt.pop %v177
    %v180 = vmul.f32 %v174, %v178
    %v181 = vmul.f32 %v175, %v179
    %v182 = vlaneseq
    %v183 = vshrl.u32 %v182, 7
    %v184 = vsub.s32 0, %v183
    %v185 = vrot.slane %v145, %v184
    %v186 = vmul.f32 %v180, %v185
    %v187 = vmul.f32 %v181, %v185
    %v188 = vlaneseq
    %v189 = vshrl.u32 %v188, 7
    %v190 = vsub.s32 1, %v189
    %v191 = vrot.slane %v145, %v190
    %v192 = vadd.f32 %v186, %v191
    %v193 = vadd.f32 %v187, %v191
    %v194 = vld [vmem:[#allocation11] sm:$0xff]
    %v195 = vld [vmem:[#allocation2] sm:$0xff]
    %v196 = vld [vmem:[#allocation2 + $0x8] sm:$0xff]
    %v197 = vld [vmem:[#allocation2 + $0x10] sm:$0xff]
    %v198 = vld [vmem:[#allocation2 + $0x18] sm:$0xff]
    %v199 = vld [vmem:[#allocation2 + $0x20] sm:$0xff]
    %v200 = vld [vmem:[#allocation2 + $0x28] sm:$0xff]
    %v201 = vld [vmem:[#allocation2 + $0x30] sm:$0xff]
    %v202 = vld [vmem:[#allocation2 + $0x38] sm:$0xff]
    %v203 = vld [vmem:[#allocation2 + $0x40] sm:$0xff]
    %v204 = vld [vmem:[#allocation2 + $0x48] sm:$0xff]
    %v205 = vld [vmem:[#allocation2 + $0x50] sm:$0xff]
    %v206 = vld [vmem:[#allocation2 + $0x58] sm:$0xff]
    %v207 = vld [vmem:[#allocation2 + $0x60] sm:$0xff]
    %v208 = vld [vmem:[#allocation2 + $0x68] sm:$0xff]
    %v209 = vld [vmem:[#allocation2 + $0x70] sm:$0xff]
    %v210 = vld [vmem:[#allocation2 + $0x78] sm:$0xff]
    %v211 = vld [vmem:[#allocation2 + $0x80] sm:$0xff]
    %v212 = vld [vmem:[#allocation2 + $0x88] sm:$0xff]
    %v213 = vld [vmem:[#allocation2 + $0x90] sm:$0xff]
    %v214 = vld [vmem:[#allocation2 + $0x98] sm:$0xff]
    %v215 = vld [vmem:[#allocation2 + $0xa0] sm:$0xff]
    %v216 = vld [vmem:[#allocation2 + $0xa8] sm:$0xff]
    %v217 = vld [vmem:[#allocation2 + $0xb0] sm:$0xff]
    %v218 = vld [vmem:[#allocation2 + $0xb8] sm:$0xff]
    %v219 = vld [vmem:[#allocation2 + $0xc0] sm:$0xff]
    %v220 = vld [vmem:[#allocation2 + $0xc8] sm:$0xff]
    %v221 = vld [vmem:[#allocation2 + $0xd0] sm:$0xff]
    %v222 = vld [vmem:[#allocation2 + $0xd8] sm:$0xff]
    %v223 = vld [vmem:[#allocation2 + $0xe0] sm:$0xff]
    %v224 = vld [vmem:[#allocation2 + $0xe8] sm:$0xff]
    %v225 = vld [vmem:[#allocation2 + $0xf0] sm:$0xff]
    %v226 = vld [vmem:[#allocation2 + $0xf8] sm:$0xff]
    %v227 = vld [vmem:[#allocation2 + $0x100] sm:$0xff]
    %v228 = vld [vmem:[#allocation2 + $0x108] sm:$0xff]
    %v229 = vld [vmem:[#allocation2 + $0x110] sm:$0xff]
    %v230 = vld [vmem:[#allocation2 + $0x118] sm:$0xff]
    %v231 = vld [vmem:[#allocation2 + $0x120] sm:$0xff]
    %v232 = vld [vmem:[#allocation2 + $0x128] sm:$0xff]
    %v233 = vld [vmem:[#allocation2 + $0x130] sm:$0xff]
    %v234 = vld [vmem:[#allocation2 + $0x138] sm:$0xff]
    %v235 = vld [vmem:[#allocation2 + $0x140] sm:$0xff]
    %v236 = vld [vmem:[#allocation2 + $0x148] sm:$0xff]
    %v237 = vld [vmem:[#allocation2 + $0x150] sm:$0xff]
    %v238 = vld [vmem:[#allocation2 + $0x158] sm:$0xff]
    %v239 = vld [vmem:[#allocation2 + $0x160] sm:$0xff]
    %v240 = vld [vmem:[#allocation2 + $0x168] sm:$0xff]
    %v241 = vld [vmem:[#allocation2 + $0x170] sm:$0xff]
    %v242 = vld [vmem:[#allocation2 + $0x178] sm:$0xff]
    %v243 = vld [vmem:[#allocation2 + $0x180] sm:$0xff]
    %v244 = vld [vmem:[#allocation2 + $0x188] sm:$0xff]
    %v245 = vld [vmem:[#allocation2 + $0x190] sm:$0xff]
    %v246 = vld [vmem:[#allocation2 + $0x198] sm:$0xff]
    %v247 = vld [vmem:[#allocation2 + $0x1a0] sm:$0xff]
    %v248 = vld [vmem:[#allocation2 + $0x1a8] sm:$0xff]
    %v249 = vld [vmem:[#allocation2 + $0x1b0] sm:$0xff]
    %v250 = vld [vmem:[#allocation2 + $0x1b8] sm:$0xff]
    %v251 = vld [vmem:[#allocation2 + $0x1c0] sm:$0xff]
    %v252 = vld [vmem:[#allocation2 + $0x1c8] sm:$0xff]
    %v253 = vld [vmem:[#allocation2 + $0x1d0] sm:$0xff]
    %v254 = vld [vmem:[#allocation2 + $0x1d8] sm:$0xff]
    %v255 = vld [vmem:[#allocation2 + $0x1e0] sm:$0xff]
    %v256 = vld [vmem:[#allocation2 + $0x1e8] sm:$0xff]
    %v257 = vld [vmem:[#allocation2 + $0x1f0] sm:$0xff]
    %v258 = vld [vmem:[#allocation2 + $0x1f8] sm:$0xff]
    %v259 = vld [vmem:[#allocation2 + $0x200] sm:$0xff]
    %v260 = vld [vmem:[#allocation2 + $0x208] sm:$0xff]
    %v261 = vld [vmem:[#allocation2 + $0x210] sm:$0xff]
    %v262 = vld [vmem:[#allocation2 + $0x218] sm:$0xff]
    %v263 = vld [vmem:[#allocation2 + $0x220] sm:$0xff]
    %v264 = vld [vmem:[#allocation2 + $0x228] sm:$0xff]
    %v265 = vld [vmem:[#allocation2 + $0x230] sm:$0xff]
    %v266 = vld [vmem:[#allocation2 + $0x238] sm:$0xff]
    %v267 = vld [vmem:[#allocation2 + $0x240] sm:$0xff]
    %v268 = vld [vmem:[#allocation2 + $0x248] sm:$0xff]
    %v269 = vld [vmem:[#allocation2 + $0x250] sm:$0xff]
    %v270 = vld [vmem:[#allocation2 + $0x258] sm:$0xff]
    %v271 = vld [vmem:[#allocation2 + $0x260] sm:$0xff]
    %v272 = vld [vmem:[#allocation2 + $0x268] sm:$0xff]
    %v273 = vld [vmem:[#allocation2 + $0x270] sm:$0xff]
    %v274 = vld [vmem:[#allocation2 + $0x278] sm:$0xff]
    %v275 = vld [vmem:[#allocation2 + $0x280] sm:$0xff]
    %v276 = vld [vmem:[#allocation2 + $0x288] sm:$0xff]
    %v277 = vld [vmem:[#allocation2 + $0x290] sm:$0xff]
    %v278 = vld [vmem:[#allocation2 + $0x298] sm:$0xff]
    %v279 = vld [vmem:[#allocation2 + $0x2a0] sm:$0xff]
    %v280 = vld [vmem:[#allocation2 + $0x2a8] sm:$0xff]
    %v281 = vld [vmem:[#allocation2 + $0x2b0] sm:$0xff]
    %v282 = vld [vmem:[#allocation2 + $0x2b8] sm:$0xff]
    %v283 = vld [vmem:[#allocation2 + $0x2c0] sm:$0xff]
    %v284 = vld [vmem:[#allocation2 + $0x2c8] sm:$0xff]
    %v285 = vld [vmem:[#allocation2 + $0x2d0] sm:$0xff]
    %v286 = vld [vmem:[#allocation2 + $0x2d8] sm:$0xff]
    %v287 = vld [vmem:[#allocation2 + $0x2e0] sm:$0xff]
    %v288 = vld [vmem:[#allocation2 + $0x2e8] sm:$0xff]
    %v289 = vld [vmem:[#allocation2 + $0x2f0] sm:$0xff]
    %v290 = vld [vmem:[#allocation2 + $0x2f8] sm:$0xff]
    %v291 = vld [vmem:[#allocation2 + $0x300] sm:$0xff]
    %v292 = vld [vmem:[#allocation2 + $0x308] sm:$0xff]
    %v293 = vld [vmem:[#allocation2 + $0x310] sm:$0xff]
    %v294 = vld [vmem:[#allocation2 + $0x318] sm:$0xff]
    %v295 = vld [vmem:[#allocation2 + $0x320] sm:$0xff]
    %v296 = vld [vmem:[#allocation2 + $0x328] sm:$0xff]
    %v297 = vld [vmem:[#allocation2 + $0x330] sm:$0xff]
    %v298 = vld [vmem:[#allocation2 + $0x338] sm:$0xff]
    %v299 = vld [vmem:[#allocation2 + $0x340] sm:$0xff]
    %v300 = vld [vmem:[#allocation2 + $0x348] sm:$0xff]
    %v301 = vld [vmem:[#allocation2 + $0x350] sm:$0xff]
    %v302 = vld [vmem:[#allocation2 + $0x358] sm:$0xff]
    %v303 = vld [vmem:[#allocation2 + $0x360] sm:$0xff]
    %v304 = vld [vmem:[#allocation2 + $0x368] sm:$0xff]
    %v305 = vld [vmem:[#allocation2 + $0x370] sm:$0xff]
    %v306 = vld [vmem:[#allocation2 + $0x378] sm:$0xff]
    %v307 = vld [vmem:[#allocation2 + $0x380] sm:$0xff]
    %v308 = vld [vmem:[#allocation2 + $0x388] sm:$0xff]
    %v309 = vld [vmem:[#allocation2 + $0x390] sm:$0xff]
    %v310 = vld [vmem:[#allocation2 + $0x398] sm:$0xff]
    %v311 = vld [vmem:[#allocation2 + $0x3a0] sm:$0xff]
    %v312 = vld [vmem:[#allocation2 + $0x3a8] sm:$0xff]
    %v313 = vld [vmem:[#allocation2 + $0x3b0] sm:$0xff]
    %v314 = vld [vmem:[#allocation2 + $0x3b8] sm:$0xff]
    %v315 = vld [vmem:[#allocation2 + $0x3c0] sm:$0xff]
    %v316 = vld [vmem:[#allocation2 + $0x3c8] sm:$0xff]
    %v317 = vld [vmem:[#allocation2 + $0x3d0] sm:$0xff]
    %v318 = vld [vmem:[#allocation2 + $0x3d8] sm:$0xff]
    %v319 = vld [vmem:[#allocation2 + $0x3e0] sm:$0xff]
    %v320 = vld [vmem:[#allocation2 + $0x3e8] sm:$0xff]
    %v321 = vld [vmem:[#allocation2 + $0x3f0] sm:$0xff]
    %v322 = vld [vmem:[#allocation2 + $0x3f8] sm:$0xff]
    %v323 = vld [vmem:[#allocation2 + $0x400] sm:$0xff]
    %v324 = vld [vmem:[#allocation2 + $0x408] sm:$0xff]
    %v325 = vld [vmem:[#allocation2 + $0x410] sm:$0xff]
    %v326 = vld [vmem:[#allocation2 + $0x418] sm:$0xff]
    %v327 = vld [vmem:[#allocation2 + $0x420] sm:$0xff]
    %v328 = vld [vmem:[#allocation2 + $0x428] sm:$0xff]
    %v329 = vld [vmem:[#allocation2 + $0x430] sm:$0xff]
    %v330 = vld [vmem:[#allocation2 + $0x438] sm:$0xff]
    %v331 = vld [vmem:[#allocation2 + $0x440] sm:$0xff]
    %v332 = vld [vmem:[#allocation2 + $0x448] sm:$0xff]
    %v333 = vld [vmem:[#allocation2 + $0x450] sm:$0xff]
    %v334 = vld [vmem:[#allocation2 + $0x458] sm:$0xff]
    %v335 = vld [vmem:[#allocation2 + $0x460] sm:$0xff]
    %v336 = vld [vmem:[#allocation2 + $0x468] sm:$0xff]
    %v337 = vld [vmem:[#allocation2 + $0x470] sm:$0xff]
    %v338 = vld [vmem:[#allocation2 + $0x478] sm:$0xff]
    %v339 = vld [vmem:[#allocation2 + $0x480] sm:$0xff]
    %v340 = vld [vmem:[#allocation2 + $0x488] sm:$0xff]
    %v341 = vld [vmem:[#allocation2 + $0x490] sm:$0xff]
    %v342 = vld [vmem:[#allocation2 + $0x498] sm:$0xff]
    %v343 = vld [vmem:[#allocation2 + $0x4a0] sm:$0xff]
    %v344 = vld [vmem:[#allocation2 + $0x4a8] sm:$0xff]
    %v345 = vld [vmem:[#allocation2 + $0x4b0] sm:$0xff]
    %v346 = vld [vmem:[#allocation2 + $0x4b8] sm:$0xff]
    %v347 = vld [vmem:[#allocation2 + $0x4c0] sm:$0xff]
    %v348 = vld [vmem:[#allocation2 + $0x4c8] sm:$0xff]
    %v349 = vld [vmem:[#allocation2 + $0x4d0] sm:$0xff]
    %v350 = vld [vmem:[#allocation2 + $0x4d8] sm:$0xff]
    %v351 = vld [vmem:[#allocation2 + $0x4e0] sm:$0xff]
    %v352 = vld [vmem:[#allocation2 + $0x4e8] sm:$0xff]
    %v353 = vld [vmem:[#allocation2 + $0x4f0] sm:$0xff]
    %v354 = vld [vmem:[#allocation2 + $0x4f8] sm:$0xff]
    %v355 = vld [vmem:[#allocation2 + $0x500] sm:$0xff]
    %v356 = vld [vmem:[#allocation2 + $0x508] sm:$0xff]
    %v357 = vld [vmem:[#allocation2 + $0x510] sm:$0xff]
    %v358 = vld [vmem:[#allocation2 + $0x518] sm:$0xff]
    %v359 = vld [vmem:[#allocation2 + $0x520] sm:$0xff]
    %v360 = vld [vmem:[#allocation2 + $0x528] sm:$0xff]
    %v361 = vld [vmem:[#allocation2 + $0x530] sm:$0xff]
    %v362 = vld [vmem:[#allocation2 + $0x538] sm:$0xff]
    %v363 = vld [vmem:[#allocation2 + $0x540] sm:$0xff]
    %v364 = vld [vmem:[#allocation2 + $0x548] sm:$0xff]
    %v365 = vld [vmem:[#allocation2 + $0x550] sm:$0xff]
    %v366 = vld [vmem:[#allocation2 + $0x558] sm:$0xff]
    %v367 = vld [vmem:[#allocation2 + $0x560] sm:$0xff]
    %v368 = vld [vmem:[#allocation2 + $0x568] sm:$0xff]
    %v369 = vld [vmem:[#allocation2 + $0x570] sm:$0xff]
    %v370 = vld [vmem:[#allocation2 + $0x578] sm:$0xff]
    %v371 = vld [vmem:[#allocation2 + $0x580] sm:$0xff]
    %v372 = vld [vmem:[#allocation2 + $0x588] sm:$0xff]
    %v373 = vld [vmem:[#allocation2 + $0x590] sm:$0xff]
    %v374 = vld [vmem:[#allocation2 + $0x598] sm:$0xff]
    %v375 = vld [vmem:[#allocation2 + $0x5a0] sm:$0xff]
    %v376 = vld [vmem:[#allocation2 + $0x5a8] sm:$0xff]
    %v377 = vld [vmem:[#allocation2 + $0x5b0] sm:$0xff]
    %v378 = vld [vmem:[#allocation2 + $0x5b8] sm:$0xff]
    %v379 = vld [vmem:[#allocation2 + $0x5c0] sm:$0xff]
    %v380 = vld [vmem:[#allocation2 + $0x5c8] sm:$0xff]
    %v381 = vld [vmem:[#allocation2 + $0x5d0] sm:$0xff]
    %v382 = vld [vmem:[#allocation2 + $0x5d8] sm:$0xff]
    %v383 = vld [vmem:[#allocation2 + $0x5e0] sm:$0xff]
    %v384 = vld [vmem:[#allocation2 + $0x5e8] sm:$0xff]
    %v385 = vld [vmem:[#allocation2 + $0x5f0] sm:$0xff]
    %v386 = vld [vmem:[#allocation2 + $0x5f8] sm:$0xff]
    %v387 = vld [vmem:[#allocation5] sm:$0xff]
    %v388 = vld [vmem:[#allocation5 + $0x8] sm:$0xf]
    %v391 = vlaneseq
    %v392 = vshrl.u32 %v391, 7
    %v393 = vsub.s32 0, %v392
    %v394 = vrot.slane %v387, %v393
    %v395 = vlaneseq
    %v396 = vshrl.u32 %v395, 7
    %v397 = vsub.s32 1, %v396
    %v398 = vrot.slane %v387, %v397
    %v399 = vlaneseq
    %v400 = vshrl.u32 %v399, 7
    %v401 = vsub.s32 2, %v400
    %v402 = vrot.slane %v387, %v401
    %v403 = vlaneseq
    %v404 = vshrl.u32 %v403, 7
    %v405 = vsub.s32 3, %v404
    %v406 = vrot.slane %v387, %v405
    %v407 = vlaneseq
    %v408 = vshrl.u32 %v407, 7
    %v409 = vsub.s32 4, %v408
    %v410 = vrot.slane %v387, %v409
    %v411 = vlaneseq
    %v412 = vshrl.u32 %v411, 7
    %v413 = vsub.s32 5, %v412
    %v414 = vrot.slane %v387, %v413
    %v415 = vlaneseq
    %v416 = vshrl.u32 %v415, 7
    %v417 = vsub.s32 6, %v416
    %v418 = vrot.slane %v387, %v417
    %v419 = vlaneseq
    %v420 = vshrl.u32 %v419, 7
    %v421 = vsub.s32 7, %v420
    %v422 = vrot.slane %v387, %v421
    %v423 = vlaneseq
    %v424 = vshrl.u32 %v423, 7
    %v425 = vsub.s32 0, %v424
    %v426 = vrot.slane %v388, %v425
    %v427 = vlaneseq
    %v428 = vshrl.u32 %v427, 7
    %v429 = vsub.s32 1, %v428
    %v430 = vrot.slane %v388, %v429
    %v431 = vlaneseq
    %v432 = vshrl.u32 %v431, 7
    %v433 = vsub.s32 2, %v432
    %v434 = vrot.slane %v388, %v433
    %v435 = vlaneseq
    %v436 = vshrl.u32 %v435, 7
    %v437 = vsub.s32 3, %v436
    %v438 = vrot.slane %v388, %v437
    %451 = vmatprep.subr.mxu0 %v196
    %452 = vmatpush1.msra.mxu0 %v195
    %453 = vmatprep.subr.mxu0 %v208
    %454 = vmatpush1.msra.mxu0 %v207
    %455 = vmatprep.subr.mxu0 %v220
    %456 = vmatpush1.msra.mxu0 %v219
    %457 = vmatprep.subr.mxu0 %v232
    %458 = vmatpush1.msra.mxu0 %v231
    %459 = vmatprep.subr.mxu0 %v244
    %460 = vmatpush1.msra.mxu0 %v243
    %461 = vmatprep.subr.mxu0 %v256
    %462 = vmatpush1.msra.mxu0 %v255
    %463 = vmatprep.subr.mxu0 %v268
    %464 = vmatpush1.msra.mxu0 %v267
    %465 = vmatprep.subr.mxu0 %v280
    %466 = vmatpush1.msra.mxu0 %v279
    %467 = vmatprep.subr.mxu0 %v292
    %468 = vmatpush1.msra.mxu0 %v291
    %469 = vmatprep.subr.mxu0 %v304
    %470 = vmatpush1.msra.mxu0 %v303
    %471 = vmatprep.subr.mxu0 %v316
    %472 = vmatpush1.msra.mxu0 %v315
    %473 = vmatprep.subr.mxu0 %v328
    %474 = vmatpush1.msra.mxu0 %v327
    %475 = vmatprep.subr.mxu0 %v340
    %476 = vmatpush1.msra.mxu0 %v339
    %477 = vmatprep.subr.mxu0 %v352
    %478 = vmatpush1.msra.mxu0 %v351
    %479 = vmatprep.subr.mxu0 %v364
    %480 = vmatpush1.msra.mxu0 %v363
    %481 = vmatprep.subr.mxu0 %v376
    %482 = vmatpush1.msra.mxu0 %v375
    %483 = vmatprep.subr.mxu0 0.0
    %484 = vmatpush1.msra.mxu0 0.0
    %485 = vmatprep.subr.mxu0 0.0
    %486 = vmatpush1.msra.mxu0 0.0
    %487 = vmatprep.subr.mxu0 0.0
    %488 = vmatpush1.msra.mxu0 0.0
    %489 = vmatprep.subr.mxu0 0.0
    %490 = vmatpush1.msra.mxu0 0.0
    %491 = vmatprep.subr.mxu0 0.0
    %492 = vmatpush1.msra.mxu0 0.0
    %493 = vmatprep.subr.mxu0 0.0
    %494 = vmatpush1.msra.mxu0 0.0
    %495 = vmatprep.subr.mxu0 0.0
    %496 = vmatpush1.msra.mxu0 0.0
    %497 = vmatprep.subr.mxu0 0.0
    %498 = vmatpush1.msra.mxu0 0.0
    %499 = vmatprep.subr.mxu0 0.0
    %500 = vmatpush1.msra.mxu0 0.0
    %501 = vmatprep.subr.mxu0 0.0
    %502 = vmatpush1.msra.mxu0 0.0
    %503 = vmatprep.subr.mxu0 0.0
    %504 = vmatpush1.msra.mxu0 0.0
    %505 = vmatprep.subr.mxu0 0.0
    %506 = vmatpush1.msra.mxu0 0.0
    %507 = vmatprep.subr.mxu0 0.0
    %508 = vmatpush1.msra.mxu0 0.0
    %509 = vmatprep.subr.mxu0 0.0
    %510 = vmatpush1.msra.mxu0 0.0
    %511 = vmatprep.subr.mxu0 0.0
    %512 = vmatpush1.msra.mxu0 0.0
    %513 = vmatprep.subr.mxu0 0.0
    %514 = vmatpush1.msra.mxu0 0.0
    %515 = vmatprep.mubr.f32.mxu0 0.0
    %516 = vmatmul.mubr.f32.gmra.mrb[0].mxu0 %v192
    %v517 = vpop.f32.mrb[0].mxu0
    %v518 = vadd.f32 %v394, %v517
    %v519 = vpop.f32.mrb[0].mxu0
    %v520 = vadd.f32 %v398, %v519
    %521 = vmatprep.mubr.f32.mxu0 0.0
    %522 = vmatmul.mubr.f32.gmra.mrb[0].mxu0 %v193
    %v523 = vpop.f32.mrb[0].mxu0
    %v524 = vadd.f32 %v394, %v523
    %v525 = vpop.f32.mrb[0].mxu0
    %v526 = vadd.f32 %v398, %v525
    %527 = vdwg.mxu0
    %528 = vmatprep.subr.mxu0 %v198
    %529 = vmatpush1.msra.mxu0 %v197
    %530 = vmatprep.subr.mxu0 %v210
    %531 = vmatpush1.msra.mxu0 %v209
    %532 = vmatprep.subr.mxu0 %v222
    %533 = vmatpush1.msra.mxu0 %v221
    %534 = vmatprep.subr.mxu0 %v234
    %535 = vmatpush1.msra.mxu0 %v233
    %536 = vmatprep.subr.mxu0 %v246
    %537 = vmatpush1.msra.mxu0 %v245
    %538 = vmatprep.subr.mxu0 %v258
    %539 = vmatpush1.msra.mxu0 %v257
    %540 = vmatprep.subr.mxu0 %v270
    %541 = vmatpush1.msra.mxu0 %v269
    %542 = vmatprep.subr.mxu0 %v282
    %543 = vmatpush1.msra.mxu0 %v281
    %544 = vmatprep.subr.mxu0 %v294
    %545 = vmatpush1.msra.mxu0 %v293
    %546 = vmatprep.subr.mxu0 %v306
    %547 = vmatpush1.msra.mxu0 %v305
    %548 = vmatprep.subr.mxu0 %v318
    %549 = vmatpush1.msra.mxu0 %v317
    %550 = vmatprep.subr.mxu0 %v330
    %551 = vmatpush1.msra.mxu0 %v329
    %552 = vmatprep.subr.mxu0 %v342
    %553 = vmatpush1.msra.mxu0 %v341
    %554 = vmatprep.subr.mxu0 %v354
    %555 = vmatpush1.msra.mxu0 %v353
    %556 = vmatprep.subr.mxu0 %v366
    %557 = vmatpush1.msra.mxu0 %v365
    %558 = vmatprep.subr.mxu0 %v378
    %559 = vmatpush1.msra.mxu0 %v377
    %560 = vmatprep.subr.mxu0 0.0
    %561 = vmatpush1.msra.mxu0 0.0
    %562 = vmatprep.subr.mxu0 0.0
    %563 = vmatpush1.msra.mxu0 0.0
    %564 = vmatprep.subr.mxu0 0.0
    %565 = vmatpush1.msra.mxu0 0.0
    %566 = vmatprep.subr.mxu0 0.0
    %567 = vmatpush1.msra.mxu0 0.0
    %568 = vmatprep.subr.mxu0 0.0
    %569 = vmatpush1.msra.mxu0 0.0
    %570 = vmatprep.subr.mxu0 0.0
    %571 = vmatpush1.msra.mxu0 0.0
    %572 = vmatprep.subr.mxu0 0.0
    %573 = vmatpush1.msra.mxu0 0.0
    %574 = vmatprep.subr.mxu0 0.0
    %575 = vmatpush1.msra.mxu0 0.0
    %576 = vmatprep.subr.mxu0 0.0
    %577 = vmatpush1.msra.mxu0 0.0
    %578 = vmatprep.subr.mxu0 0.0
    %579 = vmatpush1.msra.mxu0 0.0
    %580 = vmatprep.subr.mxu0 0.0
    %581 = vmatpush1.msra.mxu0 0.0
    %582 = vmatprep.subr.mxu0 0.0
    %583 = vmatpush1.msra.mxu0 0.0
    %584 = vmatprep.subr.mxu0 0.0
    %585 = vmatpush1.msra.mxu0 0.0
    %586 = vmatprep.subr.mxu0 0.0
    %587 = vmatpush1.msra.mxu0 0.0
    %588 = vmatprep.subr.mxu0 0.0
    %589 = vmatpush1.msra.mxu0 0.0
    %590 = vmatprep.subr.mxu0 0.0
    %591 = vmatpush1.msra.mxu0 0.0
    %592 = vmatprep.mubr.f32.mxu0 0.0
    %593 = vmatmul.mubr.f32.gmra.mrb[0].mxu0 %v192
    %v594 = vpop.f32.mrb[0].mxu0
    %v595 = vadd.f32 %v402, %v594
    %v596 = vpop.f32.mrb[0].mxu0
    %v597 = vadd.f32 %v406, %v596
    %598 = vmatprep.mubr.f32.mxu0 0.0
    %599 = vmatmul.mubr.f32.gmra.mrb[0].mxu0 %v193
    %v600 = vpop.f32.mrb[0].mxu0
    %v601 = vadd.f32 %v402, %v600
    %v602 = vpop.f32.mrb[0].mxu0
    %v603 = vadd.f32 %v406, %v602
    %604 = vdwg.mxu0
    %605 = vmatprep.subr.mxu0 %v200
    %606 = vmatpush1.msra.mxu0 %v199
    %607 = vmatprep.subr.mxu0 %v212
    %608 = vmatpush1.msra.mxu0 %v211
    %609 = vmatprep.subr.mxu0 %v224
    %610 = vmatpush1.msra.mxu0 %v223
    %611 = vmatprep.subr.mxu0 %v236
    %612 = vmatpush1.msra.mxu0 %v235
    %613 = vmatprep.subr.mxu0 %v248
    %614 = vmatpush1.msra.mxu0 %v247
    %615 = vmatprep.subr.mxu0 %v260
    %616 = vmatpush1.msra.mxu0 %v259
    %617 = vmatprep.subr.mxu0 %v272
    %618 = vmatpush1.msra.mxu0 %v271
    %619 = vmatprep.subr.mxu0 %v284
    %620 = vmatpush1.msra.mxu0 %v283
    %621 = vmatprep.subr.mxu0 %v296
    %622 = vmatpush1.msra.mxu0 %v295
    %623 = vmatprep.subr.mxu0 %v308
    %624 = vmatpush1.msra.mxu0 %v307
    %625 = vmatprep.subr.mxu0 %v320
    %626 = vmatpush1.msra.mxu0 %v319
    %627 = vmatprep.subr.mxu0 %v332
    %628 = vmatpush1.msra.mxu0 %v331
    %629 = vmatprep.subr.mxu0 %v344
    %630 = vmatpush1.msra.mxu0 %v343
    %631 = vmatprep.subr.mxu0 %v356
    %632 = vmatpush1.msra.mxu0 %v355
    %633 = vmatprep.subr.mxu0 %v368
    %634 = vmatpush1.msra.mxu0 %v367
    %635 = vmatprep.subr.mxu0 %v380
    %636 = vmatpush1.msra.mxu0 %v379
    %637 = vmatprep.subr.mxu0 0.0
    %638 = vmatpush1.msra.mxu0 0.0
    %639 = vmatprep.subr.mxu0 0.0
    %640 = vmatpush1.msra.mxu0 0.0
    %641 = vmatprep.subr.mxu0 0.0
    %642 = vmatpush1.msra.mxu0 0.0
    %643 = vmatprep.subr.mxu0 0.0
    %644 = vmatpush1.msra.mxu0 0.0
    %645 = vmatprep.subr.mxu0 0.0
    %646 = vmatpush1.msra.mxu0 0.0
    %647 = vmatprep.subr.mxu0 0.0
    %648 = vmatpush1.msra.mxu0 0.0
    %649 = vmatprep.subr.mxu0 0.0
    %650 = vmatpush1.msra.mxu0 0.0
    %651 = vmatprep.subr.mxu0 0.0
    %652 = vmatpush1.msra.mxu0 0.0
    %653 = vmatprep.subr.mxu0 0.0
    %654 = vmatpush1.msra.mxu0 0.0
    %655 = vmatprep.subr.mxu0 0.0
    %656 = vmatpush1.msra.mxu0 0.0
    %657 = vmatprep.subr.mxu0 0.0
    %658 = vmatpush1.msra.mxu0 0.0
    %659 = vmatprep.subr.mxu0 0.0
    %660 = vmatpush1.msra.mxu0 0.0
    %661 = vmatprep.subr.mxu0 0.0
    %662 = vmatpush1.msra.mxu0 0.0
    %663 = vmatprep.subr.mxu0 0.0
    %664 = vmatpush1.msra.mxu0 0.0
    %665 = vmatprep.subr.mxu0 0.0
    %666 = vmatpush1.msra.mxu0 0.0
    %667 = vmatprep.subr.mxu0 0.0
    %668 = vmatpush1.msra.mxu0 0.0
    %669 = vmatprep.mubr.f32.mxu0 0.0
    %670 = vmatmul.mubr.f32.gmra.mrb[0].mxu0 %v192
    %v671 = vpop.f32.mrb[0].mxu0
    %v672 = vadd.f32 %v410, %v671
    %v673 = vpop.f32.mrb[0].mxu0
    %v674 = vadd.f32 %v414, %v673
    %675 = vmatprep.mubr.f32.mxu0 0.0
    %676 = vmatmul.mubr.f32.gmra.mrb[0].mxu0 %v193
    %v677 = vpop.f32.mrb[0].mxu0
    %v678 = vadd.f32 %v410, %v677
    %v679 = vpop.f32.mrb[0].mxu0
    %v680 = vadd.f32 %v414, %v679
    %681 = vdwg.mxu0
    %682 = vmatprep.subr.mxu0 %v202
    %683 = vmatpush1.msra.mxu0 %v201
    %684 = vmatprep.subr.mxu0 %v214
    %685 = vmatpush1.msra.mxu0 %v213
    %686 = vmatprep.subr.mxu0 %v226
    %687 = vmatpush1.msra.mxu0 %v225
    %688 = vmatprep.subr.mxu0 %v238
    %689 = vmatpush1.msra.mxu0 %v237
    %690 = vmatprep.subr.mxu0 %v250
    %691 = vmatpush1.msra.mxu0 %v249
    %692 = vmatprep.subr.mxu0 %v262
    %693 = vmatpush1.msra.mxu0 %v261
    %694 = vmatprep.subr.mxu0 %v274
    %695 = vmatpush1.msra.mxu0 %v273
    %696 = vmatprep.subr.mxu0 %v286
    %697 = vmatpush1.msra.mxu0 %v285
    %698 = vmatprep.subr.mxu0 %v298
    %699 = vmatpush1.msra.mxu0 %v297
    %700 = vmatprep.subr.mxu0 %v310
    %701 = vmatpush1.msra.mxu0 %v309
    %702 = vmatprep.subr.mxu0 %v322
    %703 = vmatpush1.msra.mxu0 %v321
    %704 = vmatprep.subr.mxu0 %v334
    %705 = vmatpush1.msra.mxu0 %v333
    %706 = vmatprep.subr.mxu0 %v346
    %707 = vmatpush1.msra.mxu0 %v345
    %708 = vmatprep.subr.mxu0 %v358
    %709 = vmatpush1.msra.mxu0 %v357
    %710 = vmatprep.subr.mxu0 %v370
    %711 = vmatpush1.msra.mxu0 %v369
    %712 = vmatprep.subr.mxu0 %v382
    %713 = vmatpush1.msra.mxu0 %v381
    %714 = vmatprep.subr.mxu0 0.0
    %715 = vmatpush1.msra.mxu0 0.0
    %716 = vmatprep.subr.mxu0 0.0
    %717 = vmatpush1.msra.mxu0 0.0
    %718 = vmatprep.subr.mxu0 0.0
    %719 = vmatpush1.msra.mxu0 0.0
    %720 = vmatprep.subr.mxu0 0.0
    %721 = vmatpush1.msra.mxu0 0.0
    %722 = vmatprep.subr.mxu0 0.0
    %723 = vmatpush1.msra.mxu0 0.0
    %724 = vmatprep.subr.mxu0 0.0
    %725 = vmatpush1.msra.mxu0 0.0
    %726 = vmatprep.subr.mxu0 0.0
    %727 = vmatpush1.msra.mxu0 0.0
    %728 = vmatprep.subr.mxu0 0.0
    %729 = vmatpush1.msra.mxu0 0.0
    %730 = vmatprep.subr.mxu0 0.0
    %731 = vmatpush1.msra.mxu0 0.0
    %732 = vmatprep.subr.mxu0 0.0
    %733 = vmatpush1.msra.mxu0 0.0
    %734 = vmatprep.subr.mxu0 0.0
    %735 = vmatpush1.msra.mxu0 0.0
    %736 = vmatprep.subr.mxu0 0.0
    %737 = vmatpush1.msra.mxu0 0.0
    %738 = vmatprep.subr.mxu0 0.0
    %739 = vmatpush1.msra.mxu0 0.0
    %740 = vmatprep.subr.mxu0 0.0
    %741 = vmatpush1.msra.mxu0 0.0
    %742 = vmatprep.subr.mxu0 0.0
    %743 = vmatpush1.msra.mxu0 0.0
    %744 = vmatprep.subr.mxu0 0.0
    %745 = vmatpush1.msra.mxu0 0.0
    %746 = vmatprep.mubr.f32.mxu0 0.0
    %747 = vmatmul.mubr.f32.gmra.mrb[0].mxu0 %v192
    %v748 = vpop.f32.mrb[0].mxu0
    %v749 = vadd.f32 %v418, %v748
    %v750 = vpop.f32.mrb[0].mxu0
    %v751 = vadd.f32 %v422, %v750
    %752 = vmatprep.mubr.f32.mxu0 0.0
    %753 = vmatmul.mubr.f32.gmra.mrb[0].mxu0 %v193
    %v754 = vpop.f32.mrb[0].mxu0
    %v755 = vadd.f32 %v418, %v754
    %v756 = vpop.f32.mrb[0].mxu0
    %v757 = vadd.f32 %v422, %v756
    %758 = vdwg.mxu0
    %759 = vmatprep.subr.mxu0 %v204
    %760 = vmatpush1.msra.mxu0 %v203
    %761 = vmatprep.subr.mxu0 %v216
    %762 = vmatpush1.msra.mxu0 %v215
    %763 = vmatprep.subr.mxu0 %v228
    %764 = vmatpush1.msra.mxu0 %v227
    %765 = vmatprep.subr.mxu0 %v240
    %766 = vmatpush1.msra.mxu0 %v239
    %767 = vmatprep.subr.mxu0 %v252
    %768 = vmatpush1.msra.mxu0 %v251
    %769 = vmatprep.subr.mxu0 %v264
    %770 = vmatpush1.msra.mxu0 %v263
    %771 = vmatprep.subr.mxu0 %v276
    %772 = vmatpush1.msra.mxu0 %v275
    %773 = vmatprep.subr.mxu0 %v288
    %774 = vmatpush1.msra.mxu0 %v287
    %775 = vmatprep.subr.mxu0 %v300
    %776 = vmatpush1.msra.mxu0 %v299
    %777 = vmatprep.subr.mxu0 %v312
    %778 = vmatpush1.msra.mxu0 %v311
    %779 = vmatprep.subr.mxu0 %v324
    %780 = vmatpush1.msra.mxu0 %v323
    %781 = vmatprep.subr.mxu0 %v336
    %782 = vmatpush1.msra.mxu0 %v335
    %783 = vmatprep.subr.mxu0 %v348
    %784 = vmatpush1.msra.mxu0 %v347
    %785 = vmatprep.subr.mxu0 %v360
    %786 = vmatpush1.msra.mxu0 %v359
    %787 = vmatprep.subr.mxu0 %v372
    %788 = vmatpush1.msra.mxu0 %v371
    %789 = vmatprep.subr.mxu0 %v384
    %790 = vmatpush1.msra.mxu0 %v383
    %791 = vmatprep.subr.mxu0 0.0
    %792 = vmatpush1.msra.mxu0 0.0
    %793 = vmatprep.subr.mxu0 0.0
    %794 = vmatpush1.msra.mxu0 0.0
    %795 = vmatprep.subr.mxu0 0.0
    %796 = vmatpush1.msra.mxu0 0.0
    %797 = vmatprep.subr.mxu0 0.0
    %798 = vmatpush1.msra.mxu0 0.0
    %799 = vmatprep.subr.mxu0 0.0
    %800 = vmatpush1.msra.mxu0 0.0
    %801 = vmatprep.subr.mxu0 0.0
    %802 = vmatpush1.msra.mxu0 0.0
    %803 = vmatprep.subr.mxu0 0.0
    %804 = vmatpush1.msra.mxu0 0.0
    %805 = vmatprep.subr.mxu0 0.0
    %806 = vmatpush1.msra.mxu0 0.0
    %807 = vmatprep.subr.mxu0 0.0
    %808 = vmatpush1.msra.mxu0 0.0
    %809 = vmatprep.subr.mxu0 0.0
    %810 = vmatpush1.msra.mxu0 0.0
    %811 = vmatprep.subr.mxu0 0.0
    %812 = vmatpush1.msra.mxu0 0.0
    %813 = vmatprep.subr.mxu0 0.0
    %814 = vmatpush1.msra.mxu0 0.0
    %815 = vmatprep.subr.mxu0 0.0
    %816 = vmatpush1.msra.mxu0 0.0
    %817 = vmatprep.subr.mxu0 0.0
    %818 = vmatpush1.msra.mxu0 0.0
    %819 = vmatprep.subr.mxu0 0.0
    %820 = vmatpush1.msra.mxu0 0.0
    %821 = vmatprep.subr.mxu0 0.0
    %822 = vmatpush1.msra.mxu0 0.0
    %823 = vmatprep.mubr.f32.mxu0 0.0
    %824 = vmatmul.mubr.f32.gmra.mrb[0].mxu0 %v192
    %v825 = vpop.f32.mrb[0].mxu0
    %v826 = vadd.f32 %v426, %v825
    %v827 = vpop.f32.mrb[0].mxu0
    %v828 = vadd.f32 %v430, %v827
    %829 = vmatprep.mubr.f32.mxu0 0.0
    %830 = vmatmul.mubr.f32.gmra.mrb[0].mxu0 %v193
    %v831 = vpop.f32.mrb[0].mxu0
    %v832 = vadd.f32 %v426, %v831
    %v833 = vpop.f32.mrb[0].mxu0
    %v834 = vadd.f32 %v430, %v833
    %835 = vdwg.mxu0
    %836 = vmatprep.subr.mxu0 %v206
    %837 = vmatpush1.msra.mxu0 %v205
    %838 = vmatprep.subr.mxu0 %v218
    %839 = vmatpush1.msra.mxu0 %v217
    %840 = vmatprep.subr.mxu0 %v230
    %841 = vmatpush1.msra.mxu0 %v229
    %842 = vmatprep.subr.mxu0 %v242
    %843 = vmatpush1.msra.mxu0 %v241
    %844 = vmatprep.subr.mxu0 %v254
    %845 = vmatpush1.msra.mxu0 %v253
    %846 = vmatprep.subr.mxu0 %v266
    %847 = vmatpush1.msra.mxu0 %v265
    %848 = vmatprep.subr.mxu0 %v278
    %849 = vmatpush1.msra.mxu0 %v277
    %850 = vmatprep.subr.mxu0 %v290
    %851 = vmatpush1.msra.mxu0 %v289
    %852 = vmatprep.subr.mxu0 %v302
    %853 = vmatpush1.msra.mxu0 %v301
    %854 = vmatprep.subr.mxu0 %v314
    %855 = vmatpush1.msra.mxu0 %v313
    %856 = vmatprep.subr.mxu0 %v326
    %857 = vmatpush1.msra.mxu0 %v325
    %858 = vmatprep.subr.mxu0 %v338
    %859 = vmatpush1.msra.mxu0 %v337
    %860 = vmatprep.subr.mxu0 %v350
    %861 = vmatpush1.msra.mxu0 %v349
    %862 = vmatprep.subr.mxu0 %v362
    %863 = vmatpush1.msra.mxu0 %v361
    %864 = vmatprep.subr.mxu0 %v374
    %865 = vmatpush1.msra.mxu0 %v373
    %866 = vmatprep.subr.mxu0 %v386
    %867 = vmatpush1.msra.mxu0 %v385
    %868 = vmatprep.subr.mxu0 0.0
    %869 = vmatpush1.msra.mxu0 0.0
    %870 = vmatprep.subr.mxu0 0.0
    %871 = vmatpush1.msra.mxu0 0.0
    %872 = vmatprep.subr.mxu0 0.0
    %873 = vmatpush1.msra.mxu0 0.0
    %874 = vmatprep.subr.mxu0 0.0
    %875 = vmatpush1.msra.mxu0 0.0
    %876 = vmatprep.subr.mxu0 0.0
    %877 = vmatpush1.msra.mxu0 0.0
    %878 = vmatprep.subr.mxu0 0.0
    %879 = vmatpush1.msra.mxu0 0.0
    %880 = vmatprep.subr.mxu0 0.0
    %881 = vmatpush1.msra.mxu0 0.0
    %882 = vmatprep.subr.mxu0 0.0
    %883 = vmatpush1.msra.mxu0 0.0
    %884 = vmatprep.subr.mxu0 0.0
    %885 = vmatpush1.msra.mxu0 0.0
    %886 = vmatprep.subr.mxu0 0.0
    %887 = vmatpush1.msra.mxu0 0.0
    %888 = vmatprep.subr.mxu0 0.0
    %889 = vmatpush1.msra.mxu0 0.0
    %890 = vmatprep.subr.mxu0 0.0
    %891 = vmatpush1.msra.mxu0 0.0
    %892 = vmatprep.subr.mxu0 0.0
    %893 = vmatpush1.msra.mxu0 0.0
    %894 = vmatprep.subr.mxu0 0.0
    %895 = vmatpush1.msra.mxu0 0.0
    %896 = vmatprep.subr.mxu0 0.0
    %897 = vmatpush1.msra.mxu0 0.0
    %898 = vmatprep.subr.mxu0 0.0
    %899 = vmatpush1.msra.mxu0 0.0
    %900 = vmatprep.mubr.f32.mxu0 0.0
    %901 = vmatmul.mubr.f32.gmra.mrb[0].mxu0 %v192
    %v902 = vpop.f32.mrb[0].mxu0
    %v903 = vadd.f32 %v434, %v902
    %v904 = vpop.f32.mrb[0].mxu0
    %v905 = vadd.f32 %v438, %v904
    %906 = vmatprep.mubr.f32.mxu0 0.0
    %907 = vmatmul.mubr.f32.gmra.mrb[0].mxu0 %v193
    %v908 = vpop.f32.mrb[0].mxu0
    %v909 = vadd.f32 %v434, %v908
    %v910 = vpop.f32.mrb[0].mxu0
    %v911 = vadd.f32 %v438, %v910
    %912 = vdwg.mxu0
    %913 = vmatprep.subr.mxu0 0.0
    %914 = vmatpush1.xpose.msra.mxu0 %v672
    %915 = vmatprep.subr.mxu0 0.0
    %916 = vmatpush1.xpose.msra.mxu0 %v678
    %917 = vmatprep.subr.mxu0 0.0
    %918 = vmatpush1.xpose.msra.mxu0 0.0
    %919 = vmatprep.subr.mxu0 0.0
    %920 = vmatpush1.xpose.msra.mxu0 0.0
    %921 = vmatprep.subr.mxu0 0.0
    %922 = vmatpush1.xpose.msra.mxu0 0.0
    %923 = vmatprep.subr.mxu0 0.0
    %924 = vmatpush1.xpose.msra.mxu0 0.0
    %925 = vmatprep.subr.mxu0 0.0
    %926 = vmatpush1.xpose.msra.mxu0 0.0
    %927 = vmatprep.subr.mxu0 0.0
    %928 = vmatpush1.xpose.msra.mxu0 0.0
    %929 = vmatprep.subr.mxu0 0.0
    %930 = vmatpush1.xpose.msra.mxu0 0.0
    %931 = vmatprep.subr.mxu0 0.0
    %932 = vmatpush1.xpose.msra.mxu0 0.0
    %933 = vmatprep.subr.mxu0 0.0
    %934 = vmatpush1.xpose.msra.mxu0 0.0
    %935 = vmatprep.subr.mxu0 0.0
    %936 = vmatpush1.xpose.msra.mxu0 0.0
    %937 = vmatprep.subr.mxu0 0.0
    %938 = vmatpush1.xpose.msra.mxu0 0.0
    %939 = vmatprep.subr.mxu0 0.0
    %940 = vmatpush1.xpose.msra.mxu0 0.0
    %941 = vmatprep.subr.mxu0 0.0
    %942 = vmatpush1.xpose.msra.mxu0 0.0
    %943 = vmatprep.subr.mxu0 0.0
    %944 = vmatpush1.xpose.msra.mxu0 0.0
    %945 = vmatprep.subr.mxu0 0.0
    %946 = vmatpush1.xpose.msra.mxu0 0.0
    %947 = vmatprep.subr.mxu0 0.0
    %948 = vmatpush1.xpose.msra.mxu0 0.0
    %949 = vmatprep.subr.mxu0 0.0
    %950 = vmatpush1.xpose.msra.mxu0 0.0
    %951 = vmatprep.subr.mxu0 0.0
    %952 = vmatpush1.xpose.msra.mxu0 0.0
    %953 = vmatprep.subr.mxu0 0.0
    %954 = vmatpush1.xpose.msra.mxu0 0.0
    %955 = vmatprep.subr.mxu0 0.0
    %956 = vmatpush1.xpose.msra.mxu0 0.0
    %957 = vmatprep.subr.mxu0 0.0
    %958 = vmatpush1.xpose.msra.mxu0 0.0
    %959 = vmatprep.subr.mxu0 0.0
    %960 = vmatpush1.xpose.msra.mxu0 0.0
    %961 = vmatprep.subr.mxu0 0.0
    %962 = vmatpush1.xpose.msra.mxu0 0.0
    %963 = vmatprep.subr.mxu0 0.0
    %964 = vmatpush1.xpose.msra.mxu0 0.0
    %965 = vmatprep.subr.mxu0 0.0
    %966 = vmatpush1.xpose.msra.mxu0 0.0
    %967 = vmatprep.subr.mxu0 0.0
    %968 = vmatpush1.xpose.msra.mxu0 0.0
    %969 = vmatprep.subr.mxu0 0.0
    %970 = vmatpush1.xpose.msra.mxu0 0.0
    %971 = vmatprep.subr.mxu0 0.0
    %972 = vmatpush1.xpose.msra.mxu0 0.0
    %973 = vmatprep.subr.mxu0 0.0
    %974 = vmatpush1.xpose.msra.mxu0 0.0
    %975 = vmatprep.subr.mxu0 0.0
    %976 = vmatpush1.xpose.msra.mxu0 0.0
    %977 = vmatprep.mubr.f32.mxu0 0.0
    %978 = vmatmul.mubr.f32.gmra.mrb[0].mxu0 %v518
    %v979 = vpop.f32.mrb[0].mxu0
    %v980 = vadd.f32 0.0, %v979
    %v981 = vpop.f32.mrb[0].mxu0
    %982 = vmatprep.mubr.f32.mxu0 0.0
    %983 = vmatmul.mubr.f32.gmra.mrb[0].mxu0 %v524
    %v984 = vpop.f32.mrb[0].mxu0
    %v985 = vadd.f32 0.0, %v984
    %v986 = vpop.f32.mrb[0].mxu0
    %987 = vdwg.mxu0
    %988 = vmatprep.subr.mxu0 0.0
    %989 = vmatpush1.xpose.msra.mxu0 %v674
    %990 = vmatprep.subr.mxu0 0.0
    %991 = vmatpush1.xpose.msra.mxu0 %v680
    %992 = vmatprep.subr.mxu0 0.0
    %993 = vmatpush1.xpose.msra.mxu0 0.0
    %994 = vmatprep.subr.mxu0 0.0
    %995 = vmatpush1.xpose.msra.mxu0 0.0
    %996 = vmatprep.subr.mxu0 0.0
    %997 = vmatpush1.xpose.msra.mxu0 0.0
    %998 = vmatprep.subr.mxu0 0.0
    %999 = vmatpush1.xpose.msra.mxu0 0.0
    %1000 = vmatprep.subr.mxu0 0.0
    %1001 = vmatpush1.xpose.msra.mxu0 0.0
    %1002 = vmatprep.subr.mxu0 0.0
    %1003 = vmatpush1.xpose.msra.mxu0 0.0
    %1004 = vmatprep.subr.mxu0 0.0
    %1005 = vmatpush1.xpose.msra.mxu0 0.0
    %1006 = vmatprep.subr.mxu0 0.0
    %1007 = vmatpush1.xpose.msra.mxu0 0.0
    %1008 = vmatprep.subr.mxu0 0.0
    %1009 = vmatpush1.xpose.msra.mxu0 0.0
    %1010 = vmatprep.subr.mxu0 0.0
    %1011 = vmatpush1.xpose.msra.mxu0 0.0
    %1012 = vmatprep.subr.mxu0 0.0
    %1013 = vmatpush1.xpose.msra.mxu0 0.0
    %1014 = vmatprep.subr.mxu0 0.0
    %1015 = vmatpush1.xpose.msra.mxu0 0.0
    %1016 = vmatprep.subr.mxu0 0.0
    %1017 = vmatpush1.xpose.msra.mxu0 0.0
    %1018 = vmatprep.subr.mxu0 0.0
    %1019 = vmatpush1.xpose.msra.mxu0 0.0
    %1020 = vmatprep.subr.mxu0 0.0
    %1021 = vmatpush1.xpose.msra.mxu0 0.0
    %1022 = vmatprep.subr.mxu0 0.0
    %1023 = vmatpush1.xpose.msra.mxu0 0.0
    %1024 = vmatprep.subr.mxu0 0.0
    %1025 = vmatpush1.xpose.msra.mxu0 0.0
    %1026 = vmatprep.subr.mxu0 0.0
    %1027 = vmatpush1.xpose.msra.mxu0 0.0
    %1028 = vmatprep.subr.mxu0 0.0
    %1029 = vmatpush1.xpose.msra.mxu0 0.0
    %1030 = vmatprep.subr.mxu0 0.0
    %1031 = vmatpush1.xpose.msra.mxu0 0.0
    %1032 = vmatprep.subr.mxu0 0.0
    %1033 = vmatpush1.xpose.msra.mxu0 0.0
    %1034 = vmatprep.subr.mxu0 0.0
    %1035 = vmatpush1.xpose.msra.mxu0 0.0
    %1036 = vmatprep.subr.mxu0 0.0
    %1037 = vmatpush1.xpose.msra.mxu0 0.0
    %1038 = vmatprep.subr.mxu0 0.0
    %1039 = vmatpush1.xpose.msra.mxu0 0.0
    %1040 = vmatprep.subr.mxu0 0.0
    %1041 = vmatpush1.xpose.msra.mxu0 0.0
    %1042 = vmatprep.subr.mxu0 0.0
    %1043 = vmatpush1.xpose.msra.mxu0 0.0
    %1044 = vmatprep.subr.mxu0 0.0
    %1045 = vmatpush1.xpose.msra.mxu0 0.0
    %1046 = vmatprep.subr.mxu0 0.0
    %1047 = vmatpush1.xpose.msra.mxu0 0.0
    %1048 = vmatprep.subr.mxu0 0.0
    %1049 = vmatpush1.xpose.msra.mxu0 0.0
    %1050 = vmatprep.subr.mxu0 0.0
    %1051 = vmatpush1.xpose.msra.mxu0 0.0
    %1052 = vmatprep.mubr.f32.mxu0 0.0
    %1053 = vmatmul.mubr.f32.gmra.mrb[0].mxu0 %v520
    %v1054 = vpop.f32.mrb[0].mxu0
    %v1055 = vadd.f32 0.0, %v1054
    %v1056 = vpop.f32.mrb[0].mxu0
    %1057 = vmatprep.mubr.f32.mxu0 0.0
    %1058 = vmatmul.mubr.f32.gmra.mrb[0].mxu0 %v526
    %v1059 = vpop.f32.mrb[0].mxu0
    %v1060 = vadd.f32 0.0, %v1059
    %v1061 = vpop.f32.mrb[0].mxu0
    %1062 = vdwg.mxu0
    %1063 = vmatprep.subr.mxu0 0.0
    %1064 = vmatpush1.xpose.msra.mxu0 %v749
    %1065 = vmatprep.subr.mxu0 0.0
    %1066 = vmatpush1.xpose.msra.mxu0 %v755
    %1067 = vmatprep.subr.mxu0 0.0
    %1068 = vmatpush1.xpose.msra.mxu0 0.0
    %1069 = vmatprep.subr.mxu0 0.0
    %1070 = vmatpush1.xpose.msra.mxu0 0.0
    %1071 = vmatprep.subr.mxu0 0.0
    %1072 = vmatpush1.xpose.msra.mxu0 0.0
    %1073 = vmatprep.subr.mxu0 0.0
    %1074 = vmatpush1.xpose.msra.mxu0 0.0
    %1075 = vmatprep.subr.mxu0 0.0
    %1076 = vmatpush1.xpose.msra.mxu0 0.0
    %1077 = vmatprep.subr.mxu0 0.0
    %1078 = vmatpush1.xpose.msra.mxu0 0.0
    %1079 = vmatprep.subr.mxu0 0.0
    %1080 = vmatpush1.xpose.msra.mxu0 0.0
    %1081 = vmatprep.subr.mxu0 0.0
    %1082 = vmatpush1.xpose.msra.mxu0 0.0
    %1083 = vmatprep.subr.mxu0 0.0
    %1084 = vmatpush1.xpose.msra.mxu0 0.0
    %1085 = vmatprep.subr.mxu0 0.0
    %1086 = vmatpush1.xpose.msra.mxu0 0.0
    %1087 = vmatprep.subr.mxu0 0.0
    %1088 = vmatpush1.xpose.msra.mxu0 0.0
    %1089 = vmatprep.subr.mxu0 0.0
    %1090 = vmatpush1.xpose.msra.mxu0 0.0
    %1091 = vmatprep.subr.mxu0 0.0
    %1092 = vmatpush1.xpose.msra.mxu0 0.0
    %1093 = vmatprep.subr.mxu0 0.0
    %1094 = vmatpush1.xpose.msra.mxu0 0.0
    %1095 = vmatprep.subr.mxu0 0.0
    %1096 = vmatpush1.xpose.msra.mxu0 0.0
    %1097 = vmatprep.subr.mxu0 0.0
    %1098 = vmatpush1.xpose.msra.mxu0 0.0
    %1099 = vmatprep.subr.mxu0 0.0
    %1100 = vmatpush1.xpose.msra.mxu0 0.0
    %1101 = vmatprep.subr.mxu0 0.0
    %1102 = vmatpush1.xpose.msra.mxu0 0.0
    %1103 = vmatprep.subr.mxu0 0.0
    %1104 = vmatpush1.xpose.msra.mxu0 0.0
    %1105 = vmatprep.subr.mxu0 0.0
    %1106 = vmatpush1.xpose.msra.mxu0 0.0
    %1107 = vmatprep.subr.mxu0 0.0
    %1108 = vmatpush1.xpose.msra.mxu0 0.0
    %1109 = vmatprep.subr.mxu0 0.0
    %1110 = vmatpush1.xpose.msra.mxu0 0.0
    %1111 = vmatprep.subr.mxu0 0.0
    %1112 = vmatpush1.xpose.msra.mxu0 0.0
    %1113 = vmatprep.subr.mxu0 0.0
    %1114 = vmatpush1.xpose.msra.mxu0 0.0
    %1115 = vmatprep.subr.mxu0 0.0
    %1116 = vmatpush1.xpose.msra.mxu0 0.0
    %1117 = vmatprep.subr.mxu0 0.0
    %1118 = vmatpush1.xpose.msra.mxu0 0.0
    %1119 = vmatprep.subr.mxu0 0.0
    %1120 = vmatpush1.xpose.msra.mxu0 0.0
    %1121 = vmatprep.subr.mxu0 0.0
    %1122 = vmatpush1.xpose.msra.mxu0 0.0
    %1123 = vmatprep.subr.mxu0 0.0
    %1124 = vmatpush1.xpose.msra.mxu0 0.0
    %1125 = vmatprep.subr.mxu0 0.0
    %1126 = vmatpush1.xpose.msra.mxu0 0.0
    %1127 = vmatprep.mubr.f32.mxu0 0.0
    %1128 = vmatmul.mubr.f32.gmra.mrb[0].mxu0 %v595
    %v1129 = vpop.f32.mrb[0].mxu0
    %v1130 = vadd.f32 0.0, %v1129
    %v1131 = vpop.f32.mrb[0].mxu0
    %1132 = vmatprep.mubr.f32.mxu0 0.0
    %1133 = vmatmul.mubr.f32.gmra.mrb[0].mxu0 %v601
    %v1134 = vpop.f32.mrb[0].mxu0
    %v1135 = vadd.f32 0.0, %v1134
    %v1136 = vpop.f32.mrb[0].mxu0
    %1137 = vdwg.mxu0
    %1138 = vmatprep.subr.mxu0 0.0
    %1139 = vmatpush1.xpose.msra.mxu0 %v751
    %1140 = vmatprep.subr.mxu0 0.0
    %1141 = vmatpush1.xpose.msra.mxu0 %v757
    %1142 = vmatprep.subr.mxu0 0.0
    %1143 = vmatpush1.xpose.msra.mxu0 0.0
    %1144 = vmatprep.subr.mxu0 0.0
    %1145 = vmatpush1.xpose.msra.mxu0 0.0
    %1146 = vmatprep.subr.mxu0 0.0
    %1147 = vmatpush1.xpose.msra.mxu0 0.0
    %1148 = vmatprep.subr.mxu0 0.0
    %1149 = vmatpush1.xpose.msra.mxu0 0.0
    %1150 = vmatprep.subr.mxu0 0.0
    %1151 = vmatpush1.xpose.msra.mxu0 0.0
    %1152 = vmatprep.subr.mxu0 0.0
    %1153 = vmatpush1.xpose.msra.mxu0 0.0
    %1154 = vmatprep.subr.mxu0 0.0
    %1155 = vmatpush1.xpose.msra.mxu0 0.0
    %1156 = vmatprep.subr.mxu0 0.0
    %1157 = vmatpush1.xpose.msra.mxu0 0.0
    %1158 = vmatprep.subr.mxu0 0.0
    %1159 = vmatpush1.xpose.msra.mxu0 0.0
    %1160 = vmatprep.subr.mxu0 0.0
    %1161 = vmatpush1.xpose.msra.mxu0 0.0
    %1162 = vmatprep.subr.mxu0 0.0
    %1163 = vmatpush1.xpose.msra.mxu0 0.0
    %1164 = vmatprep.subr.mxu0 0.0
    %1165 = vmatpush1.xpose.msra.mxu0 0.0
    %1166 = vmatprep.subr.mxu0 0.0
    %1167 = vmatpush1.xpose.msra.mxu0 0.0
    %1168 = vmatprep.subr.mxu0 0.0
    %1169 = vmatpush1.xpose.msra.mxu0 0.0
    %1170 = vmatprep.subr.mxu0 0.0
    %1171 = vmatpush1.xpose.msra.mxu0 0.0
    %1172 = vmatprep.subr.mxu0 0.0
    %1173 = vmatpush1.xpose.msra.mxu0 0.0
    %1174 = vmatprep.subr.mxu0 0.0
    %1175 = vmatpush1.xpose.msra.mxu0 0.0
    %1176 = vmatprep.subr.mxu0 0.0
    %1177 = vmatpush1.xpose.msra.mxu0 0.0
    %1178 = vmatprep.subr.mxu0 0.0
    %1179 = vmatpush1.xpose.msra.mxu0 0.0
    %1180 = vmatprep.subr.mxu0 0.0
    %1181 = vmatpush1.xpose.msra.mxu0 0.0
    %1182 = vmatprep.subr.mxu0 0.0
    %1183 = vmatpush1.xpose.msra.mxu0 0.0
    %1184 = vmatprep.subr.mxu0 0.0
    %1185 = vmatpush1.xpose.msra.mxu0 0.0
    %1186 = vmatprep.subr.mxu0 0.0
    %1187 = vmatpush1.xpose.msra.mxu0 0.0
    %1188 = vmatprep.subr.mxu0 0.0
    %1189 = vmatpush1.xpose.msra.mxu0 0.0
    %1190 = vmatprep.subr.mxu0 0.0
    %1191 = vmatpush1.xpose.msra.mxu0 0.0
    %1192 = vmatprep.subr.mxu0 0.0
    %1193 = vmatpush1.xpose.msra.mxu0 0.0
    %1194 = vmatprep.subr.mxu0 0.0
    %1195 = vmatpush1.xpose.msra.mxu0 0.0
    %1196 = vmatprep.subr.mxu0 0.0
    %1197 = vmatpush1.xpose.msra.mxu0 0.0
    %1198 = vmatprep.subr.mxu0 0.0
    %1199 = vmatpush1.xpose.msra.mxu0 0.0
    %1200 = vmatprep.subr.mxu0 0.0
    %1201 = vmatpush1.xpose.msra.mxu0 0.0
    %1202 = vmatprep.mubr.f32.mxu0 0.0
    %1203 = vmatmul.mubr.f32.gmra.mrb[0].mxu0 %v597
    %v1204 = vpop.f32.mrb[0].mxu0
    %v1205 = vadd.f32 0.0, %v1204
    %v1206 = vpop.f32.mrb[0].mxu0
    %1207 = vmatprep.mubr.f32.mxu0 0.0
    %1208 = vmatmul.mubr.f32.gmra.mrb[0].mxu0 %v603
    %v1209 = vpop.f32.mrb[0].mxu0
    %v1210 = vadd.f32 0.0, %v1209
    %v1211 = vpop.f32.mrb[0].mxu0
    %1212 = vdwg.mxu0
    %v1213 = vmul.f32 %v980, 0.35355338
    %v1214 = vmul.f32 %v985, 0.35355338
    %v1215 = vmul.f32 %v1055, 0.35355338
    %v1216 = vmul.f32 %v1060, 0.35355338
    %v1217 = vmul.f32 %v1130, 0.35355338
    %v1218 = vmul.f32 %v1135, 0.35355338
    %v1219 = vmul.f32 %v1205, 0.35355338
    %v1220 = vmul.f32 %v1210, 0.35355338
    %v1221 = vadd.f32 %v1213, %v146
    %v1222 = vadd.f32 %v1214, %v147
    %v1223 = vadd.f32 %v1215, %v148
    %v1224 = vadd.f32 %v1216, %v149
    %v1225 = vadd.f32 %v1217, %v150
    %v1226 = vadd.f32 %v1218, %v151
    %v1227 = vadd.f32 %v1219, %v152
    %v1228 = vadd.f32 %v1220, %v153
    %vm1229 = vcmask 130048
    %v1230 = vsel %vm1229, %v1221, -inf
    %1231 = vmax.xlane.f32.xlu0 %v1230
    %v1232 = vpop.xlane.xlu0 %1231
    %v1233 = vsel %vm1229, %v1222, -inf
    %1234 = vmax.xlane.f32.xlu0 %v1233
    %v1235 = vpop.xlane.xlu0 %1234
    %v1236 = vsel %vm1229, %v1223, -inf
    %1237 = vmax.xlane.f32.xlu0 %v1236
    %v1238 = vpop.xlane.xlu0 %1237
    %v1239 = vsel %vm1229, %v1224, -inf
    %1240 = vmax.xlane.f32.xlu0 %v1239
    %v1241 = vpop.xlane.xlu0 %1240
    %v1242 = vsel %vm1229, %v1225, -inf
    %1243 = vmax.xlane.f32.xlu0 %v1242
    %v1244 = vpop.xlane.xlu0 %1243
    %v1245 = vsel %vm1229, %v1226, -inf
    %1246 = vmax.xlane.f32.xlu0 %v1245
    %v1247 = vpop.xlane.xlu0 %1246
    %v1248 = vsel %vm1229, %v1227, -inf
    %1249 = vmax.xlane.f32.xlu0 %v1248
    %v1250 = vpop.xlane.xlu0 %1249
    %v1251 = vsel %vm1229, %v1228, -inf
    %1252 = vmax.xlane.f32.xlu0 %v1251
    %v1253 = vpop.xlane.xlu0 %1252
    %v1254 = vsub.f32 %v1221, %v1232
    %v1255 = vsub.f32 %v1222, %v1235
    %v1256 = vsub.f32 %v1223, %v1238
    %v1257 = vsub.f32 %v1224, %v1241
    %v1258 = vsub.f32 %v1225, %v1244
    %v1259 = vsub.f32 %v1226, %v1247
    %v1260 = vsub.f32 %v1227, %v1250
    %v1261 = vsub.f32 %v1228, %v1253
    %v1262 = vmul.f32 %v1254, 1.442695
    %v1263 = vpow.pop %v1262
    %v1264 = vmul.f32 %v1255, 1.442695
    %v1265 = vpow.pop %v1264
    %v1266 = vmul.f32 %v1256, 1.442695
    %v1267 = vpow.pop %v1266
    %v1268 = vmul.f32 %v1257, 1.442695
    %v1269 = vpow.pop %v1268
    %v1270 = vmul.f32 %v1258, 1.442695
    %v1271 = vpow.pop %v1270
    %v1272 = vmul.f32 %v1259, 1.442695
    %v1273 = vpow.pop %v1272
    %v1274 = vmul.f32 %v1260, 1.442695
    %v1275 = vpow.pop %v1274
    %v1276 = vmul.f32 %v1261, 1.442695
    %v1277 = vpow.pop %v1276
    %v1278 = vsel %vm1229, %v1263, 0.0
    %1279 = vadd.xlane.f32.xlu0 %v1278
    %v1280 = vpop.xlane.xlu0 %1279
    %v1281 = vsel %vm1229, %v1265, 0.0
    %1282 = vadd.xlane.f32.xlu0 %v1281
    %v1283 = vpop.xlane.xlu0 %1282
    %v1284 = vsel %vm1229, %v1267, 0.0
    %1285 = vadd.xlane.f32.xlu0 %v1284
    %v1286 = vpop.xlane.xlu0 %1285
    %v1287 = vsel %vm1229, %v1269, 0.0
    %1288 = vadd.xlane.f32.xlu0 %v1287
    %v1289 = vpop.xlane.xlu0 %1288
    %v1290 = vsel %vm1229, %v1271, 0.0
    %1291 = vadd.xlane.f32.xlu0 %v1290
    %v1292 = vpop.xlane.xlu0 %1291
    %v1293 = vsel %vm1229, %v1273, 0.0
    %1294 = vadd.xlane.f32.xlu0 %v1293
    %v1295 = vpop.xlane.xlu0 %1294
    %v1296 = vsel %vm1229, %v1275, 0.0
    %1297 = vadd.xlane.f32.xlu0 %v1296
    %v1298 = vpop.xlane.xlu0 %1297
    %v1299 = vsel %vm1229, %v1277, 0.0
    %1300 = vadd.xlane.f32.xlu0 %v1299
    %v1301 = vpop.xlane.xlu0 %1300
    %v1302 = vrcp.pop %v1280
    %v1303 = vrcp.pop %v1283
    %v1304 = vrcp.pop %v1286
    %v1305 = vrcp.pop %v1289
    %v1306 = vrcp.pop %v1292
    %v1307 = vrcp.pop %v1295
    %v1308 = vrcp.pop %v1298
    %v1309 = vrcp.pop %v1301
    %v1310 = vmul.f32 %v1263, %v1302
    %v1311 = vmul.f32 %v1265, %v1303
    %v1312 = vmul.f32 %v1267, %v1304
    %v1313 = vmul.f32 %v1269, %v1305
    %v1314 = vmul.f32 %v1271, %v1306
    %v1315 = vmul.f32 %v1273, %v1307
    %v1316 = vmul.f32 %v1275, %v1308
    %v1317 = vmul.f32 %v1277, %v1309
    %v1319 = vsel %vm1229, %v1310, 0
    %v1322 = vsel %vm1229, %v1311, 0
    %1324 = vmatprep.subr.mxu0 0.0
    %1325 = vmatpush1.msra.mxu0 %v826
    %1326 = vmatprep.subr.mxu0 0.0
    %1327 = vmatpush1.msra.mxu0 %v832
    %1328 = vmatprep.subr.mxu0 0.0
    %1329 = vmatpush1.msra.mxu0 0.0
    %1330 = vmatprep.subr.mxu0 0.0
    %1331 = vmatpush1.msra.mxu0 0.0
    %1332 = vmatprep.subr.mxu0 0.0
    %1333 = vmatpush1.msra.mxu0 0.0
    %1334 = vmatprep.subr.mxu0 0.0
    %1335 = vmatpush1.msra.mxu0 0.0
    %1336 = vmatprep.subr.mxu0 0.0
    %1337 = vmatpush1.msra.mxu0 0.0
    %1338 = vmatprep.subr.mxu0 0.0
    %1339 = vmatpush1.msra.mxu0 0.0
    %1340 = vmatprep.subr.mxu0 0.0
    %1341 = vmatpush1.msra.mxu0 0.0
    %1342 = vmatprep.subr.mxu0 0.0
    %1343 = vmatpush1.msra.mxu0 0.0
    %1344 = vmatprep.subr.mxu0 0.0
    %1345 = vmatpush1.msra.mxu0 0.0
    %1346 = vmatprep.subr.mxu0 0.0
    %1347 = vmatpush1.msra.mxu0 0.0
    %1348 = vmatprep.subr.mxu0 0.0
    %1349 = vmatpush1.msra.mxu0 0.0
    %1350 = vmatprep.subr.mxu0 0.0
    %1351 = vmatpush1.msra.mxu0 0.0
    %1352 = vmatprep.subr.mxu0 0.0
    %1353 = vmatpush1.msra.mxu0 0.0
    %1354 = vmatprep.subr.mxu0 0.0
    %1355 = vmatpush1.msra.mxu0 0.0
    %1356 = vmatprep.subr.mxu0 0.0
    %1357 = vmatpush1.msra.mxu0 0.0
    %1358 = vmatprep.subr.mxu0 0.0
    %1359 = vmatpush1.msra.mxu0 0.0
    %1360 = vmatprep.subr.mxu0 0.0
    %1361 = vmatpush1.msra.mxu0 0.0
    %1362 = vmatprep.subr.mxu0 0.0
    %1363 = vmatpush1.msra.mxu0 0.0
    %1364 = vmatprep.subr.mxu0 0.0
    %1365 = vmatpush1.msra.mxu0 0.0
    %1366 = vmatprep.subr.mxu0 0.0
    %1367 = vmatpush1.msra.mxu0 0.0
    %1368 = vmatprep.subr.mxu0 0.0
    %1369 = vmatpush1.msra.mxu0 0.0
    %1370 = vmatprep.subr.mxu0 0.0
    %1371 = vmatpush1.msra.mxu0 0.0
    %1372 = vmatprep.subr.mxu0 0.0
    %1373 = vmatpush1.msra.mxu0 0.0
    %1374 = vmatprep.subr.mxu0 0.0
    %1375 = vmatpush1.msra.mxu0 0.0
    %1376 = vmatprep.subr.mxu0 0.0
    %1377 = vmatpush1.msra.mxu0 0.0
    %1378 = vmatprep.subr.mxu0 0.0
    %1379 = vmatpush1.msra.mxu0 0.0
    %1380 = vmatprep.subr.mxu0 0.0
    %1381 = vmatpush1.msra.mxu0 0.0
    %1382 = vmatprep.subr.mxu0 0.0
    %1383 = vmatpush1.msra.mxu0 0.0
    %1384 = vmatprep.subr.mxu0 0.0
    %1385 = vmatpush1.msra.mxu0 0.0
    %1386 = vmatprep.subr.mxu0 0.0
    %1387 = vmatpush1.msra.mxu0 0.0
    %1388 = vmatprep.mubr.f32.mxu0 0.0
    %1389 = vmatmul.mubr.f32.gmra.mrb[0].mxu0 %v1319
    %v1390 = vpop.f32.mrb[0].mxu0
    %v1391 = vadd.f32 0.0, %v1390
    %v1392 = vpop.f32.mrb[0].mxu0
    %1393 = vmatprep.mubr.f32.mxu0 0.0
    %1394 = vmatmul.mubr.f32.gmra.mrb[0].mxu0 %v1322
    %v1395 = vpop.f32.mrb[0].mxu0
    %v1396 = vadd.f32 0.0, %v1395
    %v1397 = vpop.f32.mrb[0].mxu0
    %1398 = vdwg.mxu0
    %v1400 = vsel %vm1229, %v1312, 0
    %v1403 = vsel %vm1229, %v1313, 0
    %1405 = vmatprep.subr.mxu0 0.0
    %1406 = vmatpush1.msra.mxu0 %v828
    %1407 = vmatprep.subr.mxu0 0.0
    %1408 = vmatpush1.msra.mxu0 %v834
    %1409 = vmatprep.subr.mxu0 0.0
    %1410 = vmatpush1.msra.mxu0 0.0
    %1411 = vmatprep.subr.mxu0 0.0
    %1412 = vmatpush1.msra.mxu0 0.0
    %1413 = vmatprep.subr.mxu0 0.0
    %1414 = vmatpush1.msra.mxu0 0.0
    %1415 = vmatprep.subr.mxu0 0.0
    %1416 = vmatpush1.msra.mxu0 0.0
    %1417 = vmatprep.subr.mxu0 0.0
    %1418 = vmatpush1.msra.mxu0 0.0
    %1419 = vmatprep.subr.mxu0 0.0
    %1420 = vmatpush1.msra.mxu0 0.0
    %1421 = vmatprep.subr.mxu0 0.0
    %1422 = vmatpush1.msra.mxu0 0.0
    %1423 = vmatprep.subr.mxu0 0.0
    %1424 = vmatpush1.msra.mxu0 0.0
    %1425 = vmatprep.subr.mxu0 0.0
    %1426 = vmatpush1.msra.mxu0 0.0
    %1427 = vmatprep.subr.mxu0 0.0
    %1428 = vmatpush1.msra.mxu0 0.0
    %1429 = vmatprep.subr.mxu0 0.0
    %1430 = vmatpush1.msra.mxu0 0.0
    %1431 = vmatprep.subr.mxu0 0.0
    %1432 = vmatpush1.msra.mxu0 0.0
    %1433 = vmatprep.subr.mxu0 0.0
    %1434 = vmatpush1.msra.mxu0 0.0
    %1435 = vmatprep.subr.mxu0 0.0
    %1436 = vmatpush1.msra.mxu0 0.0
    %1437 = vmatprep.subr.mxu0 0.0
    %1438 = vmatpush1.msra.mxu0 0.0
    %1439 = vmatprep.subr.mxu0 0.0
    %1440 = vmatpush1.msra.mxu0 0.0
    %1441 = vmatprep.subr.mxu0 0.0
    %1442 = vmatpush1.msra.mxu0 0.0
    %1443 = vmatprep.subr.mxu0 0.0
    %1444 = vmatpush1.msra.mxu0 0.0
    %1445 = vmatprep.subr.mxu0 0.0
    %1446 = vmatpush1.msra.mxu0 0.0
    %1447 = vmatprep.subr.mxu0 0.0
    %1448 = vmatpush1.msra.mxu0 0.0
    %1449 = vmatprep.subr.mxu0 0.0
    %1450 = vmatpush1.msra.mxu0 0.0
    %1451 = vmatprep.subr.mxu0 0.0
    %1452 = vmatpush1.msra.mxu0 0.0
    %1453 = vmatprep.subr.mxu0 0.0
    %1454 = vmatpush1.msra.mxu0 0.0
    %1455 = vmatprep.subr.mxu0 0.0
    %1456 = vmatpush1.msra.mxu0 0.0
    %1457 = vmatprep.subr.mxu0 0.0
    %1458 = vmatpush1.msra.mxu0 0.0
    %1459 = vmatprep.subr.mxu0 0.0
    %1460 = vmatpush1.msra.mxu0 0.0
    %1461 = vmatprep.subr.mxu0 0.0
    %1462 = vmatpush1.msra.mxu0 0.0
    %1463 = vmatprep.subr.mxu0 0.0
    %1464 = vmatpush1.msra.mxu0 0.0
    %1465 = vmatprep.subr.mxu0 0.0
    %1466 = vmatpush1.msra.mxu0 0.0
    %1467 = vmatprep.subr.mxu0 0.0
    %1468 = vmatpush1.msra.mxu0 0.0
    %1469 = vmatprep.mubr.f32.mxu0 0.0
    %1470 = vmatmul.mubr.f32.gmra.mrb[0].mxu0 %v1400
    %v1471 = vpop.f32.mrb[0].mxu0
    %v1472 = vadd.f32 0.0, %v1471
    %v1473 = vpop.f32.mrb[0].mxu0
    %1474 = vmatprep.mubr.f32.mxu0 0.0
    %1475 = vmatmul.mubr.f32.gmra.mrb[0].mxu0 %v1403
    %v1476 = vpop.f32.mrb[0].mxu0
    %v1477 = vadd.f32 0.0, %v1476
    %v1478 = vpop.f32.mrb[0].mxu0
    %1479 = vdwg.mxu0
    %v1481 = vsel %vm1229, %v1314, 0
    %v1484 = vsel %vm1229, %v1315, 0
    %1486 = vmatprep.subr.mxu0 0.0
    %1487 = vmatpush1.msra.mxu0 %v903
    %1488 = vmatprep.subr.mxu0 0.0
    %1489 = vmatpush1.msra.mxu0 %v909
    %1490 = vmatprep.subr.mxu0 0.0
    %1491 = vmatpush1.msra.mxu0 0.0
    %1492 = vmatprep.subr.mxu0 0.0
    %1493 = vmatpush1.msra.mxu0 0.0
    %1494 = vmatprep.subr.mxu0 0.0
    %1495 = vmatpush1.msra.mxu0 0.0
    %1496 = vmatprep.subr.mxu0 0.0
    %1497 = vmatpush1.msra.mxu0 0.0
    %1498 = vmatprep.subr.mxu0 0.0
    %1499 = vmatpush1.msra.mxu0 0.0
    %1500 = vmatprep.subr.mxu0 0.0
    %1501 = vmatpush1.msra.mxu0 0.0
    %1502 = vmatprep.subr.mxu0 0.0
    %1503 = vmatpush1.msra.mxu0 0.0
    %1504 = vmatprep.subr.mxu0 0.0
    %1505 = vmatpush1.msra.mxu0 0.0
    %1506 = vmatprep.subr.mxu0 0.0
    %1507 = vmatpush1.msra.mxu0 0.0
    %1508 = vmatprep.subr.mxu0 0.0
    %1509 = vmatpush1.msra.mxu0 0.0
    %1510 = vmatprep.subr.mxu0 0.0
    %1511 = vmatpush1.msra.mxu0 0.0
    %1512 = vmatprep.subr.mxu0 0.0
    %1513 = vmatpush1.msra.mxu0 0.0
    %1514 = vmatprep.subr.mxu0 0.0
    %1515 = vmatpush1.msra.mxu0 0.0
    %1516 = vmatprep.subr.mxu0 0.0
    %1517 = vmatpush1.msra.mxu0 0.0
    %1518 = vmatprep.subr.mxu0 0.0
    %1519 = vmatpush1.msra.mxu0 0.0
    %1520 = vmatprep.subr.mxu0 0.0
    %1521 = vmatpush1.msra.mxu0 0.0
    %1522 = vmatprep.subr.mxu0 0.0
    %1523 = vmatpush1.msra.mxu0 0.0
    %1524 = vmatprep.subr.mxu0 0.0
    %1525 = vmatpush1.msra.mxu0 0.0
    %1526 = vmatprep.subr.mxu0 0.0
    %1527 = vmatpush1.msra.mxu0 0.0
    %1528 = vmatprep.subr.mxu0 0.0
    %1529 = vmatpush1.msra.mxu0 0.0
    %1530 = vmatprep.subr.mxu0 0.0
    %1531 = vmatpush1.msra.mxu0 0.0
    %1532 = vmatprep.subr.mxu0 0.0
    %1533 = vmatpush1.msra.mxu0 0.0
    %1534 = vmatprep.subr.mxu0 0.0
    %1535 = vmatpush1.msra.mxu0 0.0
    %1536 = vmatprep.subr.mxu0 0.0
    %1537 = vmatpush1.msra.mxu0 0.0
    %1538 = vmatprep.subr.mxu0 0.0
    %1539 = vmatpush1.msra.mxu0 0.0
    %1540 = vmatprep.subr.mxu0 0.0
    %1541 = vmatpush1.msra.mxu0 0.0
    %1542 = vmatprep.subr.mxu0 0.0
    %1543 = vmatpush1.msra.mxu0 0.0
    %1544 = vmatprep.subr.mxu0 0.0
    %1545 = vmatpush1.msra.mxu0 0.0
    %1546 = vmatprep.subr.mxu0 0.0
    %1547 = vmatpush1.msra.mxu0 0.0
    %1548 = vmatprep.subr.mxu0 0.0
    %1549 = vmatpush1.msra.mxu0 0.0
    %1550 = vmatprep.mubr.f32.mxu0 0.0
    %1551 = vmatmul.mubr.f32.gmra.mrb[0].mxu0 %v1481
    %v1552 = vpop.f32.mrb[0].mxu0
    %v1553 = vadd.f32 0.0, %v1552
    %v1554 = vpop.f32.mrb[0].mxu0
    %1555 = vmatprep.mubr.f32.mxu0 0.0
    %1556 = vmatmul.mubr.f32.gmra.mrb[0].mxu0 %v1484
    %v1557 = vpop.f32.mrb[0].mxu0
    %v1558 = vadd.f32 0.0, %v1557
    %v1559 = vpop.f32.mrb[0].mxu0
    %1560 = vdwg.mxu0
    %v1562 = vsel %vm1229, %v1316, 0
    %v1565 = vsel %vm1229, %v1317, 0
    %1567 = vmatprep.subr.mxu0 0.0
    %1568 = vmatpush1.msra.mxu0 %v905
    %1569 = vmatprep.subr.mxu0 0.0
    %1570 = vmatpush1.msra.mxu0 %v911
    %1571 = vmatprep.subr.mxu0 0.0
    %1572 = vmatpush1.msra.mxu0 0.0
    %1573 = vmatprep.subr.mxu0 0.0
    %1574 = vmatpush1.msra.mxu0 0.0
    %1575 = vmatprep.subr.mxu0 0.0
    %1576 = vmatpush1.msra.mxu0 0.0
    %1577 = vmatprep.subr.mxu0 0.0
    %1578 = vmatpush1.msra.mxu0 0.0
    %1579 = vmatprep.subr.mxu0 0.0
    %1580 = vmatpush1.msra.mxu0 0.0
    %1581 = vmatprep.subr.mxu0 0.0
    %1582 = vmatpush1.msra.mxu0 0.0
    %1583 = vmatprep.subr.mxu0 0.0
    %1584 = vmatpush1.msra.mxu0 0.0
    %1585 = vmatprep.subr.mxu0 0.0
    %1586 = vmatpush1.msra.mxu0 0.0
    %1587 = vmatprep.subr.mxu0 0.0
    %1588 = vmatpush1.msra.mxu0 0.0
    %1589 = vmatprep.subr.mxu0 0.0
    %1590 = vmatpush1.msra.mxu0 0.0
    %1591 = vmatprep.subr.mxu0 0.0
    %1592 = vmatpush1.msra.mxu0 0.0
    %1593 = vmatprep.subr.mxu0 0.0
    %1594 = vmatpush1.msra.mxu0 0.0
    %1595 = vmatprep.subr.mxu0 0.0
    %1596 = vmatpush1.msra.mxu0 0.0
    %1597 = vmatprep.subr.mxu0 0.0
    %1598 = vmatpush1.msra.mxu0 0.0
    %1599 = vmatprep.subr.mxu0 0.0
    %1600 = vmatpush1.msra.mxu0 0.0
    %1601 = vmatprep.subr.mxu0 0.0
    %1602 = vmatpush1.msra.mxu0 0.0
    %1603 = vmatprep.subr.mxu0 0.0
    %1604 = vmatpush1.msra.mxu0 0.0
    %1605 = vmatprep.subr.mxu0 0.0
    %1606 = vmatpush1.msra.mxu0 0.0
    %1607 = vmatprep.subr.mxu0 0.0
    %1608 = vmatpush1.msra.mxu0 0.0
    %1609 = vmatprep.subr.mxu0 0.0
    %1610 = vmatpush1.msra.mxu0 0.0
    %1611 = vmatprep.subr.mxu0 0.0
    %1612 = vmatpush1.msra.mxu0 0.0
    %1613 = vmatprep.subr.mxu0 0.0
    %1614 = vmatpush1.msra.mxu0 0.0
    %1615 = vmatprep.subr.mxu0 0.0
    %1616 = vmatpush1.msra.mxu0 0.0
    %1617 = vmatprep.subr.mxu0 0.0
    %1618 = vmatpush1.msra.mxu0 0.0
    %1619 = vmatprep.subr.mxu0 0.0
    %1620 = vmatpush1.msra.mxu0 0.0
    %1621 = vmatprep.subr.mxu0 0.0
    %1622 = vmatpush1.msra.mxu0 0.0
    %1623 = vmatprep.subr.mxu0 0.0
    %1624 = vmatpush1.msra.mxu0 0.0
    %1625 = vmatprep.subr.mxu0 0.0
    %1626 = vmatpush1.msra.mxu0 0.0
    %1627 = vmatprep.subr.mxu0 0.0
    %1628 = vmatpush1.msra.mxu0 0.0
    %1629 = vmatprep.subr.mxu0 0.0
    %1630 = vmatpush1.msra.mxu0 0.0
    %1631 = vmatprep.mubr.f32.mxu0 0.0
    %1632 = vmatmul.mubr.f32.gmra.mrb[0].mxu0 %v1562
    %v1633 = vpop.f32.mrb[0].mxu0
    %v1634 = vadd.f32 0.0, %v1633
    %v1635 = vpop.f32.mrb[0].mxu0
    %1636 = vmatprep.mubr.f32.mxu0 0.0
    %1637 = vmatmul.mubr.f32.gmra.mrb[0].mxu0 %v1565
    %v1638 = vpop.f32.mrb[0].mxu0
    %v1639 = vadd.f32 0.0, %v1638
    %v1640 = vpop.f32.mrb[0].mxu0
    %1641 = vdwg.mxu0
    %v1642 = vld [vmem:[#allocation7] sm:$0xff]
    %v1643 = vld [vmem:[#allocation7 + $0x8] sm:$0xff]
    %v1644 = vld [vmem:[#allocation7 + $0x10] sm:$0xff]
    %v1645 = vld [vmem:[#allocation7 + $0x18] sm:$0xff]
    %v1646 = vld [vmem:[#allocation7 + $0x20] sm:$0xff]
    %v1647 = vld [vmem:[#allocation7 + $0x28] sm:$0xff]
    %v1648 = vld [vmem:[#allocation7 + $0x30] sm:$0xff]
    %v1649 = vld [vmem:[#allocation7 + $0x38] sm:$0xff]
    %v1650 = vld [vmem:[#allocation7 + $0x40] sm:$0xff]
    %v1651 = vld [vmem:[#allocation7 + $0x48] sm:$0xff]
    %v1652 = vld [vmem:[#allocation7 + $0x50] sm:$0xff]
    %v1653 = vld [vmem:[#allocation7 + $0x58] sm:$0xff]
    %v1654 = vld [vmem:[#allocation7 + $0x60] sm:$0xff]
    %v1655 = vld [vmem:[#allocation7 + $0x68] sm:$0xff]
    %v1656 = vld [vmem:[#allocation7 + $0x70] sm:$0xff]
    %v1657 = vld [vmem:[#allocation7 + $0x78] sm:$0xff]
    %v1658 = vld [vmem:[#allocation7 + $0x80] sm:$0xff]
    %v1659 = vld [vmem:[#allocation7 + $0x88] sm:$0xff]
    %v1660 = vld [vmem:[#allocation7 + $0x90] sm:$0xff]
    %v1661 = vld [vmem:[#allocation7 + $0x98] sm:$0xff]
    %v1662 = vld [vmem:[#allocation7 + $0xa0] sm:$0xff]
    %v1663 = vld [vmem:[#allocation7 + $0xa8] sm:$0xff]
    %v1664 = vld [vmem:[#allocation7 + $0xb0] sm:$0xff]
    %v1665 = vld [vmem:[#allocation7 + $0xb8] sm:$0xff]
    %v1666 = vld [vmem:[#allocation7 + $0xc0] sm:$0xff]
    %v1667 = vld [vmem:[#allocation7 + $0xc8] sm:$0xff]
    %v1668 = vld [vmem:[#allocation7 + $0xd0] sm:$0xff]
    %v1669 = vld [vmem:[#allocation7 + $0xd8] sm:$0xff]
    %v1670 = vld [vmem:[#allocation7 + $0xe0] sm:$0xff]
    %v1671 = vld [vmem:[#allocation7 + $0xe8] sm:$0xff]
    %v1672 = vld [vmem:[#allocation7 + $0xf0] sm:$0xff]
    %v1673 = vld [vmem:[#allocation7 + $0xf8] sm:$0xff]
    %v1674 = vld [vmem:[#allocation7 + $0x100] sm:$0xff]
    %v1675 = vld [vmem:[#allocation7 + $0x108] sm:$0xff]
    %v1676 = vld [vmem:[#allocation7 + $0x110] sm:$0xff]
    %v1677 = vld [vmem:[#allocation7 + $0x118] sm:$0xff]
    %v1678 = vld [vmem:[#allocation7 + $0x120] sm:$0xff]
    %v1679 = vld [vmem:[#allocation7 + $0x128] sm:$0xff]
    %v1680 = vld [vmem:[#allocation7 + $0x130] sm:$0xff]
    %v1681 = vld [vmem:[#allocation7 + $0x138] sm:$0xff]
    %v1682 = vld [vmem:[#allocation7 + $0x140] sm:$0xff]
    %v1683 = vld [vmem:[#allocation7 + $0x148] sm:$0xff]
    %v1684 = vld [vmem:[#allocation7 + $0x150] sm:$0xff]
    %v1685 = vld [vmem:[#allocation7 + $0x158] sm:$0xff]
    %v1686 = vld [vmem:[#allocation7 + $0x160] sm:$0xff]
    %v1687 = vld [vmem:[#allocation7 + $0x168] sm:$0xff]
    %v1688 = vld [vmem:[#allocation7 + $0x170] sm:$0xff]
    %v1689 = vld [vmem:[#allocation7 + $0x178] sm:$0xff]
    %v1690 = vld [vmem:[#allocation7 + $0x180] sm:$0xff]
    %v1691 = vld [vmem:[#allocation7 + $0x188] sm:$0xff]
    %v1692 = vld [vmem:[#allocation7 + $0x190] sm:$0xff]
    %v1693 = vld [vmem:[#allocation7 + $0x198] sm:$0xff]
    %v1694 = vld [vmem:[#allocation7 + $0x1a0] sm:$0xff]
    %v1695 = vld [vmem:[#allocation7 + $0x1a8] sm:$0xff]
    %v1696 = vld [vmem:[#allocation7 + $0x1b0] sm:$0xff]
    %v1697 = vld [vmem:[#allocation7 + $0x1b8] sm:$0xff]
    %v1698 = vld [vmem:[#allocation7 + $0x1c0] sm:$0xff]
    %v1699 = vld [vmem:[#allocation7 + $0x1c8] sm:$0xff]
    %v1700 = vld [vmem:[#allocation7 + $0x1d0] sm:$0xff]
    %v1701 = vld [vmem:[#allocation7 + $0x1d8] sm:$0xff]
    %v1702 = vld [vmem:[#allocation7 + $0x1e0] sm:$0xff]
    %v1703 = vld [vmem:[#allocation7 + $0x1e8] sm:$0xff]
    %v1704 = vld [vmem:[#allocation7 + $0x1f0] sm:$0xff]
    %v1705 = vld [vmem:[#allocation7 + $0x1f8] sm:$0xff]
    %v1706 = vlaneseq
    %v1707 = vshrl.u32 %v1706, 7
    %v1708 = vsub.s32 0, %v1707
    %v1709 = vrot.slane %v194, %v1708
    %1710 = vmatprep.subr.mxu0 0.0
    %1711 = vmatpush1.msra.mxu0 %v1642
    %1712 = vmatprep.subr.mxu0 0.0
    %1713 = vmatpush1.msra.mxu0 %v1643
    %1714 = vmatprep.subr.mxu0 0.0
    %1715 = vmatpush1.msra.mxu0 %v1644
    %1716 = vmatprep.subr.mxu0 0.0
    %1717 = vmatpush1.msra.mxu0 %v1645
    %1718 = vmatprep.subr.mxu0 0.0
    %1719 = vmatpush1.msra.mxu0 %v1646
    %1720 = vmatprep.subr.mxu0 0.0
    %1721 = vmatpush1.msra.mxu0 %v1647
    %1722 = vmatprep.subr.mxu0 0.0
    %1723 = vmatpush1.msra.mxu0 %v1648
    %1724 = vmatprep.subr.mxu0 0.0
    %1725 = vmatpush1.msra.mxu0 %v1649
    %1726 = vmatprep.subr.mxu0 0.0
    %1727 = vmatpush1.msra.mxu0 %v1650
    %1728 = vmatprep.subr.mxu0 0.0
    %1729 = vmatpush1.msra.mxu0 %v1651
    %1730 = vmatprep.subr.mxu0 0.0
    %1731 = vmatpush1.msra.mxu0 %v1652
    %1732 = vmatprep.subr.mxu0 0.0
    %1733 = vmatpush1.msra.mxu0 %v1653
    %1734 = vmatprep.subr.mxu0 0.0
    %1735 = vmatpush1.msra.mxu0 %v1654
    %1736 = vmatprep.subr.mxu0 0.0
    %1737 = vmatpush1.msra.mxu0 %v1655
    %1738 = vmatprep.subr.mxu0 0.0
    %1739 = vmatpush1.msra.mxu0 %v1656
    %1740 = vmatprep.subr.mxu0 0.0
    %1741 = vmatpush1.msra.mxu0 %v1657
    %1742 = vmatprep.subr.mxu0 0.0
    %1743 = vmatpush1.msra.mxu0 %v1658
    %1744 = vmatprep.subr.mxu0 0.0
    %1745 = vmatpush1.msra.mxu0 %v1659
    %1746 = vmatprep.subr.mxu0 0.0
    %1747 = vmatpush1.msra.mxu0 %v1660
    %1748 = vmatprep.subr.mxu0 0.0
    %1749 = vmatpush1.msra.mxu0 %v1661
    %1750 = vmatprep.subr.mxu0 0.0
    %1751 = vmatpush1.msra.mxu0 %v1662
    %1752 = vmatprep.subr.mxu0 0.0
    %1753 = vmatpush1.msra.mxu0 %v1663
    %1754 = vmatprep.subr.mxu0 0.0
    %1755 = vmatpush1.msra.mxu0 %v1664
    %1756 = vmatprep.subr.mxu0 0.0
    %1757 = vmatpush1.msra.mxu0 %v1665
    %1758 = vmatprep.subr.mxu0 0.0
    %1759 = vmatpush1.msra.mxu0 %v1666
    %1760 = vmatprep.subr.mxu0 0.0
    %1761 = vmatpush1.msra.mxu0 %v1667
    %1762 = vmatprep.subr.mxu0 0.0
    %1763 = vmatpush1.msra.mxu0 %v1668
    %1764 = vmatprep.subr.mxu0 0.0
    %1765 = vmatpush1.msra.mxu0 %v1669
    %1766 = vmatprep.subr.mxu0 0.0
    %1767 = vmatpush1.msra.mxu0 %v1670
    %1768 = vmatprep.subr.mxu0 0.0
    %1769 = vmatpush1.msra.mxu0 %v1671
    %1770 = vmatprep.subr.mxu0 0.0
    %1771 = vmatpush1.msra.mxu0 %v1672
    %1772 = vmatprep.subr.mxu0 0.0
    %1773 = vmatpush1.msra.mxu0 %v1673
    %1774 = vmatprep.mubr.f32.mxu0 %v1472
    %1775 = vmatmul.mubr.f32.gmra.mrb[0].mxu0 %v1391
    %v1776 = vpop.f32.mrb[0].mxu0
    %v1777 = vadd.f32 %v1709, %v1776
    %v1778 = vpop.f32.mrb[0].mxu0
    %1779 = vmatprep.mubr.f32.mxu0 %v1477
    %1780 = vmatmul.mubr.f32.gmra.mrb[0].mxu0 %v1396
    %v1781 = vpop.f32.mrb[0].mxu0
    %v1782 = vadd.f32 %v1709, %v1781
    %v1783 = vpop.f32.mrb[0].mxu0
    %1784 = vdwg.mxu0
    %1785 = vmatprep.subr.mxu0 0.0
    %1786 = vmatpush1.msra.mxu0 %v1674
    %1787 = vmatprep.subr.mxu0 0.0
    %1788 = vmatpush1.msra.mxu0 %v1675
    %1789 = vmatprep.subr.mxu0 0.0
    %1790 = vmatpush1.msra.mxu0 %v1676
    %1791 = vmatprep.subr.mxu0 0.0
    %1792 = vmatpush1.msra.mxu0 %v1677
    %1793 = vmatprep.subr.mxu0 0.0
    %1794 = vmatpush1.msra.mxu0 %v1678
    %1795 = vmatprep.subr.mxu0 0.0
    %1796 = vmatpush1.msra.mxu0 %v1679
    %1797 = vmatprep.subr.mxu0 0.0
    %1798 = vmatpush1.msra.mxu0 %v1680
    %1799 = vmatprep.subr.mxu0 0.0
    %1800 = vmatpush1.msra.mxu0 %v1681
    %1801 = vmatprep.subr.mxu0 0.0
    %1802 = vmatpush1.msra.mxu0 %v1682
    %1803 = vmatprep.subr.mxu0 0.0
    %1804 = vmatpush1.msra.mxu0 %v1683
    %1805 = vmatprep.subr.mxu0 0.0
    %1806 = vmatpush1.msra.mxu0 %v1684
    %1807 = vmatprep.subr.mxu0 0.0
    %1808 = vmatpush1.msra.mxu0 %v1685
    %1809 = vmatprep.subr.mxu0 0.0
    %1810 = vmatpush1.msra.mxu0 %v1686
    %1811 = vmatprep.subr.mxu0 0.0
    %1812 = vmatpush1.msra.mxu0 %v1687
    %1813 = vmatprep.subr.mxu0 0.0
    %1814 = vmatpush1.msra.mxu0 %v1688
    %1815 = vmatprep.subr.mxu0 0.0
    %1816 = vmatpush1.msra.mxu0 %v1689
    %1817 = vmatprep.subr.mxu0 0.0
    %1818 = vmatpush1.msra.mxu0 %v1690
    %1819 = vmatprep.subr.mxu0 0.0
    %1820 = vmatpush1.msra.mxu0 %v1691
    %1821 = vmatprep.subr.mxu0 0.0
    %1822 = vmatpush1.msra.mxu0 %v1692
    %1823 = vmatprep.subr.mxu0 0.0
    %1824 = vmatpush1.msra.mxu0 %v1693
    %1825 = vmatprep.subr.mxu0 0.0
    %1826 = vmatpush1.msra.mxu0 %v1694
    %1827 = vmatprep.subr.mxu0 0.0
    %1828 = vmatpush1.msra.mxu0 %v1695
    %1829 = vmatprep.subr.mxu0 0.0
    %1830 = vmatpush1.msra.mxu0 %v1696
    %1831 = vmatprep.subr.mxu0 0.0
    %1832 = vmatpush1.msra.mxu0 %v1697
    %1833 = vmatprep.subr.mxu0 0.0
    %1834 = vmatpush1.msra.mxu0 %v1698
    %1835 = vmatprep.subr.mxu0 0.0
    %1836 = vmatpush1.msra.mxu0 %v1699
    %1837 = vmatprep.subr.mxu0 0.0
    %1838 = vmatpush1.msra.mxu0 %v1700
    %1839 = vmatprep.subr.mxu0 0.0
    %1840 = vmatpush1.msra.mxu0 %v1701
    %1841 = vmatprep.subr.mxu0 0.0
    %1842 = vmatpush1.msra.mxu0 %v1702
    %1843 = vmatprep.subr.mxu0 0.0
    %1844 = vmatpush1.msra.mxu0 %v1703
    %1845 = vmatprep.subr.mxu0 0.0
    %1846 = vmatpush1.msra.mxu0 %v1704
    %1847 = vmatprep.subr.mxu0 0.0
    %1848 = vmatpush1.msra.mxu0 %v1705
    %1849 = vmatprep.mubr.f32.mxu0 %v1634
    %1850 = vmatmul.mubr.f32.gmra.mrb[0].mxu0 %v1553
    %v1851 = vpop.f32.mrb[0].mxu0
    %v1852 = vadd.f32 %v1777, %v1851
    %v1853 = vpop.f32.mrb[0].mxu0
    %1854 = vmatprep.mubr.f32.mxu0 %v1639
    %1855 = vmatmul.mubr.f32.gmra.mrb[0].mxu0 %v1558
    %v1856 = vpop.f32.mrb[0].mxu0
    %v1857 = vadd.f32 %v1782, %v1856
    %v1858 = vpop.f32.mrb[0].mxu0
    %1859 = vdwg.mxu0
    %v1860 = vadd.f32 %v192, %v1852
    %v1861 = vadd.f32 %v193, %v1857
    %1862 = vadd.xlane.f32.xlu0 %v1860
    %v1863 = vpop.xlane.xlu0 %1862
    %1864 = vadd.xlane.f32.xlu0 %v1861
    %v1865 = vpop.xlane.xlu0 %1864
    %v1866 = vmul.f32 %v1863, 0.03125
    %v1867 = vmul.f32 %v1865, 0.03125
    %v1868 = vmul.f32 %v1860, %v1860
    %v1869 = vmul.f32 %v1861, %v1861
    %1870 = vadd.xlane.f32.xlu0 %v1868
    %v1871 = vpop.xlane.xlu0 %1870
    %1872 = vadd.xlane.f32.xlu0 %v1869
    %v1873 = vpop.xlane.xlu0 %1872
    %v1874 = vmul.f32 %v1871, 0.03125
    %v1875 = vmul.f32 %v1873, 0.03125
    %v1876 = vmul.f32 %v1866, %v1866
    %v1877 = vmul.f32 %v1867, %v1867
    %v1878 = vsub.f32 %v1874, %v1876
    %v1879 = vsub.f32 %v1875, %v1877
    %v1880 = vmax.f32 %v1878, 0.0
    %v1881 = vmax.f32 %v1879, 0.0
    %v1882 = vsub.f32 %v1860, %v1866
    %v1883 = vsub.f32 %v1861, %v1867
    %v1884 = vadd.f32 %v1880, 1e-12
    %v1885 = vadd.f32 %v1881, 1e-12
    %v1886 = vrsqrt.pop %v1884
    %v1887 = vrsqrt.pop %v1885
    %v1888 = vmul.f32 %v1882, %v1886
    %v1889 = vmul.f32 %v1883, %v1887
    %v1890 = vlaneseq
    %v1891 = vshrl.u32 %v1890, 7
    %v1892 = vsub.s32 3, %v1891
    %v1893 = vrot.slane %v194, %v1892
    %v1894 = vmul.f32 %v1888, %v1893
    %v1895 = vmul.f32 %v1889, %v1893
    %v1896 = vlaneseq
    %v1897 = vshrl.u32 %v1896, 7
    %v1898 = vsub.s32 4, %v1897
    %v1899 = vrot.slane %v194, %v1898
    %v1900 = vadd.f32 %v1894, %v1899
    %v1901 = vadd.f32 %v1895, %v1899
    %v1902 = vld [vmem:[#allocation8] sm:$0xff]
    %v1903 = vld [vmem:[#allocation8 + $0x8] sm:$0xff]
    %v1904 = vld [vmem:[#allocation8 + $0x10] sm:$0xff]
    %v1905 = vld [vmem:[#allocation8 + $0x18] sm:$0xff]
    %v1906 = vld [vmem:[#allocation8 + $0x20] sm:$0xff]
    %v1907 = vld [vmem:[#allocation8 + $0x28] sm:$0xff]
    %v1908 = vld [vmem:[#allocation8 + $0x30] sm:$0xff]
    %v1909 = vld [vmem:[#allocation8 + $0x38] sm:$0xff]
    %v1910 = vld [vmem:[#allocation8 + $0x40] sm:$0xff]
    %v1911 = vld [vmem:[#allocation8 + $0x48] sm:$0xff]
    %v1912 = vld [vmem:[#allocation8 + $0x50] sm:$0xff]
    %v1913 = vld [vmem:[#allocation8 + $0x58] sm:$0xff]
    %v1914 = vld [vmem:[#allocation8 + $0x60] sm:$0xff]
    %v1915 = vld [vmem:[#allocation8 + $0x68] sm:$0xff]
    %v1916 = vld [vmem:[#allocation8 + $0x70] sm:$0xff]
    %v1917 = vld [vmem:[#allocation8 + $0x78] sm:$0xff]
    %v1918 = vlaneseq
    %v1919 = vshrl.u32 %v1918, 7
    %v1920 = vsub.s32 1, %v1919
    %v1921 = vrot.slane %v194, %v1920
    %1922 = vmatprep.subr.mxu0 0.0
    %1923 = vmatpush1.msra.mxu0 %v1902
    %1924 = vmatprep.subr.mxu0 0.0
    %1925 = vmatpush1.msra.mxu0 %v1903
    %1926 = vmatprep.subr.mxu0 0.0
    %1927 = vmatpush1.msra.mxu0 %v1904
    %1928 = vmatprep.subr.mxu0 0.0
    %1929 = vmatpush1.msra.mxu0 %v1905
    %1930 = vmatprep.subr.mxu0 0.0
    %1931 = vmatpush1.msra.mxu0 %v1906
    %1932 = vmatprep.subr.mxu0 0.0
    %1933 = vmatpush1.msra.mxu0 %v1907
    %1934 = vmatprep.subr.mxu0 0.0
    %1935 = vmatpush1.msra.mxu0 %v1908
    %1936 = vmatprep.subr.mxu0 0.0
    %1937 = vmatpush1.msra.mxu0 %v1909
    %1938 = vmatprep.subr.mxu0 0.0
    %1939 = vmatpush1.msra.mxu0 %v1910
    %1940 = vmatprep.subr.mxu0 0.0
    %1941 = vmatpush1.msra.mxu0 %v1911
    %1942 = vmatprep.subr.mxu0 0.0
    %1943 = vmatpush1.msra.mxu0 %v1912
    %1944 = vmatprep.subr.mxu0 0.0
    %1945 = vmatpush1.msra.mxu0 %v1913
    %1946 = vmatprep.subr.mxu0 0.0
    %1947 = vmatpush1.msra.mxu0 %v1914
    %1948 = vmatprep.subr.mxu0 0.0
    %1949 = vmatpush1.msra.mxu0 %v1915
    %1950 = vmatprep.subr.mxu0 0.0
    %1951 = vmatpush1.msra.mxu0 %v1916
    %1952 = vmatprep.subr.mxu0 0.0
    %1953 = vmatpush1.msra.mxu0 %v1917
    %1954 = vmatprep.subr.mxu0 0.0
    %1955 = vmatpush1.msra.mxu0 0.0
    %1956 = vmatprep.subr.mxu0 0.0
    %1957 = vmatpush1.msra.mxu0 0.0
    %1958 = vmatprep.subr.mxu0 0.0
    %1959 = vmatpush1.msra.mxu0 0.0
    %1960 = vmatprep.subr.mxu0 0.0
    %1961 = vmatpush1.msra.mxu0 0.0
    %1962 = vmatprep.subr.mxu0 0.0
    %1963 = vmatpush1.msra.mxu0 0.0
    %1964 = vmatprep.subr.mxu0 0.0
    %1965 = vmatpush1.msra.mxu0 0.0
    %1966 = vmatprep.subr.mxu0 0.0
    %1967 = vmatpush1.msra.mxu0 0.0
    %1968 = vmatprep.subr.mxu0 0.0
    %1969 = vmatpush1.msra.mxu0 0.0
    %1970 = vmatprep.subr.mxu0 0.0
    %1971 = vmatpush1.msra.mxu0 0.0
    %1972 = vmatprep.subr.mxu0 0.0
    %1973 = vmatpush1.msra.mxu0 0.0
    %1974 = vmatprep.subr.mxu0 0.0
    %1975 = vmatpush1.msra.mxu0 0.0
    %1976 = vmatprep.subr.mxu0 0.0
    %1977 = vmatpush1.msra.mxu0 0.0
    %1978 = vmatprep.subr.mxu0 0.0
    %1979 = vmatpush1.msra.mxu0 0.0
    %1980 = vmatprep.subr.mxu0 0.0
    %1981 = vmatpush1.msra.mxu0 0.0
    %1982 = vmatprep.subr.mxu0 0.0
    %1983 = vmatpush1.msra.mxu0 0.0
    %1984 = vmatprep.subr.mxu0 0.0
    %1985 = vmatpush1.msra.mxu0 0.0
    %1986 = vmatprep.mubr.f32.mxu0 0.0
    %1987 = vmatmul.mubr.f32.gmra.mrb[0].mxu0 %v1900
    %v1988 = vpop.f32.mrb[0].mxu0
    %v1989 = vadd.f32 %v1921, %v1988
    %v1990 = vpop.f32.mrb[0].mxu0
    %1991 = vmatprep.mubr.f32.mxu0 0.0
    %1992 = vmatmul.mubr.f32.gmra.mrb[0].mxu0 %v1901
    %v1993 = vpop.f32.mrb[0].mxu0
    %v1994 = vadd.f32 %v1921, %v1993
    %v1995 = vpop.f32.mrb[0].mxu0
    %1996 = vdwg.mxu0
    %v1997 = vmul.f32 %v1989, 0.5
    %v1998 = vmul.f32 %v1994, 0.5
    %v1999 = vmul.f32 %v1989, 0.044715
    %v2000 = vmul.f32 %v1994, 0.044715
    %v2001 = vmul.f32 %v1999, %v1989
    %v2002 = vmul.f32 %v2000, %v1994
    %v2003 = vmul.f32 %v2001, %v1989
    %v2004 = vmul.f32 %v2002, %v1994
    %v2005 = vadd.f32 %v1989, %v2003
    %v2006 = vadd.f32 %v1994, %v2004
    %v2007 = vmul.f32 %v2005, 0.7978846
    %v2008 = vmul.f32 %v2006, 0.7978846
    %v2009 = vtanh.pop %v2007
    %v2010 = vtanh.pop %v2008
    %v2011 = vadd.f32 %v2009, 1.0
    %v2012 = vadd.f32 %v2010, 1.0
    %v2013 = vmul.f32 %v1997, %v2011
    %v2014 = vmul.f32 %v1998, %v2012
    %v2015 = vld [vmem:[#allocation10] sm:$0xff]
    %v2016 = vld [vmem:[#allocation10 + $0x8] sm:$0xff]
    %v2017 = vld [vmem:[#allocation10 + $0x10] sm:$0xff]
    %v2018 = vld [vmem:[#allocation10 + $0x18] sm:$0xff]
    %v2019 = vld [vmem:[#allocation10 + $0x20] sm:$0xff]
    %v2020 = vld [vmem:[#allocation10 + $0x28] sm:$0xff]
    %v2021 = vld [vmem:[#allocation10 + $0x30] sm:$0xff]
    %v2022 = vld [vmem:[#allocation10 + $0x38] sm:$0xff]
    %v2023 = vld [vmem:[#allocation10 + $0x40] sm:$0xff]
    %v2024 = vld [vmem:[#allocation10 + $0x48] sm:$0xff]
    %v2025 = vld [vmem:[#allocation10 + $0x50] sm:$0xff]
    %v2026 = vld [vmem:[#allocation10 + $0x58] sm:$0xff]
    %v2027 = vld [vmem:[#allocation10 + $0x60] sm:$0xff]
    %v2028 = vld [vmem:[#allocation10 + $0x68] sm:$0xff]
    %v2029 = vld [vmem:[#allocation10 + $0x70] sm:$0xff]
    %v2030 = vld [vmem:[#allocation10 + $0x78] sm:$0xff]
    %v2031 = vlaneseq
    %v2032 = vshrl.u32 %v2031, 7
    %v2033 = vsub.s32 2, %v2032
    %v2034 = vrot.slane %v194, %v2033
    %2035 = vmatprep.subr.mxu0 0.0
    %2036 = vmatpush1.msra.mxu0 %v2015
    %2037 = vmatprep.subr.mxu0 0.0
    %2038 = vmatpush1.msra.mxu0 %v2016
    %2039 = vmatprep.subr.mxu0 0.0
    %2040 = vmatpush1.msra.mxu0 %v2017
    %2041 = vmatprep.subr.mxu0 0.0
    %2042 = vmatpush1.msra.mxu0 %v2018
    %2043 = vmatprep.subr.mxu0 0.0
    %2044 = vmatpush1.msra.mxu0 %v2019
    %2045 = vmatprep.subr.mxu0 0.0
    %2046 = vmatpush1.msra.mxu0 %v2020
    %2047 = vmatprep.subr.mxu0 0.0
    %2048 = vmatpush1.msra.mxu0 %v2021
    %2049 = vmatprep.subr.mxu0 0.0
    %2050 = vmatpush1.msra.mxu0 %v2022
    %2051 = vmatprep.subr.mxu0 0.0
    %2052 = vmatpush1.msra.mxu0 %v2023
    %2053 = vmatprep.subr.mxu0 0.0
    %2054 = vmatpush1.msra.mxu0 %v2024
    %2055 = vmatprep.subr.mxu0 0.0
    %2056 = vmatpush1.msra.mxu0 %v2025
    %2057 = vmatprep.subr.mxu0 0.0
    %2058 = vmatpush1.msra.mxu0 %v2026
    %2059 = vmatprep.subr.mxu0 0.0
    %2060 = vmatpush1.msra.mxu0 %v2027
    %2061 = vmatprep.subr.mxu0 0.0
    %2062 = vmatpush1.msra.mxu0 %v2028
    %2063 = vmatprep.subr.mxu0 0.0
    %2064 = vmatpush1.msra.mxu0 %v2029
    %2065 = vmatprep.subr.mxu0 0.0
    %2066 = vmatpush1.msra.mxu0 %v2030
    %2067 = vmatprep.subr.mxu0 0.0
    %2068 = vmatpush1.msra.mxu0 0.0
    %2069 = vmatprep.subr.mxu0 0.0
    %2070 = vmatpush1.msra.mxu0 0.0
    %2071 = vmatprep.subr.mxu0 0.0
    %2072 = vmatpush1.msra.mxu0 0.0
    %2073 = vmatprep.subr.mxu0 0.0
    %2074 = vmatpush1.msra.mxu0 0.0
    %2075 = vmatprep.subr.mxu0 0.0
    %2076 = vmatpush1.msra.mxu0 0.0
    %2077 = vmatprep.subr.mxu0 0.0
    %2078 = vmatpush1.msra.mxu0 0.0
    %2079 = vmatprep.subr.mxu0 0.0
    %2080 = vmatpush1.msra.mxu0 0.0
    %2081 = vmatprep.subr.mxu0 0.0
    %2082 = vmatpush1.msra.mxu0 0.0
    %2083 = vmatprep.subr.mxu0 0.0
    %2084 = vmatpush1.msra.mxu0 0.0
    %2085 = vmatprep.subr.mxu0 0.0
    %2086 = vmatpush1.msra.mxu0 0.0
    %2087 = vmatprep.subr.mxu0 0.0
    %2088 = vmatpush1.msra.mxu0 0.0
    %2089 = vmatprep.subr.mxu0 0.0
    %2090 = vmatpush1.msra.mxu0 0.0
    %2091 = vmatprep.subr.mxu0 0.0
    %2092 = vmatpush1.msra.mxu0 0.0
    %2093 = vmatprep.subr.mxu0 0.0
    %2094 = vmatpush1.msra.mxu0 0.0
    %2095 = vmatprep.subr.mxu0 0.0
    %2096 = vmatpush1.msra.mxu0 0.0
    %2097 = vmatprep.subr.mxu0 0.0
    %2098 = vmatpush1.msra.mxu0 0.0
    %2099 = vmatprep.mubr.f32.mxu0 0.0
    %2100 = vmatmul.mubr.f32.gmra.mrb[0].mxu0 %v2013
    %v2101 = vpop.f32.mrb[0].mxu0
    %v2102 = vadd.f32 %v2034, %v2101
    %v2103 = vpop.f32.mrb[0].mxu0
    %2104 = vmatprep.mubr.f32.mxu0 0.0
    %2105 = vmatmul.mubr.f32.gmra.mrb[0].mxu0 %v2014
    %v2106 = vpop.f32.mrb[0].mxu0
    %v2107 = vadd.f32 %v2034, %v2106
    %v2108 = vpop.f32.mrb[0].mxu0
    %2109 = vdwg.mxu0
    %v2110 = vadd.f32 %v1900, %v2102
    %v2111 = vadd.f32 %v1901, %v2107
    %2112 = vadd.xlane.f32.xlu0 %v2110
    %v2113 = vpop.xlane.xlu0 %2112
    %2114 = vadd.xlane.f32.xlu0 %v2111
    %v2115 = vpop.xlane.xlu0 %2114
    %v2116 = vmul.f32 %v2113, 0.03125
    %v2117 = vmul.f32 %v2115, 0.03125
    %v2118 = vmul.f32 %v2110, %v2110
    %v2119 = vmul.f32 %v2111, %v2111
    %2120 = vadd.xlane.f32.xlu0 %v2118
    %v2121 = vpop.xlane.xlu0 %2120
    %2122 = vadd.xlane.f32.xlu0 %v2119
    %v2123 = vpop.xlane.xlu0 %2122
    %v2124 = vmul.f32 %v2121, 0.03125
    %v2125 = vmul.f32 %v2123, 0.03125
    %v2126 = vmul.f32 %v2116, %v2116
    %v2127 = vmul.f32 %v2117, %v2117
    %v2128 = vsub.f32 %v2124, %v2126
    %v2129 = vsub.f32 %v2125, %v2127
    %v2130 = vmax.f32 %v2128, 0.0
    %v2131 = vmax.f32 %v2129, 0.0
    %v2132 = vsub.f32 %v2110, %v2116
    %v2133 = vsub.f32 %v2111, %v2117
    %v2134 = vadd.f32 %v2130, 1e-12
    %v2135 = vadd.f32 %v2131, 1e-12
    %v2136 = vrsqrt.pop %v2134
    %v2137 = vrsqrt.pop %v2135
    %v2138 = vmul.f32 %v2132, %v2136
    %v2139 = vmul.f32 %v2133, %v2137
    %v2140 = vlaneseq
    %v2141 = vshrl.u32 %v2140, 7
    %v2142 = vsub.s32 5, %v2141
    %v2143 = vrot.slane %v194, %v2142
    %v2144 = vmul.f32 %v2138, %v2143
    %v2145 = vmul.f32 %v2139, %v2143
    %v2146 = vlaneseq
    %v2147 = vshrl.u32 %v2146, 7
    %v2148 = vsub.s32 6, %v2147
    %v2149 = vrot.slane %v194, %v2148
    %v2150 = vadd.f32 %v2144, %v2149
    %v2151 = vadd.f32 %v2145, %v2149
    %s2152 = scalar_lea.vmem [#allocation11], 8
    %v2153 = vld [vmem:[%s2152] sm:$0xff]
    %s2154 = scalar_lea.vmem [#allocation2], 1536
    %v2155 = vld [vmem:[%s2154] sm:$0xff]
    %v2156 = vld [vmem:[%s2154 + $0x8] sm:$0xff]
    %v2157 = vld [vmem:[%s2154 + $0x10] sm:$0xff]
    %v2158 = vld [vmem:[%s2154 + $0x18] sm:$0xff]
    %v2159 = vld [vmem:[%s2154 + $0x20] sm:$0xff]
    %v2160 = vld [vmem:[%s2154 + $0x28] sm:$0xff]
    %v2161 = vld [vmem:[%s2154 + $0x30] sm:$0xff]
    %v2162 = vld [vmem:[%s2154 + $0x38] sm:$0xff]
    %v2163 = vld [vmem:[%s2154 + $0x40] sm:$0xff]
    %v2164 = vld [vmem:[%s2154 + $0x48] sm:$0xff]
    %v2165 = vld [vmem:[%s2154 + $0x50] sm:$0xff]
    %v2166 = vld [vmem:[%s2154 + $0x58] sm:$0xff]
    %v2167 = vld [vmem:[%s2154 + $0x60] sm:$0xff]
    %v2168 = vld [vmem:[%s2154 + $0x68] sm:$0xff]
    %v2169 = vld [vmem:[%s2154 + $0x70] sm:$0xff]
    %v2170 = vld [vmem:[%s2154 + $0x78] sm:$0xff]
    %v2171 = vld [vmem:[%s2154 + $0x80] sm:$0xff]
    %v2172 = vld [vmem:[%s2154 + $0x88] sm:$0xff]
    %v2173 = vld [vmem:[%s2154 + $0x90] sm:$0xff]
    %v2174 = vld [vmem:[%s2154 + $0x98] sm:$0xff]
    %v2175 = vld [vmem:[%s2154 + $0xa0] sm:$0xff]
    %v2176 = vld [vmem:[%s2154 + $0xa8] sm:$0xff]
    %v2177 = vld [vmem:[%s2154 + $0xb0] sm:$0xff]
    %v2178 = vld [vmem:[%s2154 + $0xb8] sm:$0xff]
    %v2179 = vld [vmem:[%s2154 + $0xc0] sm:$0xff]
    %v2180 = vld [vmem:[%s2154 + $0xc8] sm:$0xff]
    %v2181 = vld [vmem:[%s2154 + $0xd0] sm:$0xff]
    %v2182 = vld [vmem:[%s2154 + $0xd8] sm:$0xff]
    %v2183 = vld [vmem:[%s2154 + $0xe0] sm:$0xff]
    %v2184 = vld [vmem:[%s2154 + $0xe8] sm:$0xff]
    %v2185 = vld [vmem:[%s2154 + $0xf0] sm:$0xff]
    %v2186 = vld [vmem:[%s2154 + $0xf8] sm:$0xff]
    %v2187 = vld [vmem:[%s2154 + $0x100] sm:$0xff]
    %v2188 = vld [vmem:[%s2154 + $0x108] sm:$0xff]
    %v2189 = vld [vmem:[%s2154 + $0x110] sm:$0xff]
    %v2190 = vld [vmem:[%s2154 + $0x118] sm:$0xff]
    %v2191 = vld [vmem:[%s2154 + $0x120] sm:$0xff]
    %v2192 = vld [vmem:[%s2154 + $0x128] sm:$0xff]
    %v2193 = vld [vmem:[%s2154 + $0x130] sm:$0xff]
    %v2194 = vld [vmem:[%s2154 + $0x138] sm:$0xff]
    %v2195 = vld [vmem:[%s2154 + $0x140] sm:$0xff]
    %v2196 = vld [vmem:[%s2154 + $0x148] sm:$0xff]
    %v2197 = vld [vmem:[%s2154 + $0x150] sm:$0xff]
    %v2198 = vld [vmem:[%s2154 + $0x158] sm:$0xff]
    %v2199 = vld [vmem:[%s2154 + $0x160] sm:$0xff]
    %v2200 = vld [vmem:[%s2154 + $0x168] sm:$0xff]
    %v2201 = vld [vmem:[%s2154 + $0x170] sm:$0xff]
    %v2202 = vld [vmem:[%s2154 + $0x178] sm:$0xff]
    %v2203 = vld [vmem:[%s2154 + $0x180] sm:$0xff]
    %v2204 = vld [vmem:[%s2154 + $0x188] sm:$0xff]
    %v2205 = vld [vmem:[%s2154 + $0x190] sm:$0xff]
    %v2206 = vld [vmem:[%s2154 + $0x198] sm:$0xff]
    %v2207 = vld [vmem:[%s2154 + $0x1a0] sm:$0xff]
    %v2208 = vld [vmem:[%s2154 + $0x1a8] sm:$0xff]
    %v2209 = vld [vmem:[%s2154 + $0x1b0] sm:$0xff]
    %v2210 = vld [vmem:[%s2154 + $0x1b8] sm:$0xff]
    %v2211 = vld [vmem:[%s2154 + $0x1c0] sm:$0xff]
    %v2212 = vld [vmem:[%s2154 + $0x1c8] sm:$0xff]
    %v2213 = vld [vmem:[%s2154 + $0x1d0] sm:$0xff]
    %v2214 = vld [vmem:[%s2154 + $0x1d8] sm:$0xff]
    %v2215 = vld [vmem:[%s2154 + $0x1e0] sm:$0xff]
    %v2216 = vld [vmem:[%s2154 + $0x1e8] sm:$0xff]
    %v2217 = vld [vmem:[%s2154 + $0x1f0] sm:$0xff]
    %v2218 = vld [vmem:[%s2154 + $0x1f8] sm:$0xff]
    %v2219 = vld [vmem:[%s2154 + $0x200] sm:$0xff]
    %v2220 = vld [vmem:[%s2154 + $0x208] sm:$0xff]
    %v2221 = vld [vmem:[%s2154 + $0x210] sm:$0xff]
    %v2222 = vld [vmem:[%s2154 + $0x218] sm:$0xff]
    %v2223 = vld [vmem:[%s2154 + $0x220] sm:$0xff]
    %v2224 = vld [vmem:[%s2154 + $0x228] sm:$0xff]
    %v2225 = vld [vmem:[%s2154 + $0x230] sm:$0xff]
    %v2226 = vld [vmem:[%s2154 + $0x238] sm:$0xff]
    %v2227 = vld [vmem:[%s2154 + $0x240] sm:$0xff]
    %v2228 = vld [vmem:[%s2154 + $0x248] sm:$0xff]
    %v2229 = vld [vmem:[%s2154 + $0x250] sm:$0xff]
    %v2230 = vld [vmem:[%s2154 + $0x258] sm:$0xff]
    %v2231 = vld [vmem:[%s2154 + $0x260] sm:$0xff]
    %v2232 = vld [vmem:[%s2154 + $0x268] sm:$0xff]
    %v2233 = vld [vmem:[%s2154 + $0x270] sm:$0xff]
    %v2234 = vld [vmem:[%s2154 + $0x278] sm:$0xff]
    %v2235 = vld [vmem:[%s2154 + $0x280] sm:$0xff]
    %v2236 = vld [vmem:[%s2154 + $0x288] sm:$0xff]
    %v2237 = vld [vmem:[%s2154 + $0x290] sm:$0xff]
    %v2238 = vld [vmem:[%s2154 + $0x298] sm:$0xff]
    %v2239 = vld [vmem:[%s2154 + $0x2a0] sm:$0xff]
    %v2240 = vld [vmem:[%s2154 + $0x2a8] sm:$0xff]
    %v2241 = vld [vmem:[%s2154 + $0x2b0] sm:$0xff]
    %v2242 = vld [vmem:[%s2154 + $0x2b8] sm:$0xff]
    %v2243 = vld [vmem:[%s2154 + $0x2c0] sm:$0xff]
    %v2244 = vld [vmem:[%s2154 + $0x2c8] sm:$0xff]
    %v2245 = vld [vmem:[%s2154 + $0x2d0] sm:$0xff]
    %v2246 = vld [vmem:[%s2154 + $0x2d8] sm:$0xff]
    %v2247 = vld [vmem:[%s2154 + $0x2e0] sm:$0xff]
    %v2248 = vld [vmem:[%s2154 + $0x2e8] sm:$0xff]
    %v2249 = vld [vmem:[%s2154 + $0x2f0] sm:$0xff]
    %v2250 = vld [vmem:[%s2154 + $0x2f8] sm:$0xff]
    %v2251 = vld [vmem:[%s2154 + $0x300] sm:$0xff]
    %v2252 = vld [vmem:[%s2154 + $0x308] sm:$0xff]
    %v2253 = vld [vmem:[%s2154 + $0x310] sm:$0xff]
    %v2254 = vld [vmem:[%s2154 + $0x318] sm:$0xff]
    %v2255 = vld [vmem:[%s2154 + $0x320] sm:$0xff]
    %v2256 = vld [vmem:[%s2154 + $0x328] sm:$0xff]
    %v2257 = vld [vmem:[%s2154 + $0x330] sm:$0xff]
    %v2258 = vld [vmem:[%s2154 + $0x338] sm:$0xff]
    %v2259 = vld [vmem:[%s2154 + $0x340] sm:$0xff]
    %v2260 = vld [vmem:[%s2154 + $0x348] sm:$0xff]
    %v2261 = vld [vmem:[%s2154 + $0x350] sm:$0xff]
    %v2262 = vld [vmem:[%s2154 + $0x358] sm:$0xff]
    %v2263 = vld [vmem:[%s2154 + $0x360] sm:$0xff]
    %v2264 = vld [vmem:[%s2154 + $0x368] sm:$0xff]
    %v2265 = vld [vmem:[%s2154 + $0x370] sm:$0xff]
    %v2266 = vld [vmem:[%s2154 + $0x378] sm:$0xff]
    %v2267 = vld [vmem:[%s2154 + $0x380] sm:$0xff]
    %v2268 = vld [vmem:[%s2154 + $0x388] sm:$0xff]
    %v2269 = vld [vmem:[%s2154 + $0x390] sm:$0xff]
    %v2270 = vld [vmem:[%s2154 + $0x398] sm:$0xff]
    %v2271 = vld [vmem:[%s2154 + $0x3a0] sm:$0xff]
    %v2272 = vld [vmem:[%s2154 + $0x3a8] sm:$0xff]
    %v2273 = vld [vmem:[%s2154 + $0x3b0] sm:$0xff]
    %v2274 = vld [vmem:[%s2154 + $0x3b8] sm:$0xff]
    %v2275 = vld [vmem:[%s2154 + $0x3c0] sm:$0xff]
    %v2276 = vld [vmem:[%s2154 + $0x3c8] sm:$0xff]
    %v2277 = vld [vmem:[%s2154 + $0x3d0] sm:$0xff]
    %v2278 = vld [vmem:[%s2154 + $0x3d8] sm:$0xff]
    %v2279 = vld [vmem:[%s2154 + $0x3e0] sm:$0xff]
    %v2280 = vld [vmem:[%s2154 + $0x3e8] sm:$0xff]
    %v2281 = vld [vmem:[%s2154 + $0x3f0] sm:$0xff]
    %v2282 = vld [vmem:[%s2154 + $0x3f8] sm:$0xff]
    %v2283 = vld [vmem:[%s2154 + $0x400] sm:$0xff]
    %v2284 = vld [vmem:[%s2154 + $0x408] sm:$0xff]
    %v2285 = vld [vmem:[%s2154 + $0x410] sm:$0xff]
    %v2286 = vld [vmem:[%s2154 + $0x418] sm:$0xff]
    %v2287 = vld [vmem:[%s2154 + $0x420] sm:$0xff]
    %v2288 = vld [vmem:[%s2154 + $0x428] sm:$0xff]
    %v2289 = vld [vmem:[%s2154 + $0x430] sm:$0xff]
    %v2290 = vld [vmem:[%s2154 + $0x438] sm:$0xff]
    %v2291 = vld [vmem:[%s2154 + $0x440] sm:$0xff]
    %v2292 = vld [vmem:[%s2154 + $0x448] sm:$0xff]
    %v2293 = vld [vmem:[%s2154 + $0x450] sm:$0xff]
    %v2294 = vld [vmem:[%s2154 + $0x458] sm:$0xff]
    %v2295 = vld [vmem:[%s2154 + $0x460] sm:$0xff]
    %v2296 = vld [vmem:[%s2154 + $0x468] sm:$0xff]
    %v2297 = vld [vmem:[%s2154 + $0x470] sm:$0xff]
    %v2298 = vld [vmem:[%s2154 + $0x478] sm:$0xff]
    %v2299 = vld [vmem:[%s2154 + $0x480] sm:$0xff]
    %v2300 = vld [vmem:[%s2154 + $0x488] sm:$0xff]
    %v2301 = vld [vmem:[%s2154 + $0x490] sm:$0xff]
    %v2302 = vld [vmem:[%s2154 + $0x498] sm:$0xff]
    %v2303 = vld [vmem:[%s2154 + $0x4a0] sm:$0xff]
    %v2304 = vld [vmem:[%s2154 + $0x4a8] sm:$0xff]
    %v2305 = vld [vmem:[%s2154 + $0x4b0] sm:$0xff]
    %v2306 = vld [vmem:[%s2154 + $0x4b8] sm:$0xff]
    %v2307 = vld [vmem:[%s2154 + $0x4c0] sm:$0xff]
    %v2308 = vld [vmem:[%s2154 + $0x4c8] sm:$0xff]
    %v2309 = vld [vmem:[%s2154 + $0x4d0] sm:$0xff]
    %v2310 = vld [vmem:[%s2154 + $0x4d8] sm:$0xff]
    %v2311 = vld [vmem:[%s2154 + $0x4e0] sm:$0xff]
    %v2312 = vld [vmem:[%s2154 + $0x4e8] sm:$0xff]
    %v2313 = vld [vmem:[%s2154 + $0x4f0] sm:$0xff]
    %v2314 = vld [vmem:[%s2154 + $0x4f8] sm:$0xff]
    %v2315 = vld [vmem:[%s2154 + $0x500] sm:$0xff]
    %v2316 = vld [vmem:[%s2154 + $0x508] sm:$0xff]
    %v2317 = vld [vmem:[%s2154 + $0x510] sm:$0xff]
    %v2318 = vld [vmem:[%s2154 + $0x518] sm:$0xff]
    %v2319 = vld [vmem:[%s2154 + $0x520] sm:$0xff]
    %v2320 = vld [vmem:[%s2154 + $0x528] sm:$0xff]
    %v2321 = vld [vmem:[%s2154 + $0x530] sm:$0xff]
    %v2322 = vld [vmem:[%s2154 + $0x538] sm:$0xff]
    %v2323 = vld [vmem:[%s2154 + $0x540] sm:$0xff]
    %v2324 = vld [vmem:[%s2154 + $0x548] sm:$0xff]
    %v2325 = vld [vmem:[%s2154 + $0x550] sm:$0xff]
    %v2326 = vld [vmem:[%s2154 + $0x558] sm:$0xff]
    %v2327 = vld [vmem:[%s2154 + $0x560] sm:$0xff]
    %v2328 = vld [vmem:[%s2154 + $0x568] sm:$0xff]
    %v2329 = vld [vmem:[%s2154 + $0x570] sm:$0xff]
    %v2330 = vld [vmem:[%s2154 + $0x578] sm:$0xff]
    %v2331 = vld [vmem:[%s2154 + $0x580] sm:$0xff]
    %v2332 = vld [vmem:[%s2154 + $0x588] sm:$0xff]
    %v2333 = vld [vmem:[%s2154 + $0x590] sm:$0xff]
    %v2334 = vld [vmem:[%s2154 + $0x598] sm:$0xff]
    %v2335 = vld [vmem:[%s2154 + $0x5a0] sm:$0xff]
    %v2336 = vld [vmem:[%s2154 + $0x5a8] sm:$0xff]
    %v2337 = vld [vmem:[%s2154 + $0x5b0] sm:$0xff]
    %v2338 = vld [vmem:[%s2154 + $0x5b8] sm:$0xff]
    %v2339 = vld [vmem:[%s2154 + $0x5c0] sm:$0xff]
    %v2340 = vld [vmem:[%s2154 + $0x5c8] sm:$0xff]
    %v2341 = vld [vmem:[%s2154 + $0x5d0] sm:$0xff]
    %v2342 = vld [vmem:[%s2154 + $0x5d8] sm:$0xff]
    %v2343 = vld [vmem:[%s2154 + $0x5e0] sm:$0xff]
    %v2344 = vld [vmem:[%s2154 + $0x5e8] sm:$0xff]
    %v2345 = vld [vmem:[%s2154 + $0x5f0] sm:$0xff]
    %v2346 = vld [vmem:[%s2154 + $0x5f8] sm:$0xff]
    %s2347 = scalar_lea.vmem [#allocation5], 12
    %v2348 = vld [vmem:[%s2347] sm:$0xff]
    %v2349 = vld [vmem:[%s2347 + $0x8] sm:$0xf]
    %v2352 = vlaneseq
    %v2353 = vshrl.u32 %v2352, 7
    %v2354 = vsub.s32 0, %v2353
    %v2355 = vrot.slane %v2348, %v2354
    %v2356 = vlaneseq
    %v2357 = vshrl.u32 %v2356, 7
    %v2358 = vsub.s32 1, %v2357
    %v2359 = vrot.slane %v2348, %v2358
    %v2360 = vlaneseq
    %v2361 = vshrl.u32 %v2360, 7
    %v2362 = vsub.s32 2, %v2361
    %v2363 = vrot.slane %v2348, %v2362
    %v2364 = vlaneseq
    %v2365 = vshrl.u32 %v2364, 7
    %v2366 = vsub.s32 3, %v2365
    %v2367 = vrot.slane %v2348, %v2366
    %v2368 = vlaneseq
    %v2369 = vshrl.u32 %v2368, 7
    %v2370 = vsub.s32 4, %v2369
    %v2371 = vrot.slane %v2348, %v2370
    %v2372 = vlaneseq
    %v2373 = vshrl.u32 %v2372, 7
    %v2374 = vsub.s32 5, %v2373
    %v2375 = vrot.slane %v2348, %v2374
    %v2376 = vlaneseq
    %v2377 = vshrl.u32 %v2376, 7
    %v2378 = vsub.s32 6, %v2377
    %v2379 = vrot.slane %v2348, %v2378
    %v2380 = vlaneseq
    %v2381 = vshrl.u32 %v2380, 7
    %v2382 = vsub.s32 7, %v2381
    %v2383 = vrot.slane %v2348, %v2382
    %v2384 = vlaneseq
    %v2385 = vshrl.u32 %v2384, 7
    %v2386 = vsub.s32 0, %v2385
    %v2387 = vrot.slane %v2349, %v2386
    %v2388 = vlaneseq
    %v2389 = vshrl.u32 %v2388, 7
    %v2390 = vsub.s32 1, %v2389
    %v2391 = vrot.slane %v2349, %v2390
    %v2392 = vlaneseq
    %v2393 = vshrl.u32 %v2392, 7
    %v2394 = vsub.s32 2, %v2393
    %v2395 = vrot.slane %v2349, %v2394
    %v2396 = vlaneseq
    %v2397 = vshrl.u32 %v2396, 7
    %v2398 = vsub.s32 3, %v2397
    %v2399 = vrot.slane %v2349, %v2398
    %2412 = vmatprep.subr.mxu0 %v2156
    %2413 = vmatpush1.msra.mxu0 %v2155
    %2414 = vmatprep.subr.mxu0 %v2168
    %2415 = vmatpush1.msra.mxu0 %v2167
    %2416 = vmatprep.subr.mxu0 %v2180
    %2417 = vmatpush1.msra.mxu0 %v2179
    %2418 = vmatprep.subr.mxu0 %v2192
    %2419 = vmatpush1.msra.mxu0 %v2191
    %2420 = vmatprep.subr.mxu0 %v2204
    %2421 = vmatpush1.msra.mxu0 %v2203
    %2422 = vmatprep.subr.mxu0 %v2216
    %2423 = vmatpush1.msra.mxu0 %v2215
    %2424 = vmatprep.subr.mxu0 %v2228
    %2425 = vmatpush1.msra.mxu0 %v2227
    %2426 = vmatprep.subr.mxu0 %v2240
    %2427 = vmatpush1.msra.mxu0 %v2239
    %2428 = vmatprep.subr.mxu0 %v2252
    %2429 = vmatpush1.msra.mxu0 %v2251
    %2430 = vmatprep.subr.mxu0 %v2264
    %2431 = vmatpush1.msra.mxu0 %v2263
    %2432 = vmatprep.subr.mxu0 %v2276
    %2433 = vmatpush1.msra.mxu0 %v2275
    %2434 = vmatprep.subr.mxu0 %v2288
    %2435 = vmatpush1.msra.mxu0 %v2287
    %2436 = vmatprep.subr.mxu0 %v2300
    %2437 = vmatpush1.msra.mxu0 %v2299
    %2438 = vmatprep.subr.mxu0 %v2312
    %2439 = vmatpush1.msra.mxu0 %v2311
    %2440 = vmatprep.subr.mxu0 %v2324
    %2441 = vmatpush1.msra.mxu0 %v2323
    %2442 = vmatprep.subr.mxu0 %v2336
    %2443 = vmatpush1.msra.mxu0 %v2335
    %2444 = vmatprep.subr.mxu0 0.0
    %2445 = vmatpush1.msra.mxu0 0.0
    %2446 = vmatprep.subr.mxu0 0.0
    %2447 = vmatpush1.msra.mxu0 0.0
    %2448 = vmatprep.subr.mxu0 0.0
    %2449 = vmatpush1.msra.mxu0 0.0
    %2450 = vmatprep.subr.mxu0 0.0
    %2451 = vmatpush1.msra.mxu0 0.0
    %2452 = vmatprep.subr.mxu0 0.0
    %2453 = vmatpush1.msra.mxu0 0.0
    %2454 = vmatprep.subr.mxu0 0.0
    %2455 = vmatpush1.msra.mxu0 0.0
    %2456 = vmatprep.subr.mxu0 0.0
    %2457 = vmatpush1.msra.mxu0 0.0
    %2458 = vmatprep.subr.mxu0 0.0
    %2459 = vmatpush1.msra.mxu0 0.0
    %2460 = vmatprep.subr.mxu0 0.0
    %2461 = vmatpush1.msra.mxu0 0.0
    %2462 = vmatprep.subr.mxu0 0.0
    %2463 = vmatpush1.msra.mxu0 0.0
    %2464 = vmatprep.subr.mxu0 0.0
    %2465 = vmatpush1.msra.mxu0 0.0
    %2466 = vmatprep.subr.mxu0 0.0
    %2467 = vmatpush1.msra.mxu0 0.0
    %2468 = vmatprep.subr.mxu0 0.0
    %2469 = vmatpush1.msra.mxu0 0.0
    %2470 = vmatprep.subr.mxu0 0.0
    %2471 = vmatpush1.msra.mxu0 0.0
    %2472 = vmatprep.subr.mxu0 0.0
    %2473 = vmatpush1.msra.mxu0 0.0
    %2474 = vmatprep.subr.mxu0 0.0
    %2475 = vmatpush1.msra.mxu0 0.0
    %2476 = vmatprep.mubr.f32.mxu0 0.0
    %2477 = vmatmul.mubr.f32.gmra.mrb[0].mxu0 %v2150
    %v2478 = vpop.f32.mrb[0].mxu0
    %v2479 = vadd.f32 %v2355, %v2478
    %v2480 = vpop.f32.mrb[0].mxu0
    %v2481 = vadd.f32 %v2359, %v2480
    %2482 = vmatprep.mubr.f32.mxu0 0.0
    %2483 = vmatmul.mubr.f32.gmra.mrb[0].mxu0 %v2151
    %v2484 = vpop.f32.mrb[0].mxu0
    %v2485 = vadd.f32 %v2355, %v2484
    %v2486 = vpop.f32.mrb[0].mxu0
    %v2487 = vadd.f32 %v2359, %v2486
    %2488 = vdwg.mxu0
    %2489 = vmatprep.subr.mxu0 %v2158
    %2490 = vmatpush1.msra.mxu0 %v2157
    %2491 = vmatprep.subr.mxu0 %v2170
    %2492 = vmatpush1.msra.mxu0 %v2169
    %2493 = vmatprep.subr.mxu0 %v2182
    %2494 = vmatpush1.msra.mxu0 %v2181
    %2495 = vmatprep.subr.mxu0 %v2194
    %2496 = vmatpush1.msra.mxu0 %v2193
    %2497 = vmatprep.subr.mxu0 %v2206
    %2498 = vmatpush1.msra.mxu0 %v2205
    %2499 = vmatprep.subr.mxu0 %v2218
    %2500 = vmatpush1.msra.mxu0 %v2217
    %2501 = vmatprep.subr.mxu0 %v2230
    %2502 = vmatpush1.msra.mxu0 %v2229
    %2503 = vmatprep.subr.mxu0 %v2242
    %2504 = vmatpush1.msra.mxu0 %v2241
    %2505 = vmatprep.subr.mxu0 %v2254
    %2506 = vmatpush1.msra.mxu0 %v2253
    %2507 = vmatprep.subr.mxu0 %v2266
    %2508 = vmatpush1.msra.mxu0 %v2265
    %2509 = vmatprep.subr.mxu0 %v2278
    %2510 = vmatpush1.msra.mxu0 %v2277
    %2511 = vmatprep.subr.mxu0 %v2290
    %2512 = vmatpush1.msra.mxu0 %v2289
    %2513 = vmatprep.subr.mxu0 %v2302
    %2514 = vmatpush1.msra.mxu0 %v2301
    %2515 = vmatprep.subr.mxu0 %v2314
    %2516 = vmatpush1.msra.mxu0 %v2313
    %2517 = vmatprep.subr.mxu0 %v2326
    %2518 = vmatpush1.msra.mxu0 %v2325
    %2519 = vmatprep.subr.mxu0 %v2338
    %2520 = vmatpush1.msra.mxu0 %v2337
    %2521 = vmatprep.subr.mxu0 0.0
    %2522 = vmatpush1.msra.mxu0 0.0
    %2523 = vmatprep.subr.mxu0 0.0
    %2524 = vmatpush1.msra.mxu0 0.0
    %2525 = vmatprep.subr.mxu0 0.0
    %2526 = vmatpush1.msra.mxu0 0.0
    %2527 = vmatprep.subr.mxu0 0.0
    %2528 = vmatpush1.msra.mxu0 0.0
    %2529 = vmatprep.subr.mxu0 0.0
    %2530 = vmatpush1.msra.mxu0 0.0
    %2531 = vmatprep.subr.mxu0 0.0
    %2532 = vmatpush1.msra.mxu0 0.0
    %2533 = vmatprep.subr.mxu0 0.0
    %2534 = vmatpush1.msra.mxu0 0.0
    %2535 = vmatprep.subr.mxu0 0.0
    %2536 = vmatpush1.msra.mxu0 0.0
    %2537 = vmatprep.subr.mxu0 0.0
    %2538 = vmatpush1.msra.mxu0 0.0
    %2539 = vmatprep.subr.mxu0 0.0
    %2540 = vmatpush1.msra.mxu0 0.0
    %2541 = vmatprep.subr.mxu0 0.0
    %2542 = vmatpush1.msra.mxu0 0.0
    %2543 = vmatprep.subr.mxu0 0.0
    %2544 = vmatpush1.msra.mxu0 0.0
    %2545 = vmatprep.subr.mxu0 0.0
    %2546 = vmatpush1.msra.mxu0 0.0
    %2547 = vmatprep.subr.mxu0 0.0
    %2548 = vmatpush1.msra.mxu0 0.0
    %2549 = vmatprep.subr.mxu0 0.0
    %2550 = vmatpush1.msra.mxu0 0.0
    %2551 = vmatprep.subr.mxu0 0.0
    %2552 = vmatpush1.msra.mxu0 0.0
    %2553 = vmatprep.mubr.f32.mxu0 0.0
    %2554 = vmatmul.mubr.f32.gmra.mrb[0].mxu0 %v2150
    %v2555 = vpop.f32.mrb[0].mxu0
    %v2556 = vadd.f32 %v2363, %v2555
    %v2557 = vpop.f32.mrb[0].mxu0
    %v2558 = vadd.f32 %v2367, %v2557
    %2559 = vmatprep.mubr.f32.mxu0 0.0
    %2560 = vmatmul.mubr.f32.gmra.mrb[0].mxu0 %v2151
    %v2561 = vpop.f32.mrb[0].mxu0
    %v2562 = vadd.f32 %v2363, %v2561
    %v2563 = vpop.f32.mrb[0].mxu0
    %v2564 = vadd.f32 %v2367, %v2563
    %2565 = vdwg.mxu0
    %2566 = vmatprep.subr.mxu0 %v2160
    %2567 = vmatpush1.msra.mxu0 %v2159
    %2568 = vmatprep.subr.mxu0 %v2172
    %2569 = vmatpush1.msra.mxu0 %v2171
    %2570 = vmatprep.subr.mxu0 %v2184
    %2571 = vmatpush1.msra.mxu0 %v2183
    %2572 = vmatprep.subr.mxu0 %v2196
    %2573 = vmatpush1.msra.mxu0 %v2195
    %2574 = vmatprep.subr.mxu0 %v2208
    %2575 = vmatpush1.msra.mxu0 %v2207
    %2576 = vmatprep.subr.mxu0 %v2220
    %2577 = vmatpush1.msra.mxu0 %v2219
    %2578 = vmatprep.subr.mxu0 %v2232
    %2579 = vmatpush1.msra.mxu0 %v2231
    %2580 = vmatprep.subr.mxu0 %v2244
    %2581 = vmatpush1.msra.mxu0 %v2243
    %2582 = vmatprep.subr.mxu0 %v2256
    %2583 = vmatpush1.msra.mxu0 %v2255
    %2584 = vmatprep.subr.mxu0 %v2268
    %2585 = vmatpush1.msra.mxu0 %v2267
    %2586 = vmatprep.subr.mxu0 %v2280
    %2587 = vmatpush1.msra.mxu0 %v2279
    %2588 = vmatprep.subr.mxu0 %v2292
    %2589 = vmatpush1.msra.mxu0 %v2291
    %2590 = vmatprep.subr.mxu0 %v2304
    %2591 = vmatpush1.msra.mxu0 %v2303
    %2592 = vmatprep.subr.mxu0 %v2316
    %2593 = vmatpush1.msra.mxu0 %v2315
    %2594 = vmatprep.subr.mxu0 %v2328
    %2595 = vmatpush1.msra.mxu0 %v2327
    %2596 = vmatprep.subr.mxu0 %v2340
    %2597 = vmatpush1.msra.mxu0 %v2339
    %2598 = vmatprep.subr.mxu0 0.0
    %2599 = vmatpush1.msra.mxu0 0.0
    %2600 = vmatprep.subr.mxu0 0.0
    %2601 = vmatpush1.msra.mxu0 0.0
    %2602 = vmatprep.subr.mxu0 0.0
    %2603 = vmatpush1.msra.mxu0 0.0
    %2604 = vmatprep.subr.mxu0 0.0
    %2605 = vmatpush1.msra.mxu0 0.0
    %2606 = vmatprep.subr.mxu0 0.0
    %2607 = vmatpush1.msra.mxu0 0.0
    %2608 = vmatprep.subr.mxu0 0.0
    %2609 = vmatpush1.msra.mxu0 0.0
    %2610 = vmatprep.subr.mxu0 0.0
    %2611 = vmatpush1.msra.mxu0 0.0
    %2612 = vmatprep.subr.mxu0 0.0
    %2613 = vmatpush1.msra.mxu0 0.0
    %2614 = vmatprep.subr.mxu0 0.0
    %2615 = vmatpush1.msra.mxu0 0.0
    %2616 = vmatprep.subr.mxu0 0.0
    %2617 = vmatpush1.msra.mxu0 0.0
    %2618 = vmatprep.subr.mxu0 0.0
    %2619 = vmatpush1.msra.mxu0 0.0
    %2620 = vmatprep.subr.mxu0 0.0
    %2621 = vmatpush1.msra.mxu0 0.0
    %2622 = vmatprep.subr.mxu0 0.0
    %2623 = vmatpush1.msra.mxu0 0.0
    %2624 = vmatprep.subr.mxu0 0.0
    %2625 = vmatpush1.msra.mxu0 0.0
    %2626 = vmatprep.subr.mxu0 0.0
    %2627 = vmatpush1.msra.mxu0 0.0
    %2628 = vmatprep.subr.mxu0 0.0
    %2629 = vmatpush1.msra.mxu0 0.0
    %2630 = vmatprep.mubr.f32.mxu0 0.0
    %2631 = vmatmul.mubr.f32.gmra.mrb[0].mxu0 %v2150
    %v2632 = vpop.f32.mrb[0].mxu0
    %v2633 = vadd.f32 %v2371, %v2632
    %v2634 = vpop.f32.mrb[0].mxu0
    %v2635 = vadd.f32 %v2375, %v2634
    %2636 = vmatprep.mubr.f32.mxu0 0.0
    %2637 = vmatmul.mubr.f32.gmra.mrb[0].mxu0 %v2151
    %v2638 = vpop.f32.mrb[0].mxu0
    %v2639 = vadd.f32 %v2371, %v2638
    %v2640 = vpop.f32.mrb[0].mxu0
    %v2641 = vadd.f32 %v2375, %v2640
    %2642 = vdwg.mxu0
    %2643 = vmatprep.subr.mxu0 %v2162
    %2644 = vmatpush1.msra.mxu0 %v2161
    %2645 = vmatprep.subr.mxu0 %v2174
    %2646 = vmatpush1.msra.mxu0 %v2173
    %2647 = vmatprep.subr.mxu0 %v2186
    %2648 = vmatpush1.msra.mxu0 %v2185
    %2649 = vmatprep.subr.mxu0 %v2198
    %2650 = vmatpush1.msra.mxu0 %v2197
    %2651 = vmatprep.subr.mxu0 %v2210
    %2652 = vmatpush1.msra.mxu0 %v2209
    %2653 = vmatprep.subr.mxu0 %v2222
    %2654 = vmatpush1.msra.mxu0 %v2221
    %2655 = vmatprep.subr.mxu0 %v2234
    %2656 = vmatpush1.msra.mxu0 %v2233
    %2657 = vmatprep.subr.mxu0 %v2246
    %2658 = vmatpush1.msra.mxu0 %v2245
    %2659 = vmatprep.subr.mxu0 %v2258
    %2660 = vmatpush1.msra.mxu0 %v2257
    %2661 = vmatprep.subr.mxu0 %v2270
    %2662 = vmatpush1.msra.mxu0 %v2269
    %2663 = vmatprep.subr.mxu0 %v2282
    %2664 = vmatpush1.msra.mxu0 %v2281
    %2665 = vmatprep.subr.mxu0 %v2294
    %2666 = vmatpush1.msra.mxu0 %v2293
    %2667 = vmatprep.subr.mxu0 %v2306
    %2668 = vmatpush1.msra.mxu0 %v2305
    %2669 = vmatprep.subr.mxu0 %v2318
    %2670 = vmatpush1.msra.mxu0 %v2317
    %2671 = vmatprep.subr.mxu0 %v2330
    %2672 = vmatpush1.msra.mxu0 %v2329
    %2673 = vmatprep.subr.mxu0 %v2342
    %2674 = vmatpush1.msra.mxu0 %v2341
    %2675 = vmatprep.subr.mxu0 0.0
    %2676 = vmatpush1.msra.mxu0 0.0
    %2677 = vmatprep.subr.mxu0 0.0
    %2678 = vmatpush1.msra.mxu0 0.0
    %2679 = vmatprep.subr.mxu0 0.0
    %2680 = vmatpush1.msra.mxu0 0.0
    %2681 = vmatprep.subr.mxu0 0.0
    %2682 = vmatpush1.msra.mxu0 0.0
    %2683 = vmatprep.subr.mxu0 0.0
    %2684 = vmatpush1.msra.mxu0 0.0
    %2685 = vmatprep.subr.mxu0 0.0
    %2686 = vmatpush1.msra.mxu0 0.0
    %2687 = vmatprep.subr.mxu0 0.0
    %2688 = vmatpush1.msra.mxu0 0.0
    %2689 = vmatprep.subr.mxu0 0.0
    %2690 = vmatpush1.msra.mxu0 0.0
    %2691 = vmatprep.subr.mxu0 0.0
    %2692 = vmatpush1.msra.mxu0 0.0
    %2693 = vmatprep.subr.mxu0 0.0
    %2694 = vmatpush1.msra.mxu0 0.0
    %2695 = vmatprep.subr.mxu0 0.0
    %2696 = vmatpush1.msra.mxu0 0.0
    %2697 = vmatprep.subr.mxu0 0.0
    %2698 = vmatpush1.msra.mxu0 0.0
    %2699 = vmatprep.subr.mxu0 0.0
    %2700 = vmatpush1.msra.mxu0 0.0
    %2701 = vmatprep.subr.mxu0 0.0
    %2702 = vmatpush1.msra.mxu0 0.0
    %2703 = vmatprep.subr.mxu0 0.0
    %2704 = vmatpush1.msra.mxu0 0.0
    %2705 = vmatprep.subr.mxu0 0.0
    %2706 = vmatpush1.msra.mxu0 0.0
    %2707 = vmatprep.mubr.f32.mxu0 0.0
    %2708 = vmatmul.mubr.f32.gmra.mrb[0].mxu0 %v2150
    %v2709 = vpop.f32.mrb[0].mxu0
    %v2710 = vadd.f32 %v2379, %v2709
    %v2711 = vpop.f32.mrb[0].mxu0
    %v2712 = vadd.f32 %v2383, %v2711
    %2713 = vmatprep.mubr.f32.mxu0 0.0
    %2714 = vmatmul.mubr.f32.gmra.mrb[0].mxu0 %v2151
    %v2715 = vpop.f32.mrb[0].mxu0
    %v2716 = vadd.f32 %v2379, %v2715
    %v2717 = vpop.f32.mrb[0].mxu0
    %v2718 = vadd.f32 %v2383, %v2717
    %2719 = vdwg.mxu0
    %2720 = vmatprep.subr.mxu0 %v2164
    %2721 = vmatpush1.msra.mxu0 %v2163
    %2722 = vmatprep.subr.mxu0 %v2176
    %2723 = vmatpush1.msra.mxu0 %v2175
    %2724 = vmatprep.subr.mxu0 %v2188
    %2725 = vmatpush1.msra.mxu0 %v2187
    %2726 = vmatprep.subr.mxu0 %v2200
    %2727 = vmatpush1.msra.mxu0 %v2199
    %2728 = vmatprep.subr.mxu0 %v2212
    %2729 = vmatpush1.msra.mxu0 %v2211
    %2730 = vmatprep.subr.mxu0 %v2224
    %2731 = vmatpush1.msra.mxu0 %v2223
    %2732 = vmatprep.subr.mxu0 %v2236
    %2733 = vmatpush1.msra.mxu0 %v2235
    %2734 = vmatprep.subr.mxu0 %v2248
    %2735 = vmatpush1.msra.mxu0 %v2247
    %2736 = vmatprep.subr.mxu0 %v2260
    %2737 = vmatpush1.msra.mxu0 %v2259
    %2738 = vmatprep.subr.mxu0 %v2272
    %2739 = vmatpush1.msra.mxu0 %v2271
    %2740 = vmatprep.subr.mxu0 %v2284
    %2741 = vmatpush1.msra.mxu0 %v2283
    %2742 = vmatprep.subr.mxu0 %v2296
    %2743 = vmatpush1.msra.mxu0 %v2295
    %2744 = vmatprep.subr.mxu0 %v2308
    %2745 = vmatpush1.msra.mxu0 %v2307
    %2746 = vmatprep.subr.mxu0 %v2320
    %2747 = vmatpush1.msra.mxu0 %v2319
    %2748 = vmatprep.subr.mxu0 %v2332
    %2749 = vmatpush1.msra.mxu0 %v2331
    %2750 = vmatprep.subr.mxu0 %v2344
    %2751 = vmatpush1.msra.mxu0 %v2343
    %2752 = vmatprep.subr.mxu0 0.0
    %2753 = vmatpush1.msra.mxu0 0.0
    %2754 = vmatprep.subr.mxu0 0.0
    %2755 = vmatpush1.msra.mxu0 0.0
    %2756 = vmatprep.subr.mxu0 0.0
    %2757 = vmatpush1.msra.mxu0 0.0
    %2758 = vmatprep.subr.mxu0 0.0
    %2759 = vmatpush1.msra.mxu0 0.0
    %2760 = vmatprep.subr.mxu0 0.0
    %2761 = vmatpush1.msra.mxu0 0.0
    %2762 = vmatprep.subr.mxu0 0.0
    %2763 = vmatpush1.msra.mxu0 0.0
    %2764 = vmatprep.subr.mxu0 0.0
    %2765 = vmatpush1.msra.mxu0 0.0
    %2766 = vmatprep.subr.mxu0 0.0
    %2767 = vmatpush1.msra.mxu0 0.0
    %2768 = vmatprep.subr.mxu0 0.0
    %2769 = vmatpush1.msra.mxu0 0.0
    %2770 = vmatprep.subr.mxu0 0.0
    %2771 = vmatpush1.msra.mxu0 0.0
    %2772 = vmatprep.subr.mxu0 0.0
    %2773 = vmatpush1.msra.mxu0 0.0
    %2774 = vmatprep.subr.mxu0 0.0
    %2775 = vmatpush1.msra.mxu0 0.0
    %2776 = vmatprep.subr.mxu0 0.0
    %2777 = vmatpush1.msra.mxu0 0.0
    %2778 = vmatprep.subr.mxu0 0.0
    %2779 = vmatpush1.msra.mxu0 0.0
    %2780 = vmatprep.subr.mxu0 0.0
    %2781 = vmatpush1.msra.mxu0 0.0
    %2782 = vmatprep.subr.mxu0 0.0
    %2783 = vmatpush1.msra.mxu0 0.0
    %2784 = vmatprep.mubr.f32.mxu0 0.0
    %2785 = vmatmul.mubr.f32.gmra.mrb[0].mxu0 %v2150
    %v2786 = vpop.f32.mrb[0].mxu0
    %v2787 = vadd.f32 %v2387, %v2786
    %v2788 = vpop.f32.mrb[0].mxu0
    %v2789 = vadd.f32 %v2391, %v2788
    %2790 = vmatprep.mubr.f32.mxu0 0.0
    %2791 = vmatmul.mubr.f32.gmra.mrb[0].mxu0 %v2151
    %v2792 = vpop.f32.mrb[0].mxu0
    %v2793 = vadd.f32 %v2387, %v2792
    %v2794 = vpop.f32.mrb[0].mxu0
    %v2795 = vadd.f32 %v2391, %v2794
    %2796 = vdwg.mxu0
    %2797 = vmatprep.subr.mxu0 %v2166
    %2798 = vmatpush1.msra.mxu0 %v2165
    %2799 = vmatprep.subr.mxu0 %v2178
    %2800 = vmatpush1.msra.mxu0 %v2177
    %2801 = vmatprep.subr.mxu0 %v2190
    %2802 = vmatpush1.msra.mxu0 %v2189
    %2803 = vmatprep.subr.mxu0 %v2202
    %2804 = vmatpush1.msra.mxu0 %v2201
    %2805 = vmatprep.subr.mxu0 %v2214
    %2806 = vmatpush1.msra.mxu0 %v2213
    %2807 = vmatprep.subr.mxu0 %v2226
    %2808 = vmatpush1.msra.mxu0 %v2225
    %2809 = vmatprep.subr.mxu0 %v2238
    %2810 = vmatpush1.msra.mxu0 %v2237
    %2811 = vmatprep.subr.mxu0 %v2250
    %2812 = vmatpush1.msra.mxu0 %v2249
    %2813 = vmatprep.subr.mxu0 %v2262
    %2814 = vmatpush1.msra.mxu0 %v2261
    %2815 = vmatprep.subr.mxu0 %v2274
    %2816 = vmatpush1.msra.mxu0 %v2273
    %2817 = vmatprep.subr.mxu0 %v2286
    %2818 = vmatpush1.msra.mxu0 %v2285
    %2819 = vmatprep.subr.mxu0 %v2298
    %2820 = vmatpush1.msra.mxu0 %v2297
    %2821 = vmatprep.subr.mxu0 %v2310
    %2822 = vmatpush1.msra.mxu0 %v2309
    %2823 = vmatprep.subr.mxu0 %v2322
    %2824 = vmatpush1.msra.mxu0 %v2321
    %2825 = vmatprep.subr.mxu0 %v2334
    %2826 = vmatpush1.msra.mxu0 %v2333
    %2827 = vmatprep.subr.mxu0 %v2346
    %2828 = vmatpush1.msra.mxu0 %v2345
    %2829 = vmatprep.subr.mxu0 0.0
    %2830 = vmatpush1.msra.mxu0 0.0
    %2831 = vmatprep.subr.mxu0 0.0
    %2832 = vmatpush1.msra.mxu0 0.0
    %2833 = vmatprep.subr.mxu0 0.0
    %2834 = vmatpush1.msra.mxu0 0.0
    %2835 = vmatprep.subr.mxu0 0.0
    %2836 = vmatpush1.msra.mxu0 0.0
    %2837 = vmatprep.subr.mxu0 0.0
    %2838 = vmatpush1.msra.mxu0 0.0
    %2839 = vmatprep.subr.mxu0 0.0
    %2840 = vmatpush1.msra.mxu0 0.0
    %2841 = vmatprep.subr.mxu0 0.0
    %2842 = vmatpush1.msra.mxu0 0.0
    %2843 = vmatprep.subr.mxu0 0.0
    %2844 = vmatpush1.msra.mxu0 0.0
    %2845 = vmatprep.subr.mxu0 0.0
    %2846 = vmatpush1.msra.mxu0 0.0
    %2847 = vmatprep.subr.mxu0 0.0
    %2848 = vmatpush1.msra.mxu0 0.0
    %2849 = vmatprep.subr.mxu0 0.0
    %2850 = vmatpush1.msra.mxu0 0.0
    %2851 = vmatprep.subr.mxu0 0.0
    %2852 = vmatpush1.msra.mxu0 0.0
    %2853 = vmatprep.subr.mxu0 0.0
    %2854 = vmatpush1.msra.mxu0 0.0
    %2855 = vmatprep.subr.mxu0 0.0
    %2856 = vmatpush1.msra.mxu0 0.0
    %2857 = vmatprep.subr.mxu0 0.0
    %2858 = vmatpush1.msra.mxu0 0.0
    %2859 = vmatprep.subr.mxu0 0.0
    %2860 = vmatpush1.msra.mxu0 0.0
    %2861 = vmatprep.mubr.f32.mxu0 0.0
    %2862 = vmatmul.mubr.f32.gmra.mrb[0].mxu0 %v2150
    %v2863 = vpop.f32.mrb[0].mxu0
    %v2864 = vadd.f32 %v2395, %v2863
    %v2865 = vpop.f32.mrb[0].mxu0
    %v2866 = vadd.f32 %v2399, %v2865
    %2867 = vmatprep.mubr.f32.mxu0 0.0
    %2868 = vmatmul.mubr.f32.gmra.mrb[0].mxu0 %v2151
    %v2869 = vpop.f32.mrb[0].mxu0
    %v2870 = vadd.f32 %v2395, %v2869
    %v2871 = vpop.f32.mrb[0].mxu0
    %v2872 = vadd.f32 %v2399, %v2871
    %2873 = vdwg.mxu0
    %2874 = vmatprep.subr.mxu0 0.0
    %2875 = vmatpush1.xpose.msra.mxu0 %v2633
    %2876 = vmatprep.subr.mxu0 0.0
    %2877 = vmatpush1.xpose.msra.mxu0 %v2639
    %2878 = vmatprep.subr.mxu0 0.0
    %2879 = vmatpush1.xpose.msra.mxu0 0.0
    %2880 = vmatprep.subr.mxu0 0.0
    %2881 = vmatpush1.xpose.msra.mxu0 0.0
    %2882 = vmatprep.subr.mxu0 0.0
    %2883 = vmatpush1.xpose.msra.mxu0 0.0
    %2884 = vmatprep.subr.mxu0 0.0
    %2885 = vmatpush1.xpose.msra.mxu0 0.0
    %2886 = vmatprep.subr.mxu0 0.0
    %2887 = vmatpush1.xpose.msra.mxu0 0.0
    %2888 = vmatprep.subr.mxu0 0.0
    %2889 = vmatpush1.xpose.msra.mxu0 0.0
    %2890 = vmatprep.subr.mxu0 0.0
    %2891 = vmatpush1.xpose.msra.mxu0 0.0
    %2892 = vmatprep.subr.mxu0 0.0
    %2893 = vmatpush1.xpose.msra.mxu0 0.0
    %2894 = vmatprep.subr.mxu0 0.0
    %2895 = vmatpush1.xpose.msra.mxu0 0.0
    %2896 = vmatprep.subr.mxu0 0.0
    %2897 = vmatpush1.xpose.msra.mxu0 0.0
    %2898 = vmatprep.subr.mxu0 0.0
    %2899 = vmatpush1.xpose.msra.mxu0 0.0
    %2900 = vmatprep.subr.mxu0 0.0
    %2901 = vmatpush1.xpose.msra.mxu0 0.0
    %2902 = vmatprep.subr.mxu0 0.0
    %2903 = vmatpush1.xpose.msra.mxu0 0.0
    %2904 = vmatprep.subr.mxu0 0.0
    %2905 = vmatpush1.xpose.msra.mxu0 0.0
    %2906 = vmatprep.subr.mxu0 0.0
    %2907 = vmatpush1.xpose.msra.mxu0 0.0
    %2908 = vmatprep.subr.mxu0 0.0
    %2909 = vmatpush1.xpose.msra.mxu0 0.0
    %2910 = vmatprep.subr.mxu0 0.0
    %2911 = vmatpush1.xpose.msra.mxu0 0.0
    %2912 = vmatprep.subr.mxu0 0.0
    %2913 = vmatpush1.xpose.msra.mxu0 0.0
    %2914 = vmatprep.subr.mxu0 0.0
    %2915 = vmatpush1.xpose.msra.mxu0 0.0
    %2916 = vmatprep.subr.mxu0 0.0
    %2917 = vmatpush1.xpose.msra.mxu0 0.0
    %2918 = vmatprep.subr.mxu0 0.0
    %2919 = vmatpush1.xpose.msra.mxu0 0.0
    %2920 = vmatprep.subr.mxu0 0.0
    %2921 = vmatpush1.xpose.msra.mxu0 0.0
    %2922 = vmatprep.subr.mxu0 0.0
    %2923 = vmatpush1.xpose.msra.mxu0 0.0
    %2924 = vmatprep.subr.mxu0 0.0
    %2925 = vmatpush1.xpose.msra.mxu0 0.0
    %2926 = vmatprep.subr.mxu0 0.0
    %2927 = vmatpush1.xpose.msra.mxu0 0.0
    %2928 = vmatprep.subr.mxu0 0.0
    %2929 = vmatpush1.xpose.msra.mxu0 0.0
    %2930 = vmatprep.subr.mxu0 0.0
    %2931 = vmatpush1.xpose.msra.mxu0 0.0
    %2932 = vmatprep.subr.mxu0 0.0
    %2933 = vmatpush1.xpose.msra.mxu0 0.0
    %2934 = vmatprep.subr.mxu0 0.0
    %2935 = vmatpush1.xpose.msra.mxu0 0.0
    %2936 = vmatprep.subr.mxu0 0.0
    %2937 = vmatpush1.xpose.msra.mxu0 0.0
    %2938 = vmatprep.mubr.f32.mxu0 0.0
    %2939 = vmatmul.mubr.f32.gmra.mrb[0].mxu0 %v2479
    %v2940 = vpop.f32.mrb[0].mxu0
    %v2941 = vadd.f32 0.0, %v2940
    %v2942 = vpop.f32.mrb[0].mxu0
    %2943 = vmatprep.mubr.f32.mxu0 0.0
    %2944 = vmatmul.mubr.f32.gmra.mrb[0].mxu0 %v2485
    %v2945 = vpop.f32.mrb[0].mxu0
    %v2946 = vadd.f32 0.0, %v2945
    %v2947 = vpop.f32.mrb[0].mxu0
    %2948 = vdwg.mxu0
    %2949 = vmatprep.subr.mxu0 0.0
    %2950 = vmatpush1.xpose.msra.mxu0 %v2635
    %2951 = vmatprep.subr.mxu0 0.0
    %2952 = vmatpush1.xpose.msra.mxu0 %v2641
    %2953 = vmatprep.subr.mxu0 0.0
    %2954 = vmatpush1.xpose.msra.mxu0 0.0
    %2955 = vmatprep.subr.mxu0 0.0
    %2956 = vmatpush1.xpose.msra.mxu0 0.0
    %2957 = vmatprep.subr.mxu0 0.0
    %2958 = vmatpush1.xpose.msra.mxu0 0.0
    %2959 = vmatprep.subr.mxu0 0.0
    %2960 = vmatpush1.xpose.msra.mxu0 0.0
    %2961 = vmatprep.subr.mxu0 0.0
    %2962 = vmatpush1.xpose.msra.mxu0 0.0
    %2963 = vmatprep.subr.mxu0 0.0
    %2964 = vmatpush1.xpose.msra.mxu0 0.0
    %2965 = vmatprep.subr.mxu0 0.0
    %2966 = vmatpush1.xpose.msra.mxu0 0.0
    %2967 = vmatprep.subr.mxu0 0.0
    %2968 = vmatpush1.xpose.msra.mxu0 0.0
    %2969 = vmatprep.subr.mxu0 0.0
    %2970 = vmatpush1.xpose.msra.mxu0 0.0
    %2971 = vmatprep.subr.mxu0 0.0
    %2972 = vmatpush1.xpose.msra.mxu0 0.0
    %2973 = vmatprep.subr.mxu0 0.0
    %2974 = vmatpush1.xpose.msra.mxu0 0.0
    %2975 = vmatprep.subr.mxu0 0.0
    %2976 = vmatpush1.xpose.msra.mxu0 0.0
    %2977 = vmatprep.subr.mxu0 0.0
    %2978 = vmatpush1.xpose.msra.mxu0 0.0
    %2979 = vmatprep.subr.mxu0 0.0
    %2980 = vmatpush1.xpose.msra.mxu0 0.0
    %2981 = vmatprep.subr.mxu0 0.0
    %2982 = vmatpush1.xpose.msra.mxu0 0.0
    %2983 = vmatprep.subr.mxu0 0.0
    %2984 = vmatpush1.xpose.msra.mxu0 0.0
    %2985 = vmatprep.subr.mxu0 0.0
    %2986 = vmatpush1.xpose.msra.mxu0 0.0
    %2987 = vmatprep.subr.mxu0 0.0
    %2988 = vmatpush1.xpose.msra.mxu0 0.0
    %2989 = vmatprep.subr.mxu0 0.0
    %2990 = vmatpush1.xpose.msra.mxu0 0.0
    %2991 = vmatprep.subr.mxu0 0.0
    %2992 = vmatpush1.xpose.msra.mxu0 0.0
    %2993 = vmatprep.subr.mxu0 0.0
    %2994 = vmatpush1.xpose.msra.mxu0 0.0
    %2995 = vmatprep.subr.mxu0 0.0
    %2996 = vmatpush1.xpose.msra.mxu0 0.0
    %2997 = vmatprep.subr.mxu0 0.0
    %2998 = vmatpush1.xpose.msra.mxu0 0.0
    %2999 = vmatprep.subr.mxu0 0.0
    %3000 = vmatpush1.xpose.msra.mxu0 0.0
    %3001 = vmatprep.subr.mxu0 0.0
    %3002 = vmatpush1.xpose.msra.mxu0 0.0
    %3003 = vmatprep.subr.mxu0 0.0
    %3004 = vmatpush1.xpose.msra.mxu0 0.0
    %3005 = vmatprep.subr.mxu0 0.0
    %3006 = vmatpush1.xpose.msra.mxu0 0.0
    %3007 = vmatprep.subr.mxu0 0.0
    %3008 = vmatpush1.xpose.msra.mxu0 0.0
    %3009 = vmatprep.subr.mxu0 0.0
    %3010 = vmatpush1.xpose.msra.mxu0 0.0
    %3011 = vmatprep.subr.mxu0 0.0
    %3012 = vmatpush1.xpose.msra.mxu0 0.0
    %3013 = vmatprep.mubr.f32.mxu0 0.0
    %3014 = vmatmul.mubr.f32.gmra.mrb[0].mxu0 %v2481
    %v3015 = vpop.f32.mrb[0].mxu0
    %v3016 = vadd.f32 0.0, %v3015
    %v3017 = vpop.f32.mrb[0].mxu0
    %3018 = vmatprep.mubr.f32.mxu0 0.0
    %3019 = vmatmul.mubr.f32.gmra.mrb[0].mxu0 %v2487
    %v3020 = vpop.f32.mrb[0].mxu0
    %v3021 = vadd.f32 0.0, %v3020
    %v3022 = vpop.f32.mrb[0].mxu0
    %3023 = vdwg.mxu0
    %3024 = vmatprep.subr.mxu0 0.0
    %3025 = vmatpush1.xpose.msra.mxu0 %v2710
    %3026 = vmatprep.subr.mxu0 0.0
    %3027 = vmatpush1.xpose.msra.mxu0 %v2716
    %3028 = vmatprep.subr.mxu0 0.0
    %3029 = vmatpush1.xpose.msra.mxu0 0.0
    %3030 = vmatprep.subr.mxu0 0.0
    %3031 = vmatpush1.xpose.msra.mxu0 0.0
    %3032 = vmatprep.subr.mxu0 0.0
    %3033 = vmatpush1.xpose.msra.mxu0 0.0
    %3034 = vmatprep.subr.mxu0 0.0
    %3035 = vmatpush1.xpose.msra.mxu0 0.0
    %3036 = vmatprep.subr.mxu0 0.0
    %3037 = vmatpush1.xpose.msra.mxu0 0.0
    %3038 = vmatprep.subr.mxu0 0.0
    %3039 = vmatpush1.xpose.msra.mxu0 0.0
    %3040 = vmatprep.subr.mxu0 0.0
    %3041 = vmatpush1.xpose.msra.mxu0 0.0
    %3042 = vmatprep.subr.mxu0 0.0
    %3043 = vmatpush1.xpose.msra.mxu0 0.0
    %3044 = vmatprep.subr.mxu0 0.0
    %3045 = vmatpush1.xpose.msra.mxu0 0.0
    %3046 = vmatprep.subr.mxu0 0.0
    %3047 = vmatpush1.xpose.msra.mxu0 0.0
    %3048 = vmatprep.subr.mxu0 0.0
    %3049 = vmatpush1.xpose.msra.mxu0 0.0
    %3050 = vmatprep.subr.mxu0 0.0
    %3051 = vmatpush1.xpose.msra.mxu0 0.0
    %3052 = vmatprep.subr.mxu0 0.0
    %3053 = vmatpush1.xpose.msra.mxu0 0.0
    %3054 = vmatprep.subr.mxu0 0.0
    %3055 = vmatpush1.xpose.msra.mxu0 0.0
    %3056 = vmatprep.subr.mxu0 0.0
    %3057 = vmatpush1.xpose.msra.mxu0 0.0
    %3058 = vmatprep.subr.mxu0 0.0
    %3059 = vmatpush1.xpose.msra.mxu0 0.0
    %3060 = vmatprep.subr.mxu0 0.0
    %3061 = vmatpush1.xpose.msra.mxu0 0.0
    %3062 = vmatprep.subr.mxu0 0.0
    %3063 = vmatpush1.xpose.msra.mxu0 0.0
    %3064 = vmatprep.subr.mxu0 0.0
    %3065 = vmatpush1.xpose.msra.mxu0 0.0
    %3066 = vmatprep.subr.mxu0 0.0
    %3067 = vmatpush1.xpose.msra.mxu0 0.0
    %3068 = vmatprep.subr.mxu0 0.0
    %3069 = vmatpush1.xpose.msra.mxu0 0.0
    %3070 = vmatprep.subr.mxu0 0.0
    %3071 = vmatpush1.xpose.msra.mxu0 0.0
    %3072 = vmatprep.subr.mxu0 0.0
    %3073 = vmatpush1.xpose.msra.mxu0 0.0
    %3074 = vmatprep.subr.mxu0 0.0
    %3075 = vmatpush1.xpose.msra.mxu0 0.0
    %3076 = vmatprep.subr.mxu0 0.0
    %3077 = vmatpush1.xpose.msra.mxu0 0.0
    %3078 = vmatprep.subr.mxu0 0.0
    %3079 = vmatpush1.xpose.msra.mxu0 0.0
    %3080 = vmatprep.subr.mxu0 0.0
    %3081 = vmatpush1.xpose.msra.mxu0 0.0
    %3082 = vmatprep.subr.mxu0 0.0
    %3083 = vmatpush1.xpose.msra.mxu0 0.0
    %3084 = vmatprep.subr.mxu0 0.0
    %3085 = vmatpush1.xpose.msra.mxu0 0.0
    %3086 = vmatprep.subr.mxu0 0.0
    %3087 = vmatpush1.xpose.msra.mxu0 0.0
    %3088 = vmatprep.mubr.f32.mxu0 0.0
    %3089 = vmatmul.mubr.f32.gmra.mrb[0].mxu0 %v2556
    %v3090 = vpop.f32.mrb[0].mxu0
    %v3091 = vadd.f32 0.0, %v3090
    %v3092 = vpop.f32.mrb[0].mxu0
    %3093 = vmatprep.mubr.f32.mxu0 0.0
    %3094 = vmatmul.mubr.f32.gmra.mrb[0].mxu0 %v2562
    %v3095 = vpop.f32.mrb[0].mxu0
    %v3096 = vadd.f32 0.0, %v3095
    %v3097 = vpop.f32.mrb[0].mxu0
    %3098 = vdwg.mxu0
    %3099 = vmatprep.subr.mxu0 0.0
    %3100 = vmatpush1.xpose.msra.mxu0 %v2712
    %3101 = vmatprep.subr.mxu0 0.0
    %3102 = vmatpush1.xpose.msra.mxu0 %v2718
    %3103 = vmatprep.subr.mxu0 0.0
    %3104 = vmatpush1.xpose.msra.mxu0 0.0
    %3105 = vmatprep.subr.mxu0 0.0
    %3106 = vmatpush1.xpose.msra.mxu0 0.0
    %3107 = vmatprep.subr.mxu0 0.0
    %3108 = vmatpush1.xpose.msra.mxu0 0.0
    %3109 = vmatprep.subr.mxu0 0.0
    %3110 = vmatpush1.xpose.msra.mxu0 0.0
    %3111 = vmatprep.subr.mxu0 0.0
    %3112 = vmatpush1.xpose.msra.mxu0 0.0
    %3113 = vmatprep.subr.mxu0 0.0
    %3114 = vmatpush1.xpose.msra.mxu0 0.0
    %3115 = vmatprep.subr.mxu0 0.0
    %3116 = vmatpush1.xpose.msra.mxu0 0.0
    %3117 = vmatprep.subr.mxu0 0.0
    %3118 = vmatpush1.xpose.msra.mxu0 0.0
    %3119 = vmatprep.subr.mxu0 0.0
    %3120 = vmatpush1.xpose.msra.mxu0 0.0
    %3121 = vmatprep.subr.mxu0 0.0
    %3122 = vmatpush1.xpose.msra.mxu0 0.0
    %3123 = vmatprep.subr.mxu0 0.0
    %3124 = vmatpush1.xpose.msra.mxu0 0.0
    %3125 = vmatprep.subr.mxu0 0.0
    %3126 = vmatpush1.xpose.msra.mxu0 0.0
    %3127 = vmatprep.subr.mxu0 0.0
    %3128 = vmatpush1.xpose.msra.mxu0 0.0
    %3129 = vmatprep.subr.mxu0 0.0
    %3130 = vmatpush1.xpose.msra.mxu0 0.0
    %3131 = vmatprep.subr.mxu0 0.0
    %3132 = vmatpush1.xpose.msra.mxu0 0.0
    %3133 = vmatprep.subr.mxu0 0.0
    %3134 = vmatpush1.xpose.msra.mxu0 0.0
    %3135 = vmatprep.subr.mxu0 0.0
    %3136 = vmatpush1.xpose.msra.mxu0 0.0
    %3137 = vmatprep.subr.mxu0 0.0
    %3138 = vmatpush1.xpose.msra.mxu0 0.0
    %3139 = vmatprep.subr.mxu0 0.0
    %3140 = vmatpush1.xpose.msra.mxu0 0.0
    %3141 = vmatprep.subr.mxu0 0.0
    %3142 = vmatpush1.xpose.msra.mxu0 0.0
    %3143 = vmatprep.subr.mxu0 0.0
    %3144 = vmatpush1.xpose.msra.mxu0 0.0
    %3145 = vmatprep.subr.mxu0 0.0
    %3146 = vmatpush1.xpose.msra.mxu0 0.0
    %3147 = vmatprep.subr.mxu0 0.0
    %3148 = vmatpush1.xpose.msra.mxu0 0.0
    %3149 = vmatprep.subr.mxu0 0.0
    %3150 = vmatpush1.xpose.msra.mxu0 0.0
    %3151 = vmatprep.subr.mxu0 0.0
    %3152 = vmatpush1.xpose.msra.mxu0 0.0
    %3153 = vmatprep.subr.mxu0 0.0
    %3154 = vmatpush1.xpose.msra.mxu0 0.0
    %3155 = vmatprep.subr.mxu0 0.0
    %3156 = vmatpush1.xpose.msra.mxu0 0.0
    %3157 = vmatprep.subr.mxu0 0.0
    %3158 = vmatpush1.xpose.msra.mxu0 0.0
    %3159 = vmatprep.subr.mxu0 0.0
    %3160 = vmatpush1.xpose.msra.mxu0 0.0
    %3161 = vmatprep.subr.mxu0 0.0
    %3162 = vmatpush1.xpose.msra.mxu0 0.0
    %3163 = vmatprep.mubr.f32.mxu0 0.0
    %3164 = vmatmul.mubr.f32.gmra.mrb[0].mxu0 %v2558
    %v3165 = vpop.f32.mrb[0].mxu0
    %v3166 = vadd.f32 0.0, %v3165
    %v3167 = vpop.f32.mrb[0].mxu0
    %3168 = vmatprep.mubr.f32.mxu0 0.0
    %3169 = vmatmul.mubr.f32.gmra.mrb[0].mxu0 %v2564
    %v3170 = vpop.f32.mrb[0].mxu0
    %v3171 = vadd.f32 0.0, %v3170
    %v3172 = vpop.f32.mrb[0].mxu0
    %3173 = vdwg.mxu0
    %v3174 = vmul.f32 %v2941, 0.35355338
    %v3175 = vmul.f32 %v2946, 0.35355338
    %v3176 = vmul.f32 %v3016, 0.35355338
    %v3177 = vmul.f32 %v3021, 0.35355338
    %v3178 = vmul.f32 %v3091, 0.35355338
    %v3179 = vmul.f32 %v3096, 0.35355338
    %v3180 = vmul.f32 %v3166, 0.35355338
    %v3181 = vmul.f32 %v3171, 0.35355338
    %v3182 = vadd.f32 %v3174, %v146
    %v3183 = vadd.f32 %v3175, %v147
    %v3184 = vadd.f32 %v3176, %v148
    %v3185 = vadd.f32 %v3177, %v149
    %v3186 = vadd.f32 %v3178, %v150
    %v3187 = vadd.f32 %v3179, %v151
    %v3188 = vadd.f32 %v3180, %v152
    %v3189 = vadd.f32 %v3181, %v153
    %v3190 = vsel %vm1229, %v3182, -inf
    %3191 = vmax.xlane.f32.xlu0 %v3190
    %v3192 = vpop.xlane.xlu0 %3191
    %v3193 = vsel %vm1229, %v3183, -inf
    %3194 = vmax.xlane.f32.xlu0 %v3193
    %v3195 = vpop.xlane.xlu0 %3194
    %v3196 = vsel %vm1229, %v3184, -inf
    %3197 = vmax.xlane.f32.xlu0 %v3196
    %v3198 = vpop.xlane.xlu0 %3197
    %v3199 = vsel %vm1229, %v3185, -inf
    %3200 = vmax.xlane.f32.xlu0 %v3199
    %v3201 = vpop.xlane.xlu0 %3200
    %v3202 = vsel %vm1229, %v3186, -inf
    %3203 = vmax.xlane.f32.xlu0 %v3202
    %v3204 = vpop.xlane.xlu0 %3203
    %v3205 = vsel %vm1229, %v3187, -inf
    %3206 = vmax.xlane.f32.xlu0 %v3205
    %v3207 = vpop.xlane.xlu0 %3206
    %v3208 = vsel %vm1229, %v3188, -inf
    %3209 = vmax.xlane.f32.xlu0 %v3208
    %v3210 = vpop.xlane.xlu0 %3209
    %v3211 = vsel %vm1229, %v3189, -inf
    %3212 = vmax.xlane.f32.xlu0 %v3211
    %v3213 = vpop.xlane.xlu0 %3212
    %v3214 = vsub.f32 %v3182, %v3192
    %v3215 = vsub.f32 %v3183, %v3195
    %v3216 = vsub.f32 %v3184, %v3198
    %v3217 = vsub.f32 %v3185, %v3201
    %v3218 = vsub.f32 %v3186, %v3204
    %v3219 = vsub.f32 %v3187, %v3207
    %v3220 = vsub.f32 %v3188, %v3210
    %v3221 = vsub.f32 %v3189, %v3213
    %v3222 = vmul.f32 %v3214, 1.442695
    %v3223 = vpow.pop %v3222
    %v3224 = vmul.f32 %v3215, 1.442695
    %v3225 = vpow.pop %v3224
    %v3226 = vmul.f32 %v3216, 1.442695
    %v3227 = vpow.pop %v3226
    %v3228 = vmul.f32 %v3217, 1.442695
    %v3229 = vpow.pop %v3228
    %v3230 = vmul.f32 %v3218, 1.442695
    %v3231 = vpow.pop %v3230
    %v3232 = vmul.f32 %v3219, 1.442695
    %v3233 = vpow.pop %v3232
    %v3234 = vmul.f32 %v3220, 1.442695
    %v3235 = vpow.pop %v3234
    %v3236 = vmul.f32 %v3221, 1.442695
    %v3237 = vpow.pop %v3236
    %v3238 = vsel %vm1229, %v3223, 0.0
    %3239 = vadd.xlane.f32.xlu0 %v3238
    %v3240 = vpop.xlane.xlu0 %3239
    %v3241 = vsel %vm1229, %v3225, 0.0
    %3242 = vadd.xlane.f32.xlu0 %v3241
    %v3243 = vpop.xlane.xlu0 %3242
    %v3244 = vsel %vm1229, %v3227, 0.0
    %3245 = vadd.xlane.f32.xlu0 %v3244
    %v3246 = vpop.xlane.xlu0 %3245
    %v3247 = vsel %vm1229, %v3229, 0.0
    %3248 = vadd.xlane.f32.xlu0 %v3247
    %v3249 = vpop.xlane.xlu0 %3248
    %v3250 = vsel %vm1229, %v3231, 0.0
    %3251 = vadd.xlane.f32.xlu0 %v3250
    %v3252 = vpop.xlane.xlu0 %3251
    %v3253 = vsel %vm1229, %v3233, 0.0
    %3254 = vadd.xlane.f32.xlu0 %v3253
    %v3255 = vpop.xlane.xlu0 %3254
    %v3256 = vsel %vm1229, %v3235, 0.0
    %3257 = vadd.xlane.f32.xlu0 %v3256
    %v3258 = vpop.xlane.xlu0 %3257
    %v3259 = vsel %vm1229, %v3237, 0.0
    %3260 = vadd.xlane.f32.xlu0 %v3259
    %v3261 = vpop.xlane.xlu0 %3260
    %v3262 = vrcp.pop %v3240
    %v3263 = vrcp.pop %v3243
    %v3264 = vrcp.pop %v3246
    %v3265 = vrcp.pop %v3249
    %v3266 = vrcp.pop %v3252
    %v3267 = vrcp.pop %v3255
    %v3268 = vrcp.pop %v3258
    %v3269 = vrcp.pop %v3261
    %v3270 = vmul.f32 %v3223, %v3262
    %v3271 = vmul.f32 %v3225, %v3263
    %v3272 = vmul.f32 %v3227, %v3264
    %v3273 = vmul.f32 %v3229, %v3265
    %v3274 = vmul.f32 %v3231, %v3266
    %v3275 = vmul.f32 %v3233, %v3267
    %v3276 = vmul.f32 %v3235, %v3268
    %v3277 = vmul.f32 %v3237, %v3269
    %v3279 = vsel %vm1229, %v3270, 0
    %v3282 = vsel %vm1229, %v3271, 0
    %3284 = vmatprep.subr.mxu0 0.0
    %3285 = vmatpush1.msra.mxu0 %v2787
    %3286 = vmatprep.subr.mxu0 0.0
    %3287 = vmatpush1.msra.mxu0 %v2793
    %3288 = vmatprep.subr.mxu0 0.0
    %3289 = vmatpush1.msra.mxu0 0.0
    %3290 = vmatprep.subr.mxu0 0.0
    %3291 = vmatpush1.msra.mxu0 0.0
    %3292 = vmatprep.subr.mxu0 0.0
    %3293 = vmatpush1.msra.mxu0 0.0
    %3294 = vmatprep.subr.mxu0 0.0
    %3295 = vmatpush1.msra.mxu0 0.0
    %3296 = vmatprep.subr.mxu0 0.0
    %3297 = vmatpush1.msra.mxu0 0.0
    %3298 = vmatprep.subr.mxu0 0.0
    %3299 = vmatpush1.msra.mxu0 0.0
    %3300 = vmatprep.subr.mxu0 0.0
    %3301 = vmatpush1.msra.mxu0 0.0
    %3302 = vmatprep.subr.mxu0 0.0
    %3303 = vmatpush1.msra.mxu0 0.0
    %3304 = vmatprep.subr.mxu0 0.0
    %3305 = vmatpush1.msra.mxu0 0.0
    %3306 = vmatprep.subr.mxu0 0.0
    %3307 = vmatpush1.msra.mxu0 0.0
    %3308 = vmatprep.subr.mxu0 0.0
    %3309 = vmatpush1.msra.mxu0 0.0
    %3310 = vmatprep.subr.mxu0 0.0
    %3311 = vmatpush1.msra.mxu0 0.0
    %3312 = vmatprep.subr.mxu0 0.0
    %3313 = vmatpush1.msra.mxu0 0.0
    %3314 = vmatprep.subr.mxu0 0.0
    %3315 = vmatpush1.msra.mxu0 0.0
    %3316 = vmatprep.subr.mxu0 0.0
    %3317 = vmatpush1.msra.mxu0 0.0
    %3318 = vmatprep.subr.mxu0 0.0
    %3319 = vmatpush1.msra.mxu0 0.0
    %3320 = vmatprep.subr.mxu0 0.0
    %3321 = vmatpush1.msra.mxu0 0.0
    %3322 = vmatprep.subr.mxu0 0.0
    %3323 = vmatpush1.msra.mxu0 0.0
    %3324 = vmatprep.subr.mxu0 0.0
    %3325 = vmatpush1.msra.mxu0 0.0
    %3326 = vmatprep.subr.mxu0 0.0
    %3327 = vmatpush1.msra.mxu0 0.0
    %3328 = vmatprep.subr.mxu0 0.0
    %3329 = vmatpush1.msra.mxu0 0.0
    %3330 = vmatprep.subr.mxu0 0.0
    %3331 = vmatpush1.msra.mxu0 0.0
    %3332 = vmatprep.subr.mxu0 0.0
    %3333 = vmatpush1.msra.mxu0 0.0
    %3334 = vmatprep.subr.mxu0 0.0
    %3335 = vmatpush1.msra.mxu0 0.0
    %3336 = vmatprep.subr.mxu0 0.0
    %3337 = vmatpush1.msra.mxu0 0.0
    %3338 = vmatprep.subr.mxu0 0.0
    %3339 = vmatpush1.msra.mxu0 0.0
    %3340 = vmatprep.subr.mxu0 0.0
    %3341 = vmatpush1.msra.mxu0 0.0
    %3342 = vmatprep.subr.mxu0 0.0
    %3343 = vmatpush1.msra.mxu0 0.0
    %3344 = vmatprep.subr.mxu0 0.0
    %3345 = vmatpush1.msra.mxu0 0.0
    %3346 = vmatprep.subr.mxu0 0.0
    %3347 = vmatpush1.msra.mxu0 0.0
    %3348 = vmatprep.mubr.f32.mxu0 0.0
    %3349 = vmatmul.mubr.f32.gmra.mrb[0].mxu0 %v3279
    %v3350 = vpop.f32.mrb[0].mxu0
    %v3351 = vadd.f32 0.0, %v3350
    %v3352 = vpop.f32.mrb[0].mxu0
    %3353 = vmatprep.mubr.f32.mxu0 0.0
    %3354 = vmatmul.mubr.f32.gmra.mrb[0].mxu0 %v3282
    %v3355 = vpop.f32.mrb[0].mxu0
    %v3356 = vadd.f32 0.0, %v3355
    %v3357 = vpop.f32.mrb[0].mxu0
    %3358 = vdwg.mxu0
    %v3360 = vsel %vm1229, %v3272, 0
    %v3363 = vsel %vm1229, %v3273, 0
    %3365 = vmatprep.subr.mxu0 0.0
    %3366 = vmatpush1.msra.mxu0 %v2789
    %3367 = vmatprep.subr.mxu0 0.0
    %3368 = vmatpush1.msra.mxu0 %v2795
    %3369 = vmatprep.subr.mxu0 0.0
    %3370 = vmatpush1.msra.mxu0 0.0
    %3371 = vmatprep.subr.mxu0 0.0
    %3372 = vmatpush1.msra.mxu0 0.0
    %3373 = vmatprep.subr.mxu0 0.0
    %3374 = vmatpush1.msra.mxu0 0.0
    %3375 = vmatprep.subr.mxu0 0.0
    %3376 = vmatpush1.msra.mxu0 0.0
    %3377 = vmatprep.subr.mxu0 0.0
    %3378 = vmatpush1.msra.mxu0 0.0
    %3379 = vmatprep.subr.mxu0 0.0
    %3380 = vmatpush1.msra.mxu0 0.0
    %3381 = vmatprep.subr.mxu0 0.0
    %3382 = vmatpush1.msra.mxu0 0.0
    %3383 = vmatprep.subr.mxu0 0.0
    %3384 = vmatpush1.msra.mxu0 0.0
    %3385 = vmatprep.subr.mxu0 0.0
    %3386 = vmatpush1.msra.mxu0 0.0
    %3387 = vmatprep.subr.mxu0 0.0
    %3388 = vmatpush1.msra.mxu0 0.0
    %3389 = vmatprep.subr.mxu0 0.0
    %3390 = vmatpush1.msra.mxu0 0.0
    %3391 = vmatprep.subr.mxu0 0.0
    %3392 = vmatpush1.msra.mxu0 0.0
    %3393 = vmatprep.subr.mxu0 0.0
    %3394 = vmatpush1.msra.mxu0 0.0
    %3395 = vmatprep.subr.mxu0 0.0
    %3396 = vmatpush1.msra.mxu0 0.0
    %3397 = vmatprep.subr.mxu0 0.0
    %3398 = vmatpush1.msra.mxu0 0.0
    %3399 = vmatprep.subr.mxu0 0.0
    %3400 = vmatpush1.msra.mxu0 0.0
    %3401 = vmatprep.subr.mxu0 0.0
    %3402 = vmatpush1.msra.mxu0 0.0
    %3403 = vmatprep.subr.mxu0 0.0
    %3404 = vmatpush1.msra.mxu0 0.0
    %3405 = vmatprep.subr.mxu0 0.0
    %3406 = vmatpush1.msra.mxu0 0.0
    %3407 = vmatprep.subr.mxu0 0.0
    %3408 = vmatpush1.msra.mxu0 0.0
    %3409 = vmatprep.subr.mxu0 0.0
    %3410 = vmatpush1.msra.mxu0 0.0
    %3411 = vmatprep.subr.mxu0 0.0
    %3412 = vmatpush1.msra.mxu0 0.0
    %3413 = vmatprep.subr.mxu0 0.0
    %3414 = vmatpush1.msra.mxu0 0.0
    %3415 = vmatprep.subr.mxu0 0.0
    %3416 = vmatpush1.msra.mxu0 0.0
    %3417 = vmatprep.subr.mxu0 0.0
    %3418 = vmatpush1.msra.mxu0 0.0
    %3419 = vmatprep.subr.mxu0 0.0
    %3420 = vmatpush1.msra.mxu0 0.0
    %3421 = vmatprep.subr.mxu0 0.0
    %3422 = vmatpush1.msra.mxu0 0.0
    %3423 = vmatprep.subr.mxu0 0.0
    %3424 = vmatpush1.msra.mxu0 0.0
    %3425 = vmatprep.subr.mxu0 0.0
    %3426 = vmatpush1.msra.mxu0 0.0
    %3427 = vmatprep.subr.mxu0 0.0
    %3428 = vmatpush1.msra.mxu0 0.0
    %3429 = vmatprep.mubr.f32.mxu0 0.0
    %3430 = vmatmul.mubr.f32.gmra.mrb[0].mxu0 %v3360
    %v3431 = vpop.f32.mrb[0].mxu0
    %v3432 = vadd.f32 0.0, %v3431
    %v3433 = vpop.f32.mrb[0].mxu0
    %3434 = vmatprep.mubr.f32.mxu0 0.0
    %3435 = vmatmul.mubr.f32.gmra.mrb[0].mxu0 %v3363
    %v3436 = vpop.f32.mrb[0].mxu0
    %v3437 = vadd.f32 0.0, %v3436
    %v3438 = vpop.f32.mrb[0].mxu0
    %3439 = vdwg.mxu0
    %v3441 = vsel %vm1229, %v3274, 0
    %v3444 = vsel %vm1229, %v3275, 0
    %3446 = vmatprep.subr.mxu0 0.0
    %3447 = vmatpush1.msra.mxu0 %v2864
    %3448 = vmatprep.subr.mxu0 0.0
    %3449 = vmatpush1.msra.mxu0 %v2870
    %3450 = vmatprep.subr.mxu0 0.0
    %3451 = vmatpush1.msra.mxu0 0.0
    %3452 = vmatprep.subr.mxu0 0.0
    %3453 = vmatpush1.msra.mxu0 0.0
    %3454 = vmatprep.subr.mxu0 0.0
    %3455 = vmatpush1.msra.mxu0 0.0
    %3456 = vmatprep.subr.mxu0 0.0
    %3457 = vmatpush1.msra.mxu0 0.0
    %3458 = vmatprep.subr.mxu0 0.0
    %3459 = vmatpush1.msra.mxu0 0.0
    %3460 = vmatprep.subr.mxu0 0.0
    %3461 = vmatpush1.msra.mxu0 0.0
    %3462 = vmatprep.subr.mxu0 0.0
    %3463 = vmatpush1.msra.mxu0 0.0
    %3464 = vmatprep.subr.mxu0 0.0
    %3465 = vmatpush1.msra.mxu0 0.0
    %3466 = vmatprep.subr.mxu0 0.0
    %3467 = vmatpush1.msra.mxu0 0.0
    %3468 = vmatprep.subr.mxu0 0.0
    %3469 = vmatpush1.msra.mxu0 0.0
    %3470 = vmatprep.subr.mxu0 0.0
    %3471 = vmatpush1.msra.mxu0 0.0
    %3472 = vmatprep.subr.mxu0 0.0
    %3473 = vmatpush1.msra.mxu0 0.0
    %3474 = vmatprep.subr.mxu0 0.0
    %3475 = vmatpush1.msra.mxu0 0.0
    %3476 = vmatprep.subr.mxu0 0.0
    %3477 = vmatpush1.msra.mxu0 0.0
    %3478 = vmatprep.subr.mxu0 0.0
    %3479 = vmatpush1.msra.mxu0 0.0
    %3480 = vmatprep.subr.mxu0 0.0
    %3481 = vmatpush1.msra.mxu0 0.0
    %3482 = vmatprep.subr.mxu0 0.0
    %3483 = vmatpush1.msra.mxu0 0.0
    %3484 = vmatprep.subr.mxu0 0.0
    %3485 = vmatpush1.msra.mxu0 0.0
    %3486 = vmatprep.subr.mxu0 0.0
    %3487 = vmatpush1.msra.mxu0 0.0
    %3488 = vmatprep.subr.mxu0 0.0
    %3489 = vmatpush1.msra.mxu0 0.0
    %3490 = vmatprep.subr.mxu0 0.0
    %3491 = vmatpush1.msra.mxu0 0.0
    %3492 = vmatprep.subr.mxu0 0.0
    %3493 = vmatpush1.msra.mxu0 0.0
    %3494 = vmatprep.subr.mxu0 0.0
    %3495 = vmatpush1.msra.mxu0 0.0
    %3496 = vmatprep.subr.mxu0 0.0
    %3497 = vmatpush1.msra.mxu0 0.0
    %3498 = vmatprep.subr.mxu0 0.0
    %3499 = vmatpush1.msra.mxu0 0.0
    %3500 = vmatprep.subr.mxu0 0.0
    %3501 = vmatpush1.msra.mxu0 0.0
    %3502 = vmatprep.subr.mxu0 0.0
    %3503 = vmatpush1.msra.mxu0 0.0
    %3504 = vmatprep.subr.mxu0 0.0
    %3505 = vmatpush1.msra.mxu0 0.0
    %3506 = vmatprep.subr.mxu0 0.0
    %3507 = vmatpush1.msra.mxu0 0.0
    %3508 = vmatprep.subr.mxu0 0.0
    %3509 = vmatpush1.msra.mxu0 0.0
    %3510 = vmatprep.mubr.f32.mxu0 0.0
    %3511 = vmatmul.mubr.f32.gmra.mrb[0].mxu0 %v3441
    %v3512 = vpop.f32.mrb[0].mxu0
    %v3513 = vadd.f32 0.0, %v3512
    %v3514 = vpop.f32.mrb[0].mxu0
    %3515 = vmatprep.mubr.f32.mxu0 0.0
    %3516 = vmatmul.mubr.f32.gmra.mrb[0].mxu0 %v3444
    %v3517 = vpop.f32.mrb[0].mxu0
    %v3518 = vadd.f32 0.0, %v3517
    %v3519 = vpop.f32.mrb[0].mxu0
    %3520 = vdwg.mxu0
    %v3522 = vsel %vm1229, %v3276, 0
    %v3525 = vsel %vm1229, %v3277, 0
    %3527 = vmatprep.subr.mxu0 0.0
    %3528 = vmatpush1.msra.mxu0 %v2866
    %3529 = vmatprep.subr.mxu0 0.0
    %3530 = vmatpush1.msra.mxu0 %v2872
    %3531 = vmatprep.subr.mxu0 0.0
    %3532 = vmatpush1.msra.mxu0 0.0
    %3533 = vmatprep.subr.mxu0 0.0
    %3534 = vmatpush1.msra.mxu0 0.0
    %3535 = vmatprep.subr.mxu0 0.0
    %3536 = vmatpush1.msra.mxu0 0.0
    %3537 = vmatprep.subr.mxu0 0.0
    %3538 = vmatpush1.msra.mxu0 0.0
    %3539 = vmatprep.subr.mxu0 0.0
    %3540 = vmatpush1.msra.mxu0 0.0
    %3541 = vmatprep.subr.mxu0 0.0
    %3542 = vmatpush1.msra.mxu0 0.0
    %3543 = vmatprep.subr.mxu0 0.0
    %3544 = vmatpush1.msra.mxu0 0.0
    %3545 = vmatprep.subr.mxu0 0.0
    %3546 = vmatpush1.msra.mxu0 0.0
    %3547 = vmatprep.subr.mxu0 0.0
    %3548 = vmatpush1.msra.mxu0 0.0
    %3549 = vmatprep.subr.mxu0 0.0
    %3550 = vmatpush1.msra.mxu0 0.0
    %3551 = vmatprep.subr.mxu0 0.0
    %3552 = vmatpush1.msra.mxu0 0.0
    %3553 = vmatprep.subr.mxu0 0.0
    %3554 = vmatpush1.msra.mxu0 0.0
    %3555 = vmatprep.subr.mxu0 0.0
    %3556 = vmatpush1.msra.mxu0 0.0
    %3557 = vmatprep.subr.mxu0 0.0
    %3558 = vmatpush1.msra.mxu0 0.0
    %3559 = vmatprep.subr.mxu0 0.0
    %3560 = vmatpush1.msra.mxu0 0.0
    %3561 = vmatprep.subr.mxu0 0.0
    %3562 = vmatpush1.msra.mxu0 0.0
    %3563 = vmatprep.subr.mxu0 0.0
    %3564 = vmatpush1.msra.mxu0 0.0
    %3565 = vmatprep.subr.mxu0 0.0
    %3566 = vmatpush1.msra.mxu0 0.0
    %3567 = vmatprep.subr.mxu0 0.0
    %3568 = vmatpush1.msra.mxu0 0.0
    %3569 = vmatprep.subr.mxu0 0.0
    %3570 = vmatpush1.msra.mxu0 0.0
    %3571 = vmatprep.subr.mxu0 0.0
    %3572 = vmatpush1.msra.mxu0 0.0
    %3573 = vmatprep.subr.mxu0 0.0
    %3574 = vmatpush1.msra.mxu0 0.0
    %3575 = vmatprep.subr.mxu0 0.0
    %3576 = vmatpush1.msra.mxu0 0.0
    %3577 = vmatprep.subr.mxu0 0.0
    %3578 = vmatpush1.msra.mxu0 0.0
    %3579 = vmatprep.subr.mxu0 0.0
    %3580 = vmatpush1.msra.mxu0 0.0
    %3581 = vmatprep.subr.mxu0 0.0
    %3582 = vmatpush1.msra.mxu0 0.0
    %3583 = vmatprep.subr.mxu0 0.0
    %3584 = vmatpush1.msra.mxu0 0.0
    %3585 = vmatprep.subr.mxu0 0.0
    %3586 = vmatpush1.msra.mxu0 0.0
    %3587 = vmatprep.subr.mxu0 0.0
    %3588 = vmatpush1.msra.mxu0 0.0
    %3589 = vmatprep.subr.mxu0 0.0
    %3590 = vmatpush1.msra.mxu0 0.0
    %3591 = vmatprep.mubr.f32.mxu0 0.0
    %3592 = vmatmul.mubr.f32.gmra.mrb[0].mxu0 %v3522
    %v3593 = vpop.f32.mrb[0].mxu0
    %v3594 = vadd.f32 0.0, %v3593
    %v3595 = vpop.f32.mrb[0].mxu0
    %3596 = vmatprep.mubr.f32.mxu0 0.0
    %3597 = vmatmul.mubr.f32.gmra.mrb[0].mxu0 %v3525
    %v3598 = vpop.f32.mrb[0].mxu0
    %v3599 = vadd.f32 0.0, %v3598
    %v3600 = vpop.f32.mrb[0].mxu0
    %3601 = vdwg.mxu0
    %s3602 = scalar_lea.vmem [#allocation7], 512
    %v3603 = vld [vmem:[%s3602] sm:$0xff]
    %v3604 = vld [vmem:[%s3602 + $0x8] sm:$0xff]
    %v3605 = vld [vmem:[%s3602 + $0x10] sm:$0xff]
    %v3606 = vld [vmem:[%s3602 + $0x18] sm:$0xff]
    %v3607 = vld [vmem:[%s3602 + $0x20] sm:$0xff]
    %v3608 = vld [vmem:[%s3602 + $0x28] sm:$0xff]
    %v3609 = vld [vmem:[%s3602 + $0x30] sm:$0xff]
    %v3610 = vld [vmem:[%s3602 + $0x38] sm:$0xff]
    %v3611 = vld [vmem:[%s3602 + $0x40] sm:$0xff]
    %v3612 = vld [vmem:[%s3602 + $0x48] sm:$0xff]
    %v3613 = vld [vmem:[%s3602 + $0x50] sm:$0xff]
    %v3614 = vld [vmem:[%s3602 + $0x58] sm:$0xff]
    %v3615 = vld [vmem:[%s3602 + $0x60] sm:$0xff]
    %v3616 = vld [vmem:[%s3602 + $0x68] sm:$0xff]
    %v3617 = vld [vmem:[%s3602 + $0x70] sm:$0xff]
    %v3618 = vld [vmem:[%s3602 + $0x78] sm:$0xff]
    %v3619 = vld [vmem:[%s3602 + $0x80] sm:$0xff]
    %v3620 = vld [vmem:[%s3602 + $0x88] sm:$0xff]
    %v3621 = vld [vmem:[%s3602 + $0x90] sm:$0xff]
    %v3622 = vld [vmem:[%s3602 + $0x98] sm:$0xff]
    %v3623 = vld [vmem:[%s3602 + $0xa0] sm:$0xff]
    %v3624 = vld [vmem:[%s3602 + $0xa8] sm:$0xff]
    %v3625 = vld [vmem:[%s3602 + $0xb0] sm:$0xff]
    %v3626 = vld [vmem:[%s3602 + $0xb8] sm:$0xff]
    %v3627 = vld [vmem:[%s3602 + $0xc0] sm:$0xff]
    %v3628 = vld [vmem:[%s3602 + $0xc8] sm:$0xff]
    %v3629 = vld [vmem:[%s3602 + $0xd0] sm:$0xff]
    %v3630 = vld [vmem:[%s3602 + $0xd8] sm:$0xff]
    %v3631 = vld [vmem:[%s3602 + $0xe0] sm:$0xff]
    %v3632 = vld [vmem:[%s3602 + $0xe8] sm:$0xff]
    %v3633 = vld [vmem:[%s3602 + $0xf0] sm:$0xff]
    %v3634 = vld [vmem:[%s3602 + $0xf8] sm:$0xff]
    %v3635 = vld [vmem:[%s3602 + $0x100] sm:$0xff]
    %v3636 = vld [vmem:[%s3602 + $0x108] sm:$0xff]
    %v3637 = vld [vmem:[%s3602 + $0x110] sm:$0xff]
    %v3638 = vld [vmem:[%s3602 + $0x118] sm:$0xff]
    %v3639 = vld [vmem:[%s3602 + $0x120] sm:$0xff]
    %v3640 = vld [vmem:[%s3602 + $0x128] sm:$0xff]
    %v3641 = vld [vmem:[%s3602 + $0x130] sm:$0xff]
    %v3642 = vld [vmem:[%s3602 + $0x138] sm:$0xff]
    %v3643 = vld [vmem:[%s3602 + $0x140] sm:$0xff]
    %v3644 = vld [vmem:[%s3602 + $0x148] sm:$0xff]
    %v3645 = vld [vmem:[%s3602 + $0x150] sm:$0xff]
    %v3646 = vld [vmem:[%s3602 + $0x158] sm:$0xff]
    %v3647 = vld [vmem:[%s3602 + $0x160] sm:$0xff]
    %v3648 = vld [vmem:[%s3602 + $0x168] sm:$0xff]
    %v3649 = vld [vmem:[%s3602 + $0x170] sm:$0xff]
    %v3650 = vld [vmem:[%s3602 + $0x178] sm:$0xff]
    %v3651 = vld [vmem:[%s3602 + $0x180] sm:$0xff]
    %v3652 = vld [vmem:[%s3602 + $0x188] sm:$0xff]
    %v3653 = vld [vmem:[%s3602 + $0x190] sm:$0xff]
    %v3654 = vld [vmem:[%s3602 + $0x198] sm:$0xff]
    %v3655 = vld [vmem:[%s3602 + $0x1a0] sm:$0xff]
    %v3656 = vld [vmem:[%s3602 + $0x1a8] sm:$0xff]
    %v3657 = vld [vmem:[%s3602 + $0x1b0] sm:$0xff]
    %v3658 = vld [vmem:[%s3602 + $0x1b8] sm:$0xff]
    %v3659 = vld [vmem:[%s3602 + $0x1c0] sm:$0xff]
    %v3660 = vld [vmem:[%s3602 + $0x1c8] sm:$0xff]
    %v3661 = vld [vmem:[%s3602 + $0x1d0] sm:$0xff]
    %v3662 = vld [vmem:[%s3602 + $0x1d8] sm:$0xff]
    %v3663 = vld [vmem:[%s3602 + $0x1e0] sm:$0xff]
    %v3664 = vld [vmem:[%s3602 + $0x1e8] sm:$0xff]
    %v3665 = vld [vmem:[%s3602 + $0x1f0] sm:$0xff]
    %v3666 = vld [vmem:[%s3602 + $0x1f8] sm:$0xff]
    %v3667 = vlaneseq
    %v3668 = vshrl.u32 %v3667, 7
    %v3669 = vsub.s32 0, %v3668
    %v3670 = vrot.slane %v2153, %v3669
    %3671 = vmatprep.subr.mxu0 0.0
    %3672 = vmatpush1.msra.mxu0 %v3603
    %3673 = vmatprep.subr.mxu0 0.0
    %3674 = vmatpush1.msra.mxu0 %v3604
    %3675 = vmatprep.subr.mxu0 0.0
    %3676 = vmatpush1.msra.mxu0 %v3605
    %3677 = vmatprep.subr.mxu0 0.0
    %3678 = vmatpush1.msra.mxu0 %v3606
    %3679 = vmatprep.subr.mxu0 0.0
    %3680 = vmatpush1.msra.mxu0 %v3607
    %3681 = vmatprep.subr.mxu0 0.0
    %3682 = vmatpush1.msra.mxu0 %v3608
    %3683 = vmatprep.subr.mxu0 0.0
    %3684 = vmatpush1.msra.mxu0 %v3609
    %3685 = vmatprep.subr.mxu0 0.0
    %3686 = vmatpush1.msra.mxu0 %v3610
    %3687 = vmatprep.subr.mxu0 0.0
    %3688 = vmatpush1.msra.mxu0 %v3611
    %3689 = vmatprep.subr.mxu0 0.0
    %3690 = vmatpush1.msra.mxu0 %v3612
    %3691 = vmatprep.subr.mxu0 0.0
    %3692 = vmatpush1.msra.mxu0 %v3613
    %3693 = vmatprep.subr.mxu0 0.0
    %3694 = vmatpush1.msra.mxu0 %v3614
    %3695 = vmatprep.subr.mxu0 0.0
    %3696 = vmatpush1.msra.mxu0 %v3615
    %3697 = vmatprep.subr.mxu0 0.0
    %3698 = vmatpush1.msra.mxu0 %v3616
    %3699 = vmatprep.subr.mxu0 0.0
    %3700 = vmatpush1.msra.mxu0 %v3617
    %3701 = vmatprep.subr.mxu0 0.0
    %3702 = vmatpush1.msra.mxu0 %v3618
    %3703 = vmatprep.subr.mxu0 0.0
    %3704 = vmatpush1.msra.mxu0 %v3619
    %3705 = vmatprep.subr.mxu0 0.0
    %3706 = vmatpush1.msra.mxu0 %v3620
    %3707 = vmatprep.subr.mxu0 0.0
    %3708 = vmatpush1.msra.mxu0 %v3621
    %3709 = vmatprep.subr.mxu0 0.0
    %3710 = vmatpush1.msra.mxu0 %v3622
    %3711 = vmatprep.subr.mxu0 0.0
    %3712 = vmatpush1.msra.mxu0 %v3623
    %3713 = vmatprep.subr.mxu0 0.0
    %3714 = vmatpush1.msra.mxu0 %v3624
    %3715 = vmatprep.subr.mxu0 0.0
    %3716 = vmatpush1.msra.mxu0 %v3625
    %3717 = vmatprep.subr.mxu0 0.0
    %3718 = vmatpush1.msra.mxu0 %v3626
    %3719 = vmatprep.subr.mxu0 0.0
    %3720 = vmatpush1.msra.mxu0 %v3627
    %3721 = vmatprep.subr.mxu0 0.0
    %3722 = vmatpush1.msra.mxu0 %v3628
    %3723 = vmatprep.subr.mxu0 0.0
    %3724 = vmatpush1.msra.mxu0 %v3629
    %3725 = vmatprep.subr.mxu0 0.0
    %3726 = vmatpush1.msra.mxu0 %v3630
    %3727 = vmatprep.subr.mxu0 0.0
    %3728 = vmatpush1.msra.mxu0 %v3631
    %3729 = vmatprep.subr.mxu0 0.0
    %3730 = vmatpush1.msra.mxu0 %v3632
    %3731 = vmatprep.subr.mxu0 0.0
    %3732 = vmatpush1.msra.mxu0 %v3633
    %3733 = vmatprep.subr.mxu0 0.0
    %3734 = vmatpush1.msra.mxu0 %v3634
    %3735 = vmatprep.mubr.f32.mxu0 %v3432
    %3736 = vmatmul.mubr.f32.gmra.mrb[0].mxu0 %v3351
    %v3737 = vpop.f32.mrb[0].mxu0
    %v3738 = vadd.f32 %v3670, %v3737
    %v3739 = vpop.f32.mrb[0].mxu0
    %3740 = vmatprep.mubr.f32.mxu0 %v3437
    %3741 = vmatmul.mubr.f32.gmra.mrb[0].mxu0 %v3356
    %v3742 = vpop.f32.mrb[0].mxu0
    %v3743 = vadd.f32 %v3670, %v3742
    %v3744 = vpop.f32.mrb[0].mxu0
    %3745 = vdwg.mxu0
    %3746 = vmatprep.subr.mxu0 0.0
    %3747 = vmatpush1.msra.mxu0 %v3635
    %3748 = vmatprep.subr.mxu0 0.0
    %3749 = vmatpush1.msra.mxu0 %v3636
    %3750 = vmatprep.subr.mxu0 0.0
    %3751 = vmatpush1.msra.mxu0 %v3637
    %3752 = vmatprep.subr.mxu0 0.0
    %3753 = vmatpush1.msra.mxu0 %v3638
    %3754 = vmatprep.subr.mxu0 0.0
    %3755 = vmatpush1.msra.mxu0 %v3639
    %3756 = vmatprep.subr.mxu0 0.0
    %3757 = vmatpush1.msra.mxu0 %v3640
    %3758 = vmatprep.subr.mxu0 0.0
    %3759 = vmatpush1.msra.mxu0 %v3641
    %3760 = vmatprep.subr.mxu0 0.0
    %3761 = vmatpush1.msra.mxu0 %v3642
    %3762 = vmatprep.subr.mxu0 0.0
    %3763 = vmatpush1.msra.mxu0 %v3643
    %3764 = vmatprep.subr.mxu0 0.0
    %3765 = vmatpush1.msra.mxu0 %v3644
    %3766 = vmatprep.subr.mxu0 0.0
    %3767 = vmatpush1.msra.mxu0 %v3645
    %3768 = vmatprep.subr.mxu0 0.0
    %3769 = vmatpush1.msra.mxu0 %v3646
    %3770 = vmatprep.subr.mxu0 0.0
    %3771 = vmatpush1.msra.mxu0 %v3647
    %3772 = vmatprep.subr.mxu0 0.0
    %3773 = vmatpush1.msra.mxu0 %v3648
    %3774 = vmatprep.subr.mxu0 0.0
    %3775 = vmatpush1.msra.mxu0 %v3649
    %3776 = vmatprep.subr.mxu0 0.0
    %3777 = vmatpush1.msra.mxu0 %v3650
    %3778 = vmatprep.subr.mxu0 0.0
    %3779 = vmatpush1.msra.mxu0 %v3651
    %3780 = vmatprep.subr.mxu0 0.0
    %3781 = vmatpush1.msra.mxu0 %v3652
    %3782 = vmatprep.subr.mxu0 0.0
    %3783 = vmatpush1.msra.mxu0 %v3653
    %3784 = vmatprep.subr.mxu0 0.0
    %3785 = vmatpush1.msra.mxu0 %v3654
    %3786 = vmatprep.subr.mxu0 0.0
    %3787 = vmatpush1.msra.mxu0 %v3655
    %3788 = vmatprep.subr.mxu0 0.0
    %3789 = vmatpush1.msra.mxu0 %v3656
    %3790 = vmatprep.subr.mxu0 0.0
    %3791 = vmatpush1.msra.mxu0 %v3657
    %3792 = vmatprep.subr.mxu0 0.0
    %3793 = vmatpush1.msra.mxu0 %v3658
    %3794 = vmatprep.subr.mxu0 0.0
    %3795 = vmatpush1.msra.mxu0 %v3659
    %3796 = vmatprep.subr.mxu0 0.0
    %3797 = vmatpush1.msra.mxu0 %v3660
    %3798 = vmatprep.subr.mxu0 0.0
    %3799 = vmatpush1.msra.mxu0 %v3661
    %3800 = vmatprep.subr.mxu0 0.0
    %3801 = vmatpush1.msra.mxu0 %v3662
    %3802 = vmatprep.subr.mxu0 0.0
    %3803 = vmatpush1.msra.mxu0 %v3663
    %3804 = vmatprep.subr.mxu0 0.0
    %3805 = vmatpush1.msra.mxu0 %v3664
    %3806 = vmatprep.subr.mxu0 0.0
    %3807 = vmatpush1.msra.mxu0 %v3665
    %3808 = vmatprep.subr.mxu0 0.0
    %3809 = vmatpush1.msra.mxu0 %v3666
    %3810 = vmatprep.mubr.f32.mxu0 %v3594
    %3811 = vmatmul.mubr.f32.gmra.mrb[0].mxu0 %v3513
    %v3812 = vpop.f32.mrb[0].mxu0
    %v3813 = vadd.f32 %v3738, %v3812
    %v3814 = vpop.f32.mrb[0].mxu0
    %3815 = vmatprep.mubr.f32.mxu0 %v3599
    %3816 = vmatmul.mubr.f32.gmra.mrb[0].mxu0 %v3518
    %v3817 = vpop.f32.mrb[0].mxu0
    %v3818 = vadd.f32 %v3743, %v3817
    %v3819 = vpop.f32.mrb[0].mxu0
    %3820 = vdwg.mxu0
    %v3821 = vadd.f32 %v2150, %v3813
    %v3822 = vadd.f32 %v2151, %v3818
    %3823 = vadd.xlane.f32.xlu0 %v3821
    %v3824 = vpop.xlane.xlu0 %3823
    %3825 = vadd.xlane.f32.xlu0 %v3822
    %v3826 = vpop.xlane.xlu0 %3825
    %v3827 = vmul.f32 %v3824, 0.03125
    %v3828 = vmul.f32 %v3826, 0.03125
    %v3829 = vmul.f32 %v3821, %v3821
    %v3830 = vmul.f32 %v3822, %v3822
    %3831 = vadd.xlane.f32.xlu0 %v3829
    %v3832 = vpop.xlane.xlu0 %3831
    %3833 = vadd.xlane.f32.xlu0 %v3830
    %v3834 = vpop.xlane.xlu0 %3833
    %v3835 = vmul.f32 %v3832, 0.03125
    %v3836 = vmul.f32 %v3834, 0.03125
    %v3837 = vmul.f32 %v3827, %v3827
    %v3838 = vmul.f32 %v3828, %v3828
    %v3839 = vsub.f32 %v3835, %v3837
    %v3840 = vsub.f32 %v3836, %v3838
    %v3841 = vmax.f32 %v3839, 0.0
    %v3842 = vmax.f32 %v3840, 0.0
    %v3843 = vsub.f32 %v3821, %v3827
    %v3844 = vsub.f32 %v3822, %v3828
    %v3845 = vadd.f32 %v3841, 1e-12
    %v3846 = vadd.f32 %v3842, 1e-12
    %v3847 = vrsqrt.pop %v3845
    %v3848 = vrsqrt.pop %v3846
    %v3849 = vmul.f32 %v3843, %v3847
    %v3850 = vmul.f32 %v3844, %v3848
    %v3851 = vlaneseq
    %v3852 = vshrl.u32 %v3851, 7
    %v3853 = vsub.s32 3, %v3852
    %v3854 = vrot.slane %v2153, %v3853
    %v3855 = vmul.f32 %v3849, %v3854
    %v3856 = vmul.f32 %v3850, %v3854
    %v3857 = vlaneseq
    %v3858 = vshrl.u32 %v3857, 7
    %v3859 = vsub.s32 4, %v3858
    %v3860 = vrot.slane %v2153, %v3859
    %v3861 = vadd.f32 %v3855, %v3860
    %v3862 = vadd.f32 %v3856, %v3860
    %s3863 = scalar_lea.vmem [#allocation8], 128
    %v3864 = vld [vmem:[%s3863] sm:$0xff]
    %v3865 = vld [vmem:[%s3863 + $0x8] sm:$0xff]
    %v3866 = vld [vmem:[%s3863 + $0x10] sm:$0xff]
    %v3867 = vld [vmem:[%s3863 + $0x18] sm:$0xff]
    %v3868 = vld [vmem:[%s3863 + $0x20] sm:$0xff]
    %v3869 = vld [vmem:[%s3863 + $0x28] sm:$0xff]
    %v3870 = vld [vmem:[%s3863 + $0x30] sm:$0xff]
    %v3871 = vld [vmem:[%s3863 + $0x38] sm:$0xff]
    %v3872 = vld [vmem:[%s3863 + $0x40] sm:$0xff]
    %v3873 = vld [vmem:[%s3863 + $0x48] sm:$0xff]
    %v3874 = vld [vmem:[%s3863 + $0x50] sm:$0xff]
    %v3875 = vld [vmem:[%s3863 + $0x58] sm:$0xff]
    %v3876 = vld [vmem:[%s3863 + $0x60] sm:$0xff]
    %v3877 = vld [vmem:[%s3863 + $0x68] sm:$0xff]
    %v3878 = vld [vmem:[%s3863 + $0x70] sm:$0xff]
    %v3879 = vld [vmem:[%s3863 + $0x78] sm:$0xff]
    %v3880 = vlaneseq
    %v3881 = vshrl.u32 %v3880, 7
    %v3882 = vsub.s32 1, %v3881
    %v3883 = vrot.slane %v2153, %v3882
    %3884 = vmatprep.subr.mxu0 0.0
    %3885 = vmatpush1.msra.mxu0 %v3864
    %3886 = vmatprep.subr.mxu0 0.0
    %3887 = vmatpush1.msra.mxu0 %v3865
    %3888 = vmatprep.subr.mxu0 0.0
    %3889 = vmatpush1.msra.mxu0 %v3866
    %3890 = vmatprep.subr.mxu0 0.0
    %3891 = vmatpush1.msra.mxu0 %v3867
    %3892 = vmatprep.subr.mxu0 0.0
    %3893 = vmatpush1.msra.mxu0 %v3868
    %3894 = vmatprep.subr.mxu0 0.0
    %3895 = vmatpush1.msra.mxu0 %v3869
    %3896 = vmatprep.subr.mxu0 0.0
    %3897 = vmatpush1.msra.mxu0 %v3870
    %3898 = vmatprep.subr.mxu0 0.0
    %3899 = vmatpush1.msra.mxu0 %v3871
    %3900 = vmatprep.subr.mxu0 0.0
    %3901 = vmatpush1.msra.mxu0 %v3872
    %3902 = vmatprep.subr.mxu0 0.0
    %3903 = vmatpush1.msra.mxu0 %v3873
    %3904 = vmatprep.subr.mxu0 0.0
    %3905 = vmatpush1.msra.mxu0 %v3874
    %3906 = vmatprep.subr.mxu0 0.0
    %3907 = vmatpush1.msra.mxu0 %v3875
    %3908 = vmatprep.subr.mxu0 0.0
    %3909 = vmatpush1.msra.mxu0 %v3876
    %3910 = vmatprep.subr.mxu0 0.0
    %3911 = vmatpush1.msra.mxu0 %v3877
    %3912 = vmatprep.subr.mxu0 0.0
    %3913 = vmatpush1.msra.mxu0 %v3878
    %3914 = vmatprep.subr.mxu0 0.0
    %3915 = vmatpush1.msra.mxu0 %v3879
    %3916 = vmatprep.subr.mxu0 0.0
    %3917 = vmatpush1.msra.mxu0 0.0
    %3918 = vmatprep.subr.mxu0 0.0
    %3919 = vmatpush1.msra.mxu0 0.0
    %3920 = vmatprep.subr.mxu0 0.0
    %3921 = vmatpush1.msra.mxu0 0.0
    %3922 = vmatprep.subr.mxu0 0.0
    %3923 = vmatpush1.msra.mxu0 0.0
    %3924 = vmatprep.subr.mxu0 0.0
    %3925 = vmatpush1.msra.mxu0 0.0
    %3926 = vmatprep.subr.mxu0 0.0
    %3927 = vmatpush1.msra.mxu0 0.0
    %3928 = vmatprep.subr.mxu0 0.0
    %3929 = vmatpush1.msra.mxu0 0.0
    %3930 = vmatprep.subr.mxu0 0.0
    %3931 = vmatpush1.msra.mxu0 0.0
    %3932 = vmatprep.subr.mxu0 0.0
    %3933 = vmatpush1.msra.mxu0 0.0
    %3934 = vmatprep.subr.mxu0 0.0
    %3935 = vmatpush1.msra.mxu0 0.0
    %3936 = vmatprep.subr.mxu0 0.0
    %3937 = vmatpush1.msra.mxu0 0.0
    %3938 = vmatprep.subr.mxu0 0.0
    %3939 = vmatpush1.msra.mxu0 0.0
    %3940 = vmatprep.subr.mxu0 0.0
    %3941 = vmatpush1.msra.mxu0 0.0
    %3942 = vmatprep.subr.mxu0 0.0
    %3943 = vmatpush1.msra.mxu0 0.0
    %3944 = vmatprep.subr.mxu0 0.0
    %3945 = vmatpush1.msra.mxu0 0.0
    %3946 = vmatprep.subr.mxu0 0.0
    %3947 = vmatpush1.msra.mxu0 0.0
    %3948 = vmatprep.mubr.f32.mxu0 0.0
    %3949 = vmatmul.mubr.f32.gmra.mrb[0].mxu0 %v3861
    %v3950 = vpop.f32.mrb[0].mxu0
    %v3951 = vadd.f32 %v3883, %v3950
    %v3952 = vpop.f32.mrb[0].mxu0
    %3953 = vmatprep.mubr.f32.mxu0 0.0
    %3954 = vmatmul.mubr.f32.gmra.mrb[0].mxu0 %v3862
    %v3955 = vpop.f32.mrb[0].mxu0
    %v3956 = vadd.f32 %v3883, %v3955
    %v3957 = vpop.f32.mrb[0].mxu0
    %3958 = vdwg.mxu0
    %v3959 = vmul.f32 %v3951, 0.5
    %v3960 = vmul.f32 %v3956, 0.5
    %v3961 = vmul.f32 %v3951, 0.044715
    %v3962 = vmul.f32 %v3956, 0.044715
    %v3963 = vmul.f32 %v3961, %v3951
    %v3964 = vmul.f32 %v3962, %v3956
    %v3965 = vmul.f32 %v3963, %v3951
    %v3966 = vmul.f32 %v3964, %v3956
    %v3967 = vadd.f32 %v3951, %v3965
    %v3968 = vadd.f32 %v3956, %v3966
    %v3969 = vmul.f32 %v3967, 0.7978846
    %v3970 = vmul.f32 %v3968, 0.7978846
    %v3971 = vtanh.pop %v3969
    %v3972 = vtanh.pop %v3970
    %v3973 = vadd.f32 %v3971, 1.0
    %v3974 = vadd.f32 %v3972, 1.0
    %v3975 = vmul.f32 %v3959, %v3973
    %v3976 = vmul.f32 %v3960, %v3974
    %s3977 = scalar_lea.vmem [#allocation10], 128
    %v3978 = vld [vmem:[%s3977] sm:$0xff]
    %v3979 = vld [vmem:[%s3977 + $0x8] sm:$0xff]
    %v3980 = vld [vmem:[%s3977 + $0x10] sm:$0xff]
    %v3981 = vld [vmem:[%s3977 + $0x18] sm:$0xff]
    %v3982 = vld [vmem:[%s3977 + $0x20] sm:$0xff]
    %v3983 = vld [vmem:[%s3977 + $0x28] sm:$0xff]
    %v3984 = vld [vmem:[%s3977 + $0x30] sm:$0xff]
    %v3985 = vld [vmem:[%s3977 + $0x38] sm:$0xff]
    %v3986 = vld [vmem:[%s3977 + $0x40] sm:$0xff]
    %v3987 = vld [vmem:[%s3977 + $0x48] sm:$0xff]
    %v3988 = vld [vmem:[%s3977 + $0x50] sm:$0xff]
    %v3989 = vld [vmem:[%s3977 + $0x58] sm:$0xff]
    %v3990 = vld [vmem:[%s3977 + $0x60] sm:$0xff]
    %v3991 = vld [vmem:[%s3977 + $0x68] sm:$0xff]
    %v3992 = vld [vmem:[%s3977 + $0x70] sm:$0xff]
    %v3993 = vld [vmem:[%s3977 + $0x78] sm:$0xff]
    %v3994 = vlaneseq
    %v3995 = vshrl.u32 %v3994, 7
    %v3996 = vsub.s32 2, %v3995
    %v3997 = vrot.slane %v2153, %v3996
    %3998 = vmatprep.subr.mxu0 0.0
    %3999 = vmatpush1.msra.mxu0 %v3978
    %4000 = vmatprep.subr.mxu0 0.0
    %4001 = vmatpush1.msra.mxu0 %v3979
    %4002 = vmatprep.subr.mxu0 0.0
    %4003 = vmatpush1.msra.mxu0 %v3980
    %4004 = vmatprep.subr.mxu0 0.0
    %4005 = vmatpush1.msra.mxu0 %v3981
    %4006 = vmatprep.subr.mxu0 0.0
    %4007 = vmatpush1.msra.mxu0 %v3982
    %4008 = vmatprep.subr.mxu0 0.0
    %4009 = vmatpush1.msra.mxu0 %v3983
    %4010 = vmatprep.subr.mxu0 0.0
    %4011 = vmatpush1.msra.mxu0 %v3984
    %4012 = vmatprep.subr.mxu0 0.0
    %4013 = vmatpush1.msra.mxu0 %v3985
    %4014 = vmatprep.subr.mxu0 0.0
    %4015 = vmatpush1.msra.mxu0 %v3986
    %4016 = vmatprep.subr.mxu0 0.0
    %4017 = vmatpush1.msra.mxu0 %v3987
    %4018 = vmatprep.subr.mxu0 0.0
    %4019 = vmatpush1.msra.mxu0 %v3988
    %4020 = vmatprep.subr.mxu0 0.0
    %4021 = vmatpush1.msra.mxu0 %v3989
    %4022 = vmatprep.subr.mxu0 0.0
    %4023 = vmatpush1.msra.mxu0 %v3990
    %4024 = vmatprep.subr.mxu0 0.0
    %4025 = vmatpush1.msra.mxu0 %v3991
    %4026 = vmatprep.subr.mxu0 0.0
    %4027 = vmatpush1.msra.mxu0 %v3992
    %4028 = vmatprep.subr.mxu0 0.0
    %4029 = vmatpush1.msra.mxu0 %v3993
    %4030 = vmatprep.subr.mxu0 0.0
    %4031 = vmatpush1.msra.mxu0 0.0
    %4032 = vmatprep.subr.mxu0 0.0
    %4033 = vmatpush1.msra.mxu0 0.0
    %4034 = vmatprep.subr.mxu0 0.0
    %4035 = vmatpush1.msra.mxu0 0.0
    %4036 = vmatprep.subr.mxu0 0.0
    %4037 = vmatpush1.msra.mxu0 0.0
    %4038 = vmatprep.subr.mxu0 0.0
    %4039 = vmatpush1.msra.mxu0 0.0
    %4040 = vmatprep.subr.mxu0 0.0
    %4041 = vmatpush1.msra.mxu0 0.0
    %4042 = vmatprep.subr.mxu0 0.0
    %4043 = vmatpush1.msra.mxu0 0.0
    %4044 = vmatprep.subr.mxu0 0.0
    %4045 = vmatpush1.msra.mxu0 0.0
    %4046 = vmatprep.subr.mxu0 0.0
    %4047 = vmatpush1.msra.mxu0 0.0
    %4048 = vmatprep.subr.mxu0 0.0
    %4049 = vmatpush1.msra.mxu0 0.0
    %4050 = vmatprep.subr.mxu0 0.0
    %4051 = vmatpush1.msra.mxu0 0.0
    %4052 = vmatprep.subr.mxu0 0.0
    %4053 = vmatpush1.msra.mxu0 0.0
    %4054 = vmatprep.subr.mxu0 0.0
    %4055 = vmatpush1.msra.mxu0 0.0
    %4056 = vmatprep.subr.mxu0 0.0
    %4057 = vmatpush1.msra.mxu0 0.0
    %4058 = vmatprep.subr.mxu0 0.0
    %4059 = vmatpush1.msra.mxu0 0.0
    %4060 = vmatprep.subr.mxu0 0.0
    %4061 = vmatpush1.msra.mxu0 0.0
    %4062 = vmatprep.mubr.f32.mxu0 0.0
    %4063 = vmatmul.mubr.f32.gmra.mrb[0].mxu0 %v3975
    %v4064 = vpop.f32.mrb[0].mxu0
    %v4065 = vadd.f32 %v3997, %v4064
    %v4066 = vpop.f32.mrb[0].mxu0
    %4067 = vmatprep.mubr.f32.mxu0 0.0
    %4068 = vmatmul.mubr.f32.gmra.mrb[0].mxu0 %v3976
    %v4069 = vpop.f32.mrb[0].mxu0
    %v4070 = vadd.f32 %v3997, %v4069
    %v4071 = vpop.f32.mrb[0].mxu0
    %4072 = vdwg.mxu0
    %v4073 = vadd.f32 %v3861, %v4065
    %v4074 = vadd.f32 %v3862, %v4070
    %4075 = vadd.xlane.f32.xlu0 %v4073
    %v4076 = vpop.xlane.xlu0 %4075
    %4077 = vadd.xlane.f32.xlu0 %v4074
    %v4078 = vpop.xlane.xlu0 %4077
    %v4079 = vmul.f32 %v4076, 0.03125
    %v4080 = vmul.f32 %v4078, 0.03125
    %v4081 = vmul.f32 %v4073, %v4073
    %v4082 = vmul.f32 %v4074, %v4074
    %4083 = vadd.xlane.f32.xlu0 %v4081
    %v4084 = vpop.xlane.xlu0 %4083
    %4085 = vadd.xlane.f32.xlu0 %v4082
    %v4086 = vpop.xlane.xlu0 %4085
    %v4087 = vmul.f32 %v4084, 0.03125
    %v4088 = vmul.f32 %v4086, 0.03125
    %v4089 = vmul.f32 %v4079, %v4079
    %v4090 = vmul.f32 %v4080, %v4080
    %v4091 = vsub.f32 %v4087, %v4089
    %v4092 = vsub.f32 %v4088, %v4090
    %v4093 = vmax.f32 %v4091, 0.0
    %v4094 = vmax.f32 %v4092, 0.0
    %v4095 = vsub.f32 %v4073, %v4079
    %v4096 = vsub.f32 %v4074, %v4080
    %v4097 = vadd.f32 %v4093, 1e-12
    %v4098 = vadd.f32 %v4094, 1e-12
    %v4099 = vrsqrt.pop %v4097
    %v4100 = vrsqrt.pop %v4098
    %v4101 = vmul.f32 %v4095, %v4099
    %v4102 = vmul.f32 %v4096, %v4100
    %v4103 = vlaneseq
    %v4104 = vshrl.u32 %v4103, 7
    %v4105 = vsub.s32 5, %v4104
    %v4106 = vrot.slane %v2153, %v4105
    %v4107 = vmul.f32 %v4101, %v4106
    %v4108 = vmul.f32 %v4102, %v4106
    %v4109 = vlaneseq
    %v4110 = vshrl.u32 %v4109, 7
    %v4111 = vsub.s32 6, %v4110
    %v4112 = vrot.slane %v2153, %v4111
    %v4113 = vadd.f32 %v4107, %v4112
    %v4114 = vadd.f32 %v4108, %v4112
    %v4116 = vrot.slane %v4114, 7
    %vm4118 = vcmask 1040384
    %v4119 = vsel %vm4118, %v4113, %v4116
    %v4120 = vld [vmem:[#allocation13] sm:$0xff]
    %v4121 = vld [vmem:[#allocation13 + $0x8] sm:$0xff]
    %v4122 = vld [vmem:[#allocation13 + $0x10] sm:$0xff]
    %v4123 = vld [vmem:[#allocation13 + $0x18] sm:$0xff]
    %v4124 = vld [vmem:[#allocation13 + $0x20] sm:$0xff]
    %v4125 = vld [vmem:[#allocation13 + $0x28] sm:$0xff]
    %v4126 = vld [vmem:[#allocation13 + $0x30] sm:$0xff]
    %v4127 = vld [vmem:[#allocation13 + $0x38] sm:$0xff]
    %v4128 = vld [vmem:[#allocation13 + $0x40] sm:$0xff]
    %v4129 = vld [vmem:[#allocation13 + $0x48] sm:$0xff]
    %v4130 = vld [vmem:[#allocation13 + $0x50] sm:$0xff]
    %v4131 = vld [vmem:[#allocation13 + $0x58] sm:$0xff]
    %v4132 = vld [vmem:[#allocation13 + $0x60] sm:$0xff]
    %v4133 = vld [vmem:[#allocation13 + $0x68] sm:$0xff]
    %v4134 = vld [vmem:[#allocation13 + $0x70] sm:$0xff]
    %v4135 = vld [vmem:[#allocation13 + $0x78] sm:$0xff]
    %v4136 = vlaneseq
    %v4137 = vshrl.u32 %v4136, 7
    %v4138 = vsub.s32 2, %v4137
    %v4139 = vrot.slane %v145, %v4138
    %4140 = vmatprep.subr.mxu0 0.0
    %4141 = vmatpush1.msra.mxu0 %v4120
    %4142 = vmatprep.subr.mxu0 0.0
    %4143 = vmatpush1.msra.mxu0 %v4121
    %4144 = vmatprep.subr.mxu0 0.0
    %4145 = vmatpush1.msra.mxu0 %v4122
    %4146 = vmatprep.subr.mxu0 0.0
    %4147 = vmatpush1.msra.mxu0 %v4123
    %4148 = vmatprep.subr.mxu0 0.0
    %4149 = vmatpush1.msra.mxu0 %v4124
    %4150 = vmatprep.subr.mxu0 0.0
    %4151 = vmatpush1.msra.mxu0 %v4125
    %4152 = vmatprep.subr.mxu0 0.0
    %4153 = vmatpush1.msra.mxu0 %v4126
    %4154 = vmatprep.subr.mxu0 0.0
    %4155 = vmatpush1.msra.mxu0 %v4127
    %4156 = vmatprep.subr.mxu0 0.0
    %4157 = vmatpush1.msra.mxu0 %v4128
    %4158 = vmatprep.subr.mxu0 0.0
    %4159 = vmatpush1.msra.mxu0 %v4129
    %4160 = vmatprep.subr.mxu0 0.0
    %4161 = vmatpush1.msra.mxu0 %v4130
    %4162 = vmatprep.subr.mxu0 0.0
    %4163 = vmatpush1.msra.mxu0 %v4131
    %4164 = vmatprep.subr.mxu0 0.0
    %4165 = vmatpush1.msra.mxu0 %v4132
    %4166 = vmatprep.subr.mxu0 0.0
    %4167 = vmatpush1.msra.mxu0 %v4133
    %4168 = vmatprep.subr.mxu0 0.0
    %4169 = vmatpush1.msra.mxu0 %v4134
    %4170 = vmatprep.subr.mxu0 0.0
    %4171 = vmatpush1.msra.mxu0 %v4135
    %4172 = vmatprep.subr.mxu0 0.0
    %4173 = vmatpush1.msra.mxu0 0.0
    %4174 = vmatprep.subr.mxu0 0.0
    %4175 = vmatpush1.msra.mxu0 0.0
    %4176 = vmatprep.subr.mxu0 0.0
    %4177 = vmatpush1.msra.mxu0 0.0
    %4178 = vmatprep.subr.mxu0 0.0
    %4179 = vmatpush1.msra.mxu0 0.0
    %4180 = vmatprep.subr.mxu0 0.0
    %4181 = vmatpush1.msra.mxu0 0.0
    %4182 = vmatprep.subr.mxu0 0.0
    %4183 = vmatpush1.msra.mxu0 0.0
    %4184 = vmatprep.subr.mxu0 0.0
    %4185 = vmatpush1.msra.mxu0 0.0
    %4186 = vmatprep.subr.mxu0 0.0
    %4187 = vmatpush1.msra.mxu0 0.0
    %4188 = vmatprep.subr.mxu0 0.0
    %4189 = vmatpush1.msra.mxu0 0.0
    %4190 = vmatprep.subr.mxu0 0.0
    %4191 = vmatpush1.msra.mxu0 0.0
    %4192 = vmatprep.subr.mxu0 0.0
    %4193 = vmatpush1.msra.mxu0 0.0
    %4194 = vmatprep.subr.mxu0 0.0
    %4195 = vmatpush1.msra.mxu0 0.0
    %4196 = vmatprep.subr.mxu0 0.0
    %4197 = vmatpush1.msra.mxu0 0.0
    %4198 = vmatprep.subr.mxu0 0.0
    %4199 = vmatpush1.msra.mxu0 0.0
    %4200 = vmatprep.subr.mxu0 0.0
    %4201 = vmatpush1.msra.mxu0 0.0
    %4202 = vmatprep.subr.mxu0 0.0
    %4203 = vmatpush1.msra.mxu0 0.0
    %4204 = vmatprep.mubr.f32.mxu0 0.0
    %4205 = vmatmul.mubr.f32.gmra.mrb[0].mxu0 %v4119
    %v4206 = vpop.f32.mrb[0].mxu0
    %v4207 = vadd.f32 %v4139, %v4206
    %v4208 = vpop.f32.mrb[0].mxu0
    %4209 = vdwg.mxu0
    %v4210 = vtanh.pop %v4207
    %s4211 = scalar_lea.vmem [#allocation13], 128
    %v4212 = vld [vmem:[%s4211] sm:$0xff]
    %v4213 = vld [vmem:[%s4211 + $0x8] sm:$0xff]
    %v4214 = vld [vmem:[%s4211 + $0x10] sm:$0xff]
    %v4215 = vld [vmem:[%s4211 + $0x18] sm:$0xff]
    %v4216 = vld [vmem:[%s4211 + $0x20] sm:$0xff]
    %v4217 = vld [vmem:[%s4211 + $0x28] sm:$0xff]
    %v4218 = vld [vmem:[%s4211 + $0x30] sm:$0xff]
    %v4219 = vld [vmem:[%s4211 + $0x38] sm:$0xff]
    %v4220 = vld [vmem:[%s4211 + $0x40] sm:$0xff]
    %v4221 = vld [vmem:[%s4211 + $0x48] sm:$0xff]
    %v4222 = vld [vmem:[%s4211 + $0x50] sm:$0xff]
    %v4223 = vld [vmem:[%s4211 + $0x58] sm:$0xff]
    %v4224 = vld [vmem:[%s4211 + $0x60] sm:$0xff]
    %v4225 = vld [vmem:[%s4211 + $0x68] sm:$0xff]
    %v4226 = vld [vmem:[%s4211 + $0x70] sm:$0xff]
    %v4227 = vld [vmem:[%s4211 + $0x78] sm:$0xff]
    %v4228 = vlaneseq
    %v4229 = vshrl.u32 %v4228, 7
    %v4230 = vsub.s32 3, %v4229
    %v4231 = vrot.slane %v145, %v4230
    %4232 = vmatprep.subr.mxu0 0.0
    %4233 = vmatpush1.msra.mxu0 %v4212
    %4234 = vmatprep.subr.mxu0 0.0
    %4235 = vmatpush1.msra.mxu0 %v4213
    %4236 = vmatprep.subr.mxu0 0.0
    %4237 = vmatpush1.msra.mxu0 %v4214
    %4238 = vmatprep.subr.mxu0 0.0
    %4239 = vmatpush1.msra.mxu0 %v4215
    %4240 = vmatprep.subr.mxu0 0.0
    %4241 = vmatpush1.msra.mxu0 %v4216
    %4242 = vmatprep.subr.mxu0 0.0
    %4243 = vmatpush1.msra.mxu0 %v4217
    %4244 = vmatprep.subr.mxu0 0.0
    %4245 = vmatpush1.msra.mxu0 %v4218
    %4246 = vmatprep.subr.mxu0 0.0
    %4247 = vmatpush1.msra.mxu0 %v4219
    %4248 = vmatprep.subr.mxu0 0.0
    %4249 = vmatpush1.msra.mxu0 %v4220
    %4250 = vmatprep.subr.mxu0 0.0
    %4251 = vmatpush1.msra.mxu0 %v4221
    %4252 = vmatprep.subr.mxu0 0.0
    %4253 = vmatpush1.msra.mxu0 %v4222
    %4254 = vmatprep.subr.mxu0 0.0
    %4255 = vmatpush1.msra.mxu0 %v4223
    %4256 = vmatprep.subr.mxu0 0.0
    %4257 = vmatpush1.msra.mxu0 %v4224
    %4258 = vmatprep.subr.mxu0 0.0
    %4259 = vmatpush1.msra.mxu0 %v4225
    %4260 = vmatprep.subr.mxu0 0.0
    %4261 = vmatpush1.msra.mxu0 %v4226
    %4262 = vmatprep.subr.mxu0 0.0
    %4263 = vmatpush1.msra.mxu0 %v4227
    %4264 = vmatprep.subr.mxu0 0.0
    %4265 = vmatpush1.msra.mxu0 0.0
    %4266 = vmatprep.subr.mxu0 0.0
    %4267 = vmatpush1.msra.mxu0 0.0
    %4268 = vmatprep.subr.mxu0 0.0
    %4269 = vmatpush1.msra.mxu0 0.0
    %4270 = vmatprep.subr.mxu0 0.0
    %4271 = vmatpush1.msra.mxu0 0.0
    %4272 = vmatprep.subr.mxu0 0.0
    %4273 = vmatpush1.msra.mxu0 0.0
    %4274 = vmatprep.subr.mxu0 0.0
    %4275 = vmatpush1.msra.mxu0 0.0
    %4276 = vmatprep.subr.mxu0 0.0
    %4277 = vmatpush1.msra.mxu0 0.0
    %4278 = vmatprep.subr.mxu0 0.0
    %4279 = vmatpush1.msra.mxu0 0.0
    %4280 = vmatprep.subr.mxu0 0.0
    %4281 = vmatpush1.msra.mxu0 0.0
    %4282 = vmatprep.subr.mxu0 0.0
    %4283 = vmatpush1.msra.mxu0 0.0
    %4284 = vmatprep.subr.mxu0 0.0
    %4285 = vmatpush1.msra.mxu0 0.0
    %4286 = vmatprep.subr.mxu0 0.0
    %4287 = vmatpush1.msra.mxu0 0.0
    %4288 = vmatprep.subr.mxu0 0.0
    %4289 = vmatpush1.msra.mxu0 0.0
    %4290 = vmatprep.subr.mxu0 0.0
    %4291 = vmatpush1.msra.mxu0 0.0
    %4292 = vmatprep.subr.mxu0 0.0
    %4293 = vmatpush1.msra.mxu0 0.0
    %4294 = vmatprep.subr.mxu0 0.0
    %4295 = vmatpush1.msra.mxu0 0.0
    %4296 = vmatprep.mubr.f32.mxu0 0.0
    %4297 = vmatmul.mubr.f32.gmra.mrb[0].mxu0 %v4210
    %v4298 = vpop.f32.mrb[0].mxu0
    %v4299 = vadd.f32 %v4231, %v4298
    %v4300 = vpop.f32.mrb[0].mxu0
    %4301 = vdwg.mxu0
    %4302 = vst [vmem:[#allocation16] sm:$0x3] %v4299
    // Predicated region
    $region74: #{default_model_forward.1} parent=1 // pred_check
      _
    $region75: #{default_model_forward.1} parent=1 // pred_check_branch
      %4304 = sbr.rel (0) target = $region77
    $region76: #{default_model_forward.1} parent=1 // pred_region
      %s4306 = ssub.s32 32, 32
      %4307 = vsyncadd [#allocation4], %s4306
      %s4309 = sshll.u32 [#allocation16], 4
      %s4310 = int_to_ptr.vmem [resolvable:$true] %s4309
      %4312 = dma.vmem_to_hbm [thread:$0]  %s4310, 32, %s10, [#allocation4]
    $region77: #{default_model_forward.1} parent=1 // pred_fallthru
      _
    // Predicated region
    $region78: #{default_model_forward.1} parent=1 // pred_check
      _
    $region79: #{default_model_forward.1} parent=1 // pred_check_branch
      %4314 = sbr.rel (0) target = $region81
    $region80: #{default_model_forward.1} parent=1 // pred_region
      %4315 = dma.done [#allocation4], 32
    $region81: #{default_model_forward.1} parent=1 // pred_fallthru
      _
    %4316 = vsyncpa [#allocation3], 1
    %4317 = vsyncpa [#allocation6], 1
    %4318 = vsyncpa [#allocation9], 1
    %4319 = vsyncpa [#allocation12], 1
    %4320 = vsyncpa [#allocation15], 1
    %4321 = vsyncpa [#allocation4], 1

</llo_original>
